<compile_context>
chip_gen: v6e
topology: v6e:2x2x1
jax: 0.10.0
libtpu: 0.0.40
codegen_flags: <defaults>
</compile_context>

<pallas_src>
import math

import jax
import jax.numpy as jnp
from jax.experimental import pallas as pl
from jax.experimental.pallas import tpu as pltpu


# ----------------------------- Pallas kernel --------------------------------

def make_encoder_block_a_kernel(n_batch, in_len, kernel_sizes, apply_batchnorm,
                                eps=1e-5):
    """Builds the fused EncoderBlockA kernel (all layers in one invocation)."""
    per = 4 if apply_batchnorm else 2  # refs per layer: w, b [, gamma, beta]

    def kernel(x_ref, *refs):
        out_ref = refs[-1]
        prefs = refs[:-1]
        N = n_batch
        L = in_len

        # ---- NCL -> flat (N*L, C) channels-last slab (in-kernel layout) ----
        h = jnp.concatenate(
            [jnp.transpose(x_ref[n], (1, 0)) for n in range(N)], axis=0
        ).astype(jnp.float32)

        # ---- conv (+BatchNorm) + ReLU stack, fully VMEM-resident -----------
        for li, K in enumerate(kernel_sizes):
            w = prefs[per * li][...]          # (K*Cin, Cout) pre-transformed
            b = prefs[per * li + 1][...]      # (1, Cout)
            Cin = h.shape[-1]
            Cout = w.shape[-1]
            L_out = L - (K - 1)               # stride=1, padding=0

            # One 2-D matmul per tap with M = N*L_out; accumulate over taps.
            acc = jnp.zeros((N * L_out, Cout), jnp.float32)
            for k in range(K):                # K is static -> unrolled
                xk = jnp.concatenate(
                    [h[n * L + k: n * L + k + L_out, :] for n in range(N)],
                    axis=0)                   # (N*L_out, Cin)
                acc = acc + jnp.dot(xk, w[k * Cin:(k + 1) * Cin, :],
                                    preferred_element_type=jnp.float32)
            y = acc + b

            if apply_batchnorm:
                # Training-mode BatchNorm1d: batch statistics over (N, L),
                # biased variance, then affine (gamma, beta).
                gamma = prefs[per * li + 2][...]   # (1, Cout)
                beta = prefs[per * li + 3][...]    # (1, Cout)
                mean = jnp.mean(y, axis=0, keepdims=True)
                var = jnp.mean(jnp.square(y - mean), axis=0, keepdims=True)
                y = (y - mean) * jax.lax.rsqrt(var + eps) * gamma + beta

            h = jnp.maximum(y, 0.0)           # ReLU (f32 VPU)
            L = L_out

        # ---- flat (N*L, C) -> NCL output (PyTorch layout), in-kernel -------
        for n in range(N):
            out_ref[n] = jnp.transpose(
                h[n * L:(n + 1) * L, :], (1, 0)).astype(out_ref.dtype)

    return kernel


# ----------------------------- call wrapper ----------------------------------

def _full_spec(shape):
    nd = len(shape)
    return pl.BlockSpec(shape, lambda i, _nd=nd: (0,) * _nd)


def encoder_block_a_forward(x_ncl, params, kernel_sizes, apply_batchnorm=True,
                            eps=1e-5):
    """x_ncl: (N, Cin, L) float32, PyTorch NCL layout.  Returns (N, Cout, L_out)."""
    N, _, L = x_ncl.shape
    out_len = L
    for K in kernel_sizes:                    # conv1d_output_size, stride=1, pad=0
        out_len = out_len - (K - 1)
    out_ch = params[-1]["w_mat"].shape[1]

    flat = []
    for p in params:
        flat += [p["w_mat"], p["b_row"]]
        if apply_batchnorm:
            flat += [p["gamma_row"], p["beta_row"]]

    kernel = make_encoder_block_a_kernel(N, L, tuple(kernel_sizes),
                                         apply_batchnorm, eps)

    return pl.pallas_call(
        kernel,
        out_shape=jax.ShapeDtypeStruct((N, out_ch, out_len), x_ncl.dtype),
        grid=(1,),
        in_specs=[_full_spec(x_ncl.shape)] + [_full_spec(a.shape) for a in flat],
        out_specs=_full_spec((N, out_ch, out_len)),
        compiler_params=pltpu.CompilerParams(
            dimension_semantics=("arbitrary",)),
    )(x_ncl, *flat)


# --------------------------- parameter creation ------------------------------

def init_encoder_block_a(key, input_dim, layer_dims, kernel_sizes,
                         apply_batchnorm=True):
    params = []
    cin = input_dim
    keys = iter(jax.random.split(key, 4 * len(layer_dims)))
    for cout, K in zip(layer_dims, kernel_sizes):
        fan_in = cin * K
        bound = 1.0 / math.sqrt(fan_in)
        w_torch = jax.random.uniform(next(keys), (cout, cin, K), jnp.float32,
                                     -bound, bound)         # PyTorch Conv1d layout
        b = jax.random.uniform(next(keys), (cout,), jnp.float32, -bound, bound)
        p = {
            "w_torch": w_torch,
            # Hoisted layout transform: (Cout,Cin,K) -> (K*Cin, Cout) matmul weight.
            "w_mat": jnp.transpose(w_torch, (2, 1, 0)).reshape(K * cin, cout),
            "b": b,
            "b_row": b.reshape(1, cout),
        }
        if apply_batchnorm:
            # PyTorch default init is gamma=1, beta=0; perturb so the affine
            # path is actually exercised by the correctness check.
            gamma = 1.0 + 0.1 * jax.random.normal(next(keys), (cout,), jnp.float32)
            beta = 0.1 * jax.random.normal(next(keys), (cout,), jnp.float32)
            p.update(gamma=gamma, beta=beta,
                     gamma_row=gamma.reshape(1, cout),
                     beta_row=beta.reshape(1, cout))
        params.append(p)
        cin = cout
    return params


# ------------------------- pure-JAX reference --------------------------------

def reference_forward(x, params, kernel_sizes, apply_batchnorm=True, eps=1e-5):
    h = x
    for li, K in enumerate(kernel_sizes):
        p = params[li]
        y = jax.lax.conv_general_dilated(
            h, p["w_torch"], window_strides=(1,), padding="VALID",
            dimension_numbers=("NCH", "OIH", "NCH"),
            precision=jax.lax.Precision.HIGHEST)
        y = y + p["b"][None, :, None]
        if apply_batchnorm:
            mean = jnp.mean(y, axis=(0, 2), keepdims=True)
            var = jnp.mean(jnp.square(y - mean), axis=(0, 2), keepdims=True)
            y = ((y - mean) * jax.lax.rsqrt(var + eps)
                 * p["gamma"][None, :, None] + p["beta"][None, :, None])
        h = jnp.maximum(y, 0.0)
    return h


# --------------------------------- driver ------------------------------------

if __name__ == "__main__":
    # EncoderBlockA(input_dim=4, layer_dims=(8,16,32), kernel_sizes=(5,3,3),
    #               input_len=32, apply_batchnorm=True)
    input_dim = 4
    layer_dims = (8, 16, 32)
    kernel_sizes = (5, 3, 3)
    input_len = 32
    batch = 4
    apply_batchnorm = True

    key = jax.random.PRNGKey(0)
    kp, kx = jax.random.split(key)
    params = init_encoder_block_a(kp, input_dim, layer_dims, kernel_sizes,
                                  apply_batchnorm)
    x = jax.random.normal(kx, (batch, input_dim, input_len), jnp.float32)

    out = encoder_block_a_forward(x, params, kernel_sizes, apply_batchnorm)
    out = jax.block_until_ready(out)

    # L: 32 -(k5)-> 28 -(k3)-> 26 -(k3)-> 24
    expected_len = input_len - sum(k - 1 for k in kernel_sizes)
    assert out.shape == (batch, layer_dims[-1], expected_len), out.shape
    assert bool(jnp.all(jnp.isfinite(out)))

    ref = reference_forward(x, params, kernel_sizes, apply_batchnorm)
    max_err = float(jnp.max(jnp.abs(out - ref)))
    assert max_err < 5e-2, f"max abs err vs reference: {max_err}"

    # TODO(synk): BatchNorm running-mean/var buffer updates (training-time
    # side effect with momentum) are not modeled; forward output is unaffected.
    print("KERNEL_OK")
</pallas_src>

<mosaic_0001>
module attributes {stable_mosaic.version = 11 : i64} {
  func.func @kernel(%arg0: i32, %arg1: memref<4x4x32xf32, #tpu.memory_space<vmem>>, %arg2: memref<20x8xf32, #tpu.memory_space<vmem>>, %arg3: memref<1x8xf32, #tpu.memory_space<vmem>>, %arg4: memref<1x8xf32, #tpu.memory_space<vmem>>, %arg5: memref<1x8xf32, #tpu.memory_space<vmem>>, %arg6: memref<24x16xf32, #tpu.memory_space<vmem>>, %arg7: memref<1x16xf32, #tpu.memory_space<vmem>>, %arg8: memref<1x16xf32, #tpu.memory_space<vmem>>, %arg9: memref<1x16xf32, #tpu.memory_space<vmem>>, %arg10: memref<48x32xf32, #tpu.memory_space<vmem>>, %arg11: memref<1x32xf32, #tpu.memory_space<vmem>>, %arg12: memref<1x32xf32, #tpu.memory_space<vmem>>, %arg13: memref<1x32xf32, #tpu.memory_space<vmem>>, %arg14: memref<4x32x24xf32, #tpu.memory_space<vmem>>) attributes {dimension_semantics = [#tpu.dimension_semantics<arbitrary>], iteration_bounds = array<i64: 1>, scalar_prefetch = 0 : i64, scratch_operands = 0 : i64, tpu.core_type = #tpu.core_type<tc>, window_params = [{pipeline_mode = #tpu.pipeline_mode<synchronous>, transform_indices = @transform_0, window_bounds = array<i64: 4, 4, 32>}, {pipeline_mode = #tpu.pipeline_mode<synchronous>, transform_indices = @transform_1, window_bounds = array<i64: 20, 8>}, {pipeline_mode = #tpu.pipeline_mode<synchronous>, transform_indices = @transform_2, window_bounds = array<i64: 1, 8>}, {pipeline_mode = #tpu.pipeline_mode<synchronous>, transform_indices = @transform_3, window_bounds = array<i64: 1, 8>}, {pipeline_mode = #tpu.pipeline_mode<synchronous>, transform_indices = @transform_4, window_bounds = array<i64: 1, 8>}, {pipeline_mode = #tpu.pipeline_mode<synchronous>, transform_indices = @transform_5, window_bounds = array<i64: 24, 16>}, {pipeline_mode = #tpu.pipeline_mode<synchronous>, transform_indices = @transform_6, window_bounds = array<i64: 1, 16>}, {pipeline_mode = #tpu.pipeline_mode<synchronous>, transform_indices = @transform_7, window_bounds = array<i64: 1, 16>}, {pipeline_mode = #tpu.pipeline_mode<synchronous>, transform_indices = @transform_8, window_bounds = array<i64: 1, 16>}, {pipeline_mode = #tpu.pipeline_mode<synchronous>, transform_indices = @transform_9, window_bounds = array<i64: 48, 32>}, {pipeline_mode = #tpu.pipeline_mode<synchronous>, transform_indices = @transform_10, window_bounds = array<i64: 1, 32>}, {pipeline_mode = #tpu.pipeline_mode<synchronous>, transform_indices = @transform_11, window_bounds = array<i64: 1, 32>}, {pipeline_mode = #tpu.pipeline_mode<synchronous>, transform_indices = @transform_12, window_bounds = array<i64: 1, 32>}, {pipeline_mode = #tpu.pipeline_mode<synchronous>, transform_indices = @transform_13, window_bounds = array<i64: 4, 32, 24>}]} {
    %c0 = arith.constant 0 : index
    %c0_0 = arith.constant 0 : index
    %c0_1 = arith.constant 0 : index
    %0 = vector.load %arg1[%c0, %c0_0, %c0_1] : memref<4x4x32xf32, #tpu.memory_space<vmem>>, vector<1x4x32xf32>
    %1 = vector.shape_cast %0 : vector<1x4x32xf32> to vector<4x32xf32>
    %2 = tpu.transpose %1, [1, 0] : vector<4x32xf32> -> vector<32x4xf32>
    %c1 = arith.constant 1 : index
    %c0_2 = arith.constant 0 : index
    %c0_3 = arith.constant 0 : index
    %3 = vector.load %arg1[%c1, %c0_2, %c0_3] : memref<4x4x32xf32, #tpu.memory_space<vmem>>, vector<1x4x32xf32>
    %4 = vector.shape_cast %3 : vector<1x4x32xf32> to vector<4x32xf32>
    %5 = tpu.transpose %4, [1, 0] : vector<4x32xf32> -> vector<32x4xf32>
    %c2 = arith.constant 2 : index
    %c0_4 = arith.constant 0 : index
    %c0_5 = arith.constant 0 : index
    %6 = vector.load %arg1[%c2, %c0_4, %c0_5] : memref<4x4x32xf32, #tpu.memory_space<vmem>>, vector<1x4x32xf32>
    %7 = vector.shape_cast %6 : vector<1x4x32xf32> to vector<4x32xf32>
    %8 = tpu.transpose %7, [1, 0] : vector<4x32xf32> -> vector<32x4xf32>
    %c3 = arith.constant 3 : index
    %c0_6 = arith.constant 0 : index
    %c0_7 = arith.constant 0 : index
    %9 = vector.load %arg1[%c3, %c0_6, %c0_7] : memref<4x4x32xf32, #tpu.memory_space<vmem>>, vector<1x4x32xf32>
    %10 = vector.shape_cast %9 : vector<1x4x32xf32> to vector<4x32xf32>
    %11 = tpu.transpose %10, [1, 0] : vector<4x32xf32> -> vector<32x4xf32>
    %12 = tpu.concatenate %2, %5, %8, %11 in 0 : vector<32x4xf32>, vector<32x4xf32>, vector<32x4xf32>, vector<32x4xf32> -> vector<128x4xf32>
    %c0_8 = arith.constant 0 : index
    %c0_9 = arith.constant 0 : index
    %13 = vector.load %arg2[%c0_8, %c0_9] : memref<20x8xf32, #tpu.memory_space<vmem>>, vector<20x8xf32>
    %c0_10 = arith.constant 0 : index
    %c0_11 = arith.constant 0 : index
    %14 = vector.load %arg3[%c0_10, %c0_11] : memref<1x8xf32, #tpu.memory_space<vmem>>, vector<1x8xf32>
    %cst = arith.constant 0.000000e+00 : f32
    %15 = vector.broadcast %cst : f32 to vector<112x8xf32>
    %16 = vector.extract_strided_slice %12 {offsets = [0, 0], sizes = [28, 4], strides = [1, 1]} : vector<128x4xf32> to vector<28x4xf32>
    %17 = vector.extract_strided_slice %12 {offsets = [32, 0], sizes = [28, 4], strides = [1, 1]} : vector<128x4xf32> to vector<28x4xf32>
    %18 = vector.extract_strided_slice %12 {offsets = [64, 0], sizes = [28, 4], strides = [1, 1]} : vector<128x4xf32> to vector<28x4xf32>
    %19 = vector.extract_strided_slice %12 {offsets = [96, 0], sizes = [28, 4], strides = [1, 1]} : vector<128x4xf32> to vector<28x4xf32>
    %20 = tpu.concatenate %16, %17, %18, %19 in 0 : vector<28x4xf32>, vector<28x4xf32>, vector<28x4xf32>, vector<28x4xf32> -> vector<112x4xf32>
    %21 = vector.extract_strided_slice %13 {offsets = [0, 0], sizes = [4, 8], strides = [1, 1]} : vector<20x8xf32> to vector<4x8xf32>
    %cst_12 = arith.constant dense<0.000000e+00> : vector<112x8xf32>
    %22 = tpu.matmul %20, %21, %cst_12 {dimension_numbers = #tpu.dot_dimension_numbers<[1], [0], [0], [1], [0, 0, 1, 1], [], []>} : vector<112x4xf32>, vector<4x8xf32>, vector<112x8xf32> -> vector<112x8xf32>
    %23 = arith.addf %15, %22 : vector<112x8xf32>
    %24 = vector.extract_strided_slice %12 {offsets = [1, 0], sizes = [28, 4], strides = [1, 1]} : vector<128x4xf32> to vector<28x4xf32>
    %25 = vector.extract_strided_slice %12 {offsets = [33, 0], sizes = [28, 4], strides = [1, 1]} : vector<128x4xf32> to vector<28x4xf32>
    %26 = vector.extract_strided_slice %12 {offsets = [65, 0], sizes = [28, 4], strides = [1, 1]} : vector<128x4xf32> to vector<28x4xf32>
    %27 = vector.extract_strided_slice %12 {offsets = [97, 0], sizes = [28, 4], strides = [1, 1]} : vector<128x4xf32> to vector<28x4xf32>
    %28 = tpu.concatenate %24, %25, %26, %27 in 0 : vector<28x4xf32>, vector<28x4xf32>, vector<28x4xf32>, vector<28x4xf32> -> vector<112x4xf32>
    %29 = vector.extract_strided_slice %13 {offsets = [4, 0], sizes = [4, 8], strides = [1, 1]} : vector<20x8xf32> to vector<4x8xf32>
    %cst_13 = arith.constant dense<0.000000e+00> : vector<112x8xf32>
    %30 = tpu.matmul %28, %29, %cst_13 {dimension_numbers = #tpu.dot_dimension_numbers<[1], [0], [0], [1], [0, 0, 1, 1], [], []>} : vector<112x4xf32>, vector<4x8xf32>, vector<112x8xf32> -> vector<112x8xf32>
    %31 = arith.addf %23, %30 : vector<112x8xf32>
    %32 = vector.extract_strided_slice %12 {offsets = [2, 0], sizes = [28, 4], strides = [1, 1]} : vector<128x4xf32> to vector<28x4xf32>
    %33 = vector.extract_strided_slice %12 {offsets = [34, 0], sizes = [28, 4], strides = [1, 1]} : vector<128x4xf32> to vector<28x4xf32>
    %34 = vector.extract_strided_slice %12 {offsets = [66, 0], sizes = [28, 4], strides = [1, 1]} : vector<128x4xf32> to vector<28x4xf32>
    %35 = vector.extract_strided_slice %12 {offsets = [98, 0], sizes = [28, 4], strides = [1, 1]} : vector<128x4xf32> to vector<28x4xf32>
    %36 = tpu.concatenate %32, %33, %34, %35 in 0 : vector<28x4xf32>, vector<28x4xf32>, vector<28x4xf32>, vector<28x4xf32> -> vector<112x4xf32>
    %37 = vector.extract_strided_slice %13 {offsets = [8, 0], sizes = [4, 8], strides = [1, 1]} : vector<20x8xf32> to vector<4x8xf32>
    %cst_14 = arith.constant dense<0.000000e+00> : vector<112x8xf32>
    %38 = tpu.matmul %36, %37, %cst_14 {dimension_numbers = #tpu.dot_dimension_numbers<[1], [0], [0], [1], [0, 0, 1, 1], [], []>} : vector<112x4xf32>, vector<4x8xf32>, vector<112x8xf32> -> vector<112x8xf32>
    %39 = arith.addf %31, %38 : vector<112x8xf32>
    %40 = vector.extract_strided_slice %12 {offsets = [3, 0], sizes = [28, 4], strides = [1, 1]} : vector<128x4xf32> to vector<28x4xf32>
    %41 = vector.extract_strided_slice %12 {offsets = [35, 0], sizes = [28, 4], strides = [1, 1]} : vector<128x4xf32> to vector<28x4xf32>
    %42 = vector.extract_strided_slice %12 {offsets = [67, 0], sizes = [28, 4], strides = [1, 1]} : vector<128x4xf32> to vector<28x4xf32>
    %43 = vector.extract_strided_slice %12 {offsets = [99, 0], sizes = [28, 4], strides = [1, 1]} : vector<128x4xf32> to vector<28x4xf32>
    %44 = tpu.concatenate %40, %41, %42, %43 in 0 : vector<28x4xf32>, vector<28x4xf32>, vector<28x4xf32>, vector<28x4xf32> -> vector<112x4xf32>
    %45 = vector.extract_strided_slice %13 {offsets = [12, 0], sizes = [4, 8], strides = [1, 1]} : vector<20x8xf32> to vector<4x8xf32>
    %cst_15 = arith.constant dense<0.000000e+00> : vector<112x8xf32>
    %46 = tpu.matmul %44, %45, %cst_15 {dimension_numbers = #tpu.dot_dimension_numbers<[1], [0], [0], [1], [0, 0, 1, 1], [], []>} : vector<112x4xf32>, vector<4x8xf32>, vector<112x8xf32> -> vector<112x8xf32>
    %47 = arith.addf %39, %46 : vector<112x8xf32>
    %48 = vector.extract_strided_slice %12 {offsets = [4, 0], sizes = [28, 4], strides = [1, 1]} : vector<128x4xf32> to vector<28x4xf32>
    %49 = vector.extract_strided_slice %12 {offsets = [36, 0], sizes = [28, 4], strides = [1, 1]} : vector<128x4xf32> to vector<28x4xf32>
    %50 = vector.extract_strided_slice %12 {offsets = [68, 0], sizes = [28, 4], strides = [1, 1]} : vector<128x4xf32> to vector<28x4xf32>
    %51 = vector.extract_strided_slice %12 {offsets = [100, 0], sizes = [28, 4], strides = [1, 1]} : vector<128x4xf32> to vector<28x4xf32>
    %52 = tpu.concatenate %48, %49, %50, %51 in 0 : vector<28x4xf32>, vector<28x4xf32>, vector<28x4xf32>, vector<28x4xf32> -> vector<112x4xf32>
    %53 = vector.extract_strided_slice %13 {offsets = [16, 0], sizes = [4, 8], strides = [1, 1]} : vector<20x8xf32> to vector<4x8xf32>
    %cst_16 = arith.constant dense<0.000000e+00> : vector<112x8xf32>
    %54 = tpu.matmul %52, %53, %cst_16 {dimension_numbers = #tpu.dot_dimension_numbers<[1], [0], [0], [1], [0, 0, 1, 1], [], []>} : vector<112x4xf32>, vector<4x8xf32>, vector<112x8xf32> -> vector<112x8xf32>
    %55 = arith.addf %47, %54 : vector<112x8xf32>
    %56 = vector.broadcast %14 : vector<1x8xf32> to vector<112x8xf32>
    %57 = arith.addf %55, %56 : vector<112x8xf32>
    %c0_17 = arith.constant 0 : index
    %c0_18 = arith.constant 0 : index
    %58 = vector.load %arg4[%c0_17, %c0_18] : memref<1x8xf32, #tpu.memory_space<vmem>>, vector<1x8xf32>
    %c0_19 = arith.constant 0 : index
    %c0_20 = arith.constant 0 : index
    %59 = vector.load %arg5[%c0_19, %c0_20] : memref<1x8xf32, #tpu.memory_space<vmem>>, vector<1x8xf32>
    %cst_21 = arith.constant dense<0.000000e+00> : vector<8xf32>
    %60 = vector.multi_reduction <add>, %57, %cst_21 [0] : vector<112x8xf32> to vector<8xf32>
    %61 = vector.shape_cast %60 : vector<8xf32> to vector<1x8xf32>
    %cst_22 = arith.constant 1.120000e+02 : f32
    %62 = vector.broadcast %cst_22 : f32 to vector<1x8xf32>
    %63 = arith.divf %61, %62 : vector<1x8xf32>
    %64 = vector.broadcast %63 : vector<1x8xf32> to vector<112x8xf32>
    %65 = arith.subf %57, %64 : vector<112x8xf32>
    %66 = arith.mulf %65, %65 : vector<112x8xf32>
    %cst_23 = arith.constant dense<0.000000e+00> : vector<8xf32>
    %67 = vector.multi_reduction <add>, %66, %cst_23 [0] : vector<112x8xf32> to vector<8xf32>
    %68 = vector.shape_cast %67 : vector<8xf32> to vector<1x8xf32>
    %cst_24 = arith.constant 1.120000e+02 : f32
    %69 = vector.broadcast %cst_24 : f32 to vector<1x8xf32>
    %70 = arith.divf %68, %69 : vector<1x8xf32>
    %71 = vector.broadcast %63 : vector<1x8xf32> to vector<112x8xf32>
    %72 = arith.subf %57, %71 : vector<112x8xf32>
    %cst_25 = arith.constant 9.99999974E-6 : f32
    %73 = vector.broadcast %cst_25 : f32 to vector<1x8xf32>
    %74 = arith.addf %70, %73 : vector<1x8xf32>
    %75 = math.rsqrt %74 : vector<1x8xf32>
    %76 = vector.broadcast %75 : vector<1x8xf32> to vector<112x8xf32>
    %77 = arith.mulf %72, %76 : vector<112x8xf32>
    %78 = vector.broadcast %58 : vector<1x8xf32> to vector<112x8xf32>
    %79 = arith.mulf %77, %78 : vector<112x8xf32>
    %80 = vector.broadcast %59 : vector<1x8xf32> to vector<112x8xf32>
    %81 = arith.addf %79, %80 : vector<112x8xf32>
    %cst_26 = arith.constant 0.000000e+00 : f32
    %82 = vector.broadcast %cst_26 : f32 to vector<112x8xf32>
    %83 = arith.maximumf %81, %82 : vector<112x8xf32>
    %c0_27 = arith.constant 0 : index
    %c0_28 = arith.constant 0 : index
    %84 = vector.load %arg6[%c0_27, %c0_28] : memref<24x16xf32, #tpu.memory_space<vmem>>, vector<24x16xf32>
    %c0_29 = arith.constant 0 : index
    %c0_30 = arith.constant 0 : index
    %85 = vector.load %arg7[%c0_29, %c0_30] : memref<1x16xf32, #tpu.memory_space<vmem>>, vector<1x16xf32>
    %cst_31 = arith.constant 0.000000e+00 : f32
    %86 = vector.broadcast %cst_31 : f32 to vector<104x16xf32>
    %87 = vector.extract_strided_slice %83 {offsets = [0, 0], sizes = [26, 8], strides = [1, 1]} : vector<112x8xf32> to vector<26x8xf32>
    %88 = vector.extract_strided_slice %83 {offsets = [28, 0], sizes = [26, 8], strides = [1, 1]} : vector<112x8xf32> to vector<26x8xf32>
    %89 = vector.extract_strided_slice %83 {offsets = [56, 0], sizes = [26, 8], strides = [1, 1]} : vector<112x8xf32> to vector<26x8xf32>
    %90 = vector.extract_strided_slice %83 {offsets = [84, 0], sizes = [26, 8], strides = [1, 1]} : vector<112x8xf32> to vector<26x8xf32>
    %91 = tpu.concatenate %87, %88, %89, %90 in 0 : vector<26x8xf32>, vector<26x8xf32>, vector<26x8xf32>, vector<26x8xf32> -> vector<104x8xf32>
    %92 = vector.extract_strided_slice %84 {offsets = [0, 0], sizes = [8, 16], strides = [1, 1]} : vector<24x16xf32> to vector<8x16xf32>
    %cst_32 = arith.constant dense<0.000000e+00> : vector<104x16xf32>
    %93 = tpu.matmul %91, %92, %cst_32 {dimension_numbers = #tpu.dot_dimension_numbers<[1], [0], [0], [1], [0, 0, 1, 1], [], []>} : vector<104x8xf32>, vector<8x16xf32>, vector<104x16xf32> -> vector<104x16xf32>
    %94 = arith.addf %86, %93 : vector<104x16xf32>
    %95 = vector.extract_strided_slice %83 {offsets = [1, 0], sizes = [26, 8], strides = [1, 1]} : vector<112x8xf32> to vector<26x8xf32>
    %96 = vector.extract_strided_slice %83 {offsets = [29, 0], sizes = [26, 8], strides = [1, 1]} : vector<112x8xf32> to vector<26x8xf32>
    %97 = vector.extract_strided_slice %83 {offsets = [57, 0], sizes = [26, 8], strides = [1, 1]} : vector<112x8xf32> to vector<26x8xf32>
    %98 = vector.extract_strided_slice %83 {offsets = [85, 0], sizes = [26, 8], strides = [1, 1]} : vector<112x8xf32> to vector<26x8xf32>
    %99 = tpu.concatenate %95, %96, %97, %98 in 0 : vector<26x8xf32>, vector<26x8xf32>, vector<26x8xf32>, vector<26x8xf32> -> vector<104x8xf32>
    %100 = vector.extract_strided_slice %84 {offsets = [8, 0], sizes = [8, 16], strides = [1, 1]} : vector<24x16xf32> to vector<8x16xf32>
    %cst_33 = arith.constant dense<0.000000e+00> : vector<104x16xf32>
    %101 = tpu.matmul %99, %100, %cst_33 {dimension_numbers = #tpu.dot_dimension_numbers<[1], [0], [0], [1], [0, 0, 1, 1], [], []>} : vector<104x8xf32>, vector<8x16xf32>, vector<104x16xf32> -> vector<104x16xf32>
    %102 = arith.addf %94, %101 : vector<104x16xf32>
    %103 = vector.extract_strided_slice %83 {offsets = [2, 0], sizes = [26, 8], strides = [1, 1]} : vector<112x8xf32> to vector<26x8xf32>
    %104 = vector.extract_strided_slice %83 {offsets = [30, 0], sizes = [26, 8], strides = [1, 1]} : vector<112x8xf32> to vector<26x8xf32>
    %105 = vector.extract_strided_slice %83 {offsets = [58, 0], sizes = [26, 8], strides = [1, 1]} : vector<112x8xf32> to vector<26x8xf32>
    %106 = vector.extract_strided_slice %83 {offsets = [86, 0], sizes = [26, 8], strides = [1, 1]} : vector<112x8xf32> to vector<26x8xf32>
    %107 = tpu.concatenate %103, %104, %105, %106 in 0 : vector<26x8xf32>, vector<26x8xf32>, vector<26x8xf32>, vector<26x8xf32> -> vector<104x8xf32>
    %108 = vector.extract_strided_slice %84 {offsets = [16, 0], sizes = [8, 16], strides = [1, 1]} : vector<24x16xf32> to vector<8x16xf32>
    %cst_34 = arith.constant dense<0.000000e+00> : vector<104x16xf32>
    %109 = tpu.matmul %107, %108, %cst_34 {dimension_numbers = #tpu.dot_dimension_numbers<[1], [0], [0], [1], [0, 0, 1, 1], [], []>} : vector<104x8xf32>, vector<8x16xf32>, vector<104x16xf32> -> vector<104x16xf32>
    %110 = arith.addf %102, %109 : vector<104x16xf32>
    %111 = vector.broadcast %85 : vector<1x16xf32> to vector<104x16xf32>
    %112 = arith.addf %110, %111 : vector<104x16xf32>
    %c0_35 = arith.constant 0 : index
    %c0_36 = arith.constant 0 : index
    %113 = vector.load %arg8[%c0_35, %c0_36] : memref<1x16xf32, #tpu.memory_space<vmem>>, vector<1x16xf32>
    %c0_37 = arith.constant 0 : index
    %c0_38 = arith.constant 0 : index
    %114 = vector.load %arg9[%c0_37, %c0_38] : memref<1x16xf32, #tpu.memory_space<vmem>>, vector<1x16xf32>
    %cst_39 = arith.constant dense<0.000000e+00> : vector<16xf32>
    %115 = vector.multi_reduction <add>, %112, %cst_39 [0] : vector<104x16xf32> to vector<16xf32>
    %116 = vector.shape_cast %115 : vector<16xf32> to vector<1x16xf32>
    %cst_40 = arith.constant 1.040000e+02 : f32
    %117 = vector.broadcast %cst_40 : f32 to vector<1x16xf32>
    %118 = arith.divf %116, %117 : vector<1x16xf32>
    %119 = vector.broadcast %118 : vector<1x16xf32> to vector<104x16xf32>
    %120 = arith.subf %112, %119 : vector<104x16xf32>
    %121 = arith.mulf %120, %120 : vector<104x16xf32>
    %cst_41 = arith.constant dense<0.000000e+00> : vector<16xf32>
    %122 = vector.multi_reduction <add>, %121, %cst_41 [0] : vector<104x16xf32> to vector<16xf32>
    %123 = vector.shape_cast %122 : vector<16xf32> to vector<1x16xf32>
    %cst_42 = arith.constant 1.040000e+02 : f32
    %124 = vector.broadcast %cst_42 : f32 to vector<1x16xf32>
    %125 = arith.divf %123, %124 : vector<1x16xf32>
    %126 = vector.broadcast %118 : vector<1x16xf32> to vector<104x16xf32>
    %127 = arith.subf %112, %126 : vector<104x16xf32>
    %cst_43 = arith.constant 9.99999974E-6 : f32
    %128 = vector.broadcast %cst_43 : f32 to vector<1x16xf32>
    %129 = arith.addf %125, %128 : vector<1x16xf32>
    %130 = math.rsqrt %129 : vector<1x16xf32>
    %131 = vector.broadcast %130 : vector<1x16xf32> to vector<104x16xf32>
    %132 = arith.mulf %127, %131 : vector<104x16xf32>
    %133 = vector.broadcast %113 : vector<1x16xf32> to vector<104x16xf32>
    %134 = arith.mulf %132, %133 : vector<104x16xf32>
    %135 = vector.broadcast %114 : vector<1x16xf32> to vector<104x16xf32>
    %136 = arith.addf %134, %135 : vector<104x16xf32>
    %cst_44 = arith.constant 0.000000e+00 : f32
    %137 = vector.broadcast %cst_44 : f32 to vector<104x16xf32>
    %138 = arith.maximumf %136, %137 : vector<104x16xf32>
    %c0_45 = arith.constant 0 : index
    %c0_46 = arith.constant 0 : index
    %139 = vector.load %arg10[%c0_45, %c0_46] : memref<48x32xf32, #tpu.memory_space<vmem>>, vector<48x32xf32>
    %c0_47 = arith.constant 0 : index
    %c0_48 = arith.constant 0 : index
    %140 = vector.load %arg11[%c0_47, %c0_48] : memref<1x32xf32, #tpu.memory_space<vmem>>, vector<1x32xf32>
    %cst_49 = arith.constant 0.000000e+00 : f32
    %141 = vector.broadcast %cst_49 : f32 to vector<96x32xf32>
    %142 = vector.extract_strided_slice %138 {offsets = [0, 0], sizes = [24, 16], strides = [1, 1]} : vector<104x16xf32> to vector<24x16xf32>
    %143 = vector.extract_strided_slice %138 {offsets = [26, 0], sizes = [24, 16], strides = [1, 1]} : vector<104x16xf32> to vector<24x16xf32>
    %144 = vector.extract_strided_slice %138 {offsets = [52, 0], sizes = [24, 16], strides = [1, 1]} : vector<104x16xf32> to vector<24x16xf32>
    %145 = vector.extract_strided_slice %138 {offsets = [78, 0], sizes = [24, 16], strides = [1, 1]} : vector<104x16xf32> to vector<24x16xf32>
    %146 = tpu.concatenate %142, %143, %144, %145 in 0 : vector<24x16xf32>, vector<24x16xf32>, vector<24x16xf32>, vector<24x16xf32> -> vector<96x16xf32>
    %147 = vector.extract_strided_slice %139 {offsets = [0, 0], sizes = [16, 32], strides = [1, 1]} : vector<48x32xf32> to vector<16x32xf32>
    %cst_50 = arith.constant dense<0.000000e+00> : vector<96x32xf32>
    %148 = tpu.matmul %146, %147, %cst_50 {dimension_numbers = #tpu.dot_dimension_numbers<[1], [0], [0], [1], [0, 0, 1, 1], [], []>} : vector<96x16xf32>, vector<16x32xf32>, vector<96x32xf32> -> vector<96x32xf32>
    %149 = arith.addf %141, %148 : vector<96x32xf32>
    %150 = vector.extract_strided_slice %138 {offsets = [1, 0], sizes = [24, 16], strides = [1, 1]} : vector<104x16xf32> to vector<24x16xf32>
    %151 = vector.extract_strided_slice %138 {offsets = [27, 0], sizes = [24, 16], strides = [1, 1]} : vector<104x16xf32> to vector<24x16xf32>
    %152 = vector.extract_strided_slice %138 {offsets = [53, 0], sizes = [24, 16], strides = [1, 1]} : vector<104x16xf32> to vector<24x16xf32>
    %153 = vector.extract_strided_slice %138 {offsets = [79, 0], sizes = [24, 16], strides = [1, 1]} : vector<104x16xf32> to vector<24x16xf32>
    %154 = tpu.concatenate %150, %151, %152, %153 in 0 : vector<24x16xf32>, vector<24x16xf32>, vector<24x16xf32>, vector<24x16xf32> -> vector<96x16xf32>
    %155 = vector.extract_strided_slice %139 {offsets = [16, 0], sizes = [16, 32], strides = [1, 1]} : vector<48x32xf32> to vector<16x32xf32>
    %cst_51 = arith.constant dense<0.000000e+00> : vector<96x32xf32>
    %156 = tpu.matmul %154, %155, %cst_51 {dimension_numbers = #tpu.dot_dimension_numbers<[1], [0], [0], [1], [0, 0, 1, 1], [], []>} : vector<96x16xf32>, vector<16x32xf32>, vector<96x32xf32> -> vector<96x32xf32>
    %157 = arith.addf %149, %156 : vector<96x32xf32>
    %158 = vector.extract_strided_slice %138 {offsets = [2, 0], sizes = [24, 16], strides = [1, 1]} : vector<104x16xf32> to vector<24x16xf32>
    %159 = vector.extract_strided_slice %138 {offsets = [28, 0], sizes = [24, 16], strides = [1, 1]} : vector<104x16xf32> to vector<24x16xf32>
    %160 = vector.extract_strided_slice %138 {offsets = [54, 0], sizes = [24, 16], strides = [1, 1]} : vector<104x16xf32> to vector<24x16xf32>
    %161 = vector.extract_strided_slice %138 {offsets = [80, 0], sizes = [24, 16], strides = [1, 1]} : vector<104x16xf32> to vector<24x16xf32>
    %162 = tpu.concatenate %158, %159, %160, %161 in 0 : vector<24x16xf32>, vector<24x16xf32>, vector<24x16xf32>, vector<24x16xf32> -> vector<96x16xf32>
    %163 = vector.extract_strided_slice %139 {offsets = [32, 0], sizes = [16, 32], strides = [1, 1]} : vector<48x32xf32> to vector<16x32xf32>
    %cst_52 = arith.constant dense<0.000000e+00> : vector<96x32xf32>
    %164 = tpu.matmul %162, %163, %cst_52 {dimension_numbers = #tpu.dot_dimension_numbers<[1], [0], [0], [1], [0, 0, 1, 1], [], []>} : vector<96x16xf32>, vector<16x32xf32>, vector<96x32xf32> -> vector<96x32xf32>
    %165 = arith.addf %157, %164 : vector<96x32xf32>
    %166 = vector.broadcast %140 : vector<1x32xf32> to vector<96x32xf32>
    %167 = arith.addf %165, %166 : vector<96x32xf32>
    %c0_53 = arith.constant 0 : index
    %c0_54 = arith.constant 0 : index
    %168 = vector.load %arg12[%c0_53, %c0_54] : memref<1x32xf32, #tpu.memory_space<vmem>>, vector<1x32xf32>
    %c0_55 = arith.constant 0 : index
    %c0_56 = arith.constant 0 : index
    %169 = vector.load %arg13[%c0_55, %c0_56] : memref<1x32xf32, #tpu.memory_space<vmem>>, vector<1x32xf32>
    %cst_57 = arith.constant dense<0.000000e+00> : vector<32xf32>
    %170 = vector.multi_reduction <add>, %167, %cst_57 [0] : vector<96x32xf32> to vector<32xf32>
    %171 = vector.shape_cast %170 : vector<32xf32> to vector<1x32xf32>
    %cst_58 = arith.constant 9.600000e+01 : f32
    %172 = vector.broadcast %cst_58 : f32 to vector<1x32xf32>
    %173 = arith.divf %171, %172 : vector<1x32xf32>
    %174 = vector.broadcast %173 : vector<1x32xf32> to vector<96x32xf32>
    %175 = arith.subf %167, %174 : vector<96x32xf32>
    %176 = arith.mulf %175, %175 : vector<96x32xf32>
    %cst_59 = arith.constant dense<0.000000e+00> : vector<32xf32>
    %177 = vector.multi_reduction <add>, %176, %cst_59 [0] : vector<96x32xf32> to vector<32xf32>
    %178 = vector.shape_cast %177 : vector<32xf32> to vector<1x32xf32>
    %cst_60 = arith.constant 9.600000e+01 : f32
    %179 = vector.broadcast %cst_60 : f32 to vector<1x32xf32>
    %180 = arith.divf %178, %179 : vector<1x32xf32>
    %181 = vector.broadcast %173 : vector<1x32xf32> to vector<96x32xf32>
    %182 = arith.subf %167, %181 : vector<96x32xf32>
    %cst_61 = arith.constant 9.99999974E-6 : f32
    %183 = vector.broadcast %cst_61 : f32 to vector<1x32xf32>
    %184 = arith.addf %180, %183 : vector<1x32xf32>
    %185 = math.rsqrt %184 : vector<1x32xf32>
    %186 = vector.broadcast %185 : vector<1x32xf32> to vector<96x32xf32>
    %187 = arith.mulf %182, %186 : vector<96x32xf32>
    %188 = vector.broadcast %168 : vector<1x32xf32> to vector<96x32xf32>
    %189 = arith.mulf %187, %188 : vector<96x32xf32>
    %190 = vector.broadcast %169 : vector<1x32xf32> to vector<96x32xf32>
    %191 = arith.addf %189, %190 : vector<96x32xf32>
    %cst_62 = arith.constant 0.000000e+00 : f32
    %192 = vector.broadcast %cst_62 : f32 to vector<96x32xf32>
    %193 = arith.maximumf %191, %192 : vector<96x32xf32>
    %194 = vector.extract_strided_slice %193 {offsets = [0, 0], sizes = [24, 32], strides = [1, 1]} : vector<96x32xf32> to vector<24x32xf32>
    %195 = tpu.transpose %194, [1, 0] : vector<24x32xf32> -> vector<32x24xf32>
    %c0_63 = arith.constant 0 : index
    %c0_64 = arith.constant 0 : index
    %c0_65 = arith.constant 0 : index
    %196 = vector.load %arg14[%c0_63, %c0_64, %c0_65] : memref<4x32x24xf32, #tpu.memory_space<vmem>>, vector<1x32x24xf32>
    %197 = vector.shape_cast %196 : vector<1x32x24xf32> to vector<32x24xf32>
    %198 = vector.shape_cast %195 : vector<32x24xf32> to vector<1x32x24xf32>
    tpu.vector_store %arg14[%c0_63, %c0_64, %c0_65], %198 {strides = array<i32>} : memref<4x32x24xf32, #tpu.memory_space<vmem>>, vector<1x32x24xf32>,
    %199 = vector.extract_strided_slice %193 {offsets = [24, 0], sizes = [24, 32], strides = [1, 1]} : vector<96x32xf32> to vector<24x32xf32>
    %200 = tpu.transpose %199, [1, 0] : vector<24x32xf32> -> vector<32x24xf32>
    %c1_66 = arith.constant 1 : index
    %c0_67 = arith.constant 0 : index
    %c0_68 = arith.constant 0 : index
    %201 = vector.load %arg14[%c1_66, %c0_67, %c0_68] : memref<4x32x24xf32, #tpu.memory_space<vmem>>, vector<1x32x24xf32>
    %202 = vector.shape_cast %201 : vector<1x32x24xf32> to vector<32x24xf32>
    %203 = vector.shape_cast %200 : vector<32x24xf32> to vector<1x32x24xf32>
    tpu.vector_store %arg14[%c1_66, %c0_67, %c0_68], %203 {strides = array<i32>} : memref<4x32x24xf32, #tpu.memory_space<vmem>>, vector<1x32x24xf32>,
    %204 = vector.extract_strided_slice %193 {offsets = [48, 0], sizes = [24, 32], strides = [1, 1]} : vector<96x32xf32> to vector<24x32xf32>
    %205 = tpu.transpose %204, [1, 0] : vector<24x32xf32> -> vector<32x24xf32>
    %c2_69 = arith.constant 2 : index
    %c0_70 = arith.constant 0 : index
    %c0_71 = arith.constant 0 : index
    %206 = vector.load %arg14[%c2_69, %c0_70, %c0_71] : memref<4x32x24xf32, #tpu.memory_space<vmem>>, vector<1x32x24xf32>
    %207 = vector.shape_cast %206 : vector<1x32x24xf32> to vector<32x24xf32>
    %208 = vector.shape_cast %205 : vector<32x24xf32> to vector<1x32x24xf32>
    tpu.vector_store %arg14[%c2_69, %c0_70, %c0_71], %208 {strides = array<i32>} : memref<4x32x24xf32, #tpu.memory_space<vmem>>, vector<1x32x24xf32>,
    %209 = vector.extract_strided_slice %193 {offsets = [72, 0], sizes = [24, 32], strides = [1, 1]} : vector<96x32xf32> to vector<24x32xf32>
    %210 = tpu.transpose %209, [1, 0] : vector<24x32xf32> -> vector<32x24xf32>
    %c3_72 = arith.constant 3 : index
    %c0_73 = arith.constant 0 : index
    %c0_74 = arith.constant 0 : index
    %211 = vector.load %arg14[%c3_72, %c0_73, %c0_74] : memref<4x32x24xf32, #tpu.memory_space<vmem>>, vector<1x32x24xf32>
    %212 = vector.shape_cast %211 : vector<1x32x24xf32> to vector<32x24xf32>
    %213 = vector.shape_cast %210 : vector<32x24xf32> to vector<1x32x24xf32>
    tpu.vector_store %arg14[%c3_72, %c0_73, %c0_74], %213 {strides = array<i32>} : memref<4x32x24xf32, #tpu.memory_space<vmem>>, vector<1x32x24xf32>,
    return
  }
  func.func @transform_0(%arg0: i32) -> (i32, i32, i32) {
    %c0_i32 = arith.constant 0 : i32
    %c0_i32_0 = arith.constant 0 : i32
    %c0_i32_1 = arith.constant 0 : i32
    %c0_i32_2 = arith.constant 0 : i32
    return %c0_i32, %c0_i32_0, %c0_i32_1 : i32, i32, i32
  }
  func.func @transform_1(%arg0: i32) -> (i32, i32) {
    %c0_i32 = arith.constant 0 : i32
    %c0_i32_0 = arith.constant 0 : i32
    %c0_i32_1 = arith.constant 0 : i32
    return %c0_i32, %c0_i32_0 : i32, i32
  }
  func.func @transform_2(%arg0: i32) -> (i32, i32) {
    %c0_i32 = arith.constant 0 : i32
    %c0_i32_0 = arith.constant 0 : i32
    %c0_i32_1 = arith.constant 0 : i32
    return %c0_i32, %c0_i32_0 : i32, i32
  }
  func.func @transform_3(%arg0: i32) -> (i32, i32) {
    %c0_i32 = arith.constant 0 : i32
    %c0_i32_0 = arith.constant 0 : i32
    %c0_i32_1 = arith.constant 0 : i32
    return %c0_i32, %c0_i32_0 : i32, i32
  }
  func.func @transform_4(%arg0: i32) -> (i32, i32) {
    %c0_i32 = arith.constant 0 : i32
    %c0_i32_0 = arith.constant 0 : i32
    %c0_i32_1 = arith.constant 0 : i32
    return %c0_i32, %c0_i32_0 : i32, i32
  }
  func.func @transform_5(%arg0: i32) -> (i32, i32) {
    %c0_i32 = arith.constant 0 : i32
    %c0_i32_0 = arith.constant 0 : i32
    %c0_i32_1 = arith.constant 0 : i32
    return %c0_i32, %c0_i32_0 : i32, i32
  }
  func.func @transform_6(%arg0: i32) -> (i32, i32) {
    %c0_i32 = arith.constant 0 : i32
    %c0_i32_0 = arith.constant 0 : i32
    %c0_i32_1 = arith.constant 0 : i32
    return %c0_i32, %c0_i32_0 : i32, i32
  }
  func.func @transform_7(%arg0: i32) -> (i32, i32) {
    %c0_i32 = arith.constant 0 : i32
    %c0_i32_0 = arith.constant 0 : i32
    %c0_i32_1 = arith.constant 0 : i32
    return %c0_i32, %c0_i32_0 : i32, i32
  }
  func.func @transform_8(%arg0: i32) -> (i32, i32) {
    %c0_i32 = arith.constant 0 : i32
    %c0_i32_0 = arith.constant 0 : i32
    %c0_i32_1 = arith.constant 0 : i32
    return %c0_i32, %c0_i32_0 : i32, i32
  }
  func.func @transform_9(%arg0: i32) -> (i32, i32) {
    %c0_i32 = arith.constant 0 : i32
    %c0_i32_0 = arith.constant 0 : i32
    %c0_i32_1 = arith.constant 0 : i32
    return %c0_i32, %c0_i32_0 : i32, i32
  }
  func.func @transform_10(%arg0: i32) -> (i32, i32) {
    %c0_i32 = arith.constant 0 : i32
    %c0_i32_0 = arith.constant 0 : i32
    %c0_i32_1 = arith.constant 0 : i32
    return %c0_i32, %c0_i32_0 : i32, i32
  }
  func.func @transform_11(%arg0: i32) -> (i32, i32) {
    %c0_i32 = arith.constant 0 : i32
    %c0_i32_0 = arith.constant 0 : i32
    %c0_i32_1 = arith.constant 0 : i32
    return %c0_i32, %c0_i32_0 : i32, i32
  }
  func.func @transform_12(%arg0: i32) -> (i32, i32) {
    %c0_i32 = arith.constant 0 : i32
    %c0_i32_0 = arith.constant 0 : i32
    %c0_i32_1 = arith.constant 0 : i32
    return %c0_i32, %c0_i32_0 : i32, i32
  }
  func.func @transform_13(%arg0: i32) -> (i32, i32, i32) {
    %c0_i32 = arith.constant 0 : i32
    %c0_i32_0 = arith.constant 0 : i32
    %c0_i32_1 = arith.constant 0 : i32
    %c0_i32_2 = arith.constant 0 : i32
    return %c0_i32, %c0_i32_0, %c0_i32_1 : i32, i32, i32
  }
}

</mosaic_0001>

<llo_original>
// kernel: tpu_custom_call.1
$region0: #{tpu_custom_call.1}
  #allocation0 [shape = 'u32[]', space=smem, size = 0x4, offset = 0x4, fixed_abs, tag = 'smem constant byte address 0x4 - core index']
  #allocation1 [shape = 'u32[144,128]{1,0:T(1,128)}', space=vmem, size = 0x12000, scoped, tag = 'internal scratch']
  %s0 = inlined_call_operand.vmem [shape: f32[4,4,32], index: 0, kind: input, shape index: {}]
  %s1 = inlined_call_operand.vmem [shape: f32[20,8], index: 1, kind: input, shape index: {}]
  %s2 = inlined_call_operand.vmem [shape: f32[1,8], index: 2, kind: input, shape index: {}]
  %s3 = inlined_call_operand.vmem [shape: f32[1,8], index: 3, kind: input, shape index: {}]
  %s4 = inlined_call_operand.vmem [shape: f32[1,8], index: 4, kind: input, shape index: {}]
  %s5 = inlined_call_operand.vmem [shape: f32[24,16], index: 5, kind: input, shape index: {}]
  %s6 = inlined_call_operand.vmem [shape: f32[1,16], index: 6, kind: input, shape index: {}]
  %s7 = inlined_call_operand.vmem [shape: f32[1,16], index: 7, kind: input, shape index: {}]
  %s8 = inlined_call_operand.vmem [shape: f32[1,16], index: 8, kind: input, shape index: {}]
  %s9 = inlined_call_operand.vmem [shape: f32[48,32], index: 9, kind: input, shape index: {}]
  %s10 = inlined_call_operand.vmem [shape: f32[1,32], index: 10, kind: input, shape index: {}]
  %s11 = inlined_call_operand.vmem [shape: f32[1,32], index: 11, kind: input, shape index: {}]
  %s12 = inlined_call_operand.vmem [shape: f32[1,32], index: 12, kind: input, shape index: {}]
  %s13 = inlined_call_operand.vmem [shape: f32[4,32,24], index: 13, kind: output, shape index: {}]
  %s14 = sld [smem:[#allocation0]]
  $region62: #{tpu_custom_call.1} parent=0
    _
  %s16 = ssub.s32 1, %s14
  %s17 = scalar_select 0, %s16, %s14
  // Predicated region
  $region2: #{tpu_custom_call.1} parent=0 // pred_check
    _
  $region3: #{tpu_custom_call.1} parent=0 // pred_check_branch
    %19 = sbr.rel (0) target = $region5
  $region4: #{tpu_custom_call.1} parent=0 // pred_region
    _
  $region5: #{tpu_custom_call.1} parent=0 // pred_fallthru
    _
  // Predicated region
  $region6: #{tpu_custom_call.1} parent=0 // pred_check
    _
  $region7: #{tpu_custom_call.1} parent=0 // pred_check_branch
    %21 = sbr.rel (0) target = $region9
  $region8: #{tpu_custom_call.1} parent=0 // pred_region
    _
  $region9: #{tpu_custom_call.1} parent=0 // pred_fallthru
    _
  // Predicated region
  $region10: #{tpu_custom_call.1} parent=0 // pred_check
    _
  $region11: #{tpu_custom_call.1} parent=0 // pred_check_branch
    %23 = sbr.rel (0) target = $region13
  $region12: #{tpu_custom_call.1} parent=0 // pred_region
    _
  $region13: #{tpu_custom_call.1} parent=0 // pred_fallthru
    _
  // Predicated region
  $region14: #{tpu_custom_call.1} parent=0 // pred_check
    _
  $region15: #{tpu_custom_call.1} parent=0 // pred_check_branch
    %25 = sbr.rel (0) target = $region17
  $region16: #{tpu_custom_call.1} parent=0 // pred_region
    _
  $region17: #{tpu_custom_call.1} parent=0 // pred_fallthru
    _
  // Predicated region
  $region18: #{tpu_custom_call.1} parent=0 // pred_check
    _
  $region19: #{tpu_custom_call.1} parent=0 // pred_check_branch
    %27 = sbr.rel (0) target = $region21
  $region20: #{tpu_custom_call.1} parent=0 // pred_region
    _
  $region21: #{tpu_custom_call.1} parent=0 // pred_fallthru
    _
  // Predicated region
  $region22: #{tpu_custom_call.1} parent=0 // pred_check
    _
  $region23: #{tpu_custom_call.1} parent=0 // pred_check_branch
    %29 = sbr.rel (0) target = $region25
  $region24: #{tpu_custom_call.1} parent=0 // pred_region
    _
  $region25: #{tpu_custom_call.1} parent=0 // pred_fallthru
    _
  // Predicated region
  $region26: #{tpu_custom_call.1} parent=0 // pred_check
    _
  $region27: #{tpu_custom_call.1} parent=0 // pred_check_branch
    %31 = sbr.rel (0) target = $region29
  $region28: #{tpu_custom_call.1} parent=0 // pred_region
    _
  $region29: #{tpu_custom_call.1} parent=0 // pred_fallthru
    _
  // Predicated region
  $region30: #{tpu_custom_call.1} parent=0 // pred_check
    _
  $region31: #{tpu_custom_call.1} parent=0 // pred_check_branch
    %33 = sbr.rel (0) target = $region33
  $region32: #{tpu_custom_call.1} parent=0 // pred_region
    _
  $region33: #{tpu_custom_call.1} parent=0 // pred_fallthru
    _
  // Predicated region
  $region34: #{tpu_custom_call.1} parent=0 // pred_check
    _
  $region35: #{tpu_custom_call.1} parent=0 // pred_check_branch
    %35 = sbr.rel (0) target = $region37
  $region36: #{tpu_custom_call.1} parent=0 // pred_region
    _
  $region37: #{tpu_custom_call.1} parent=0 // pred_fallthru
    _
  // Predicated region
  $region38: #{tpu_custom_call.1} parent=0 // pred_check
    _
  $region39: #{tpu_custom_call.1} parent=0 // pred_check_branch
    %37 = sbr.rel (0) target = $region41
  $region40: #{tpu_custom_call.1} parent=0 // pred_region
    _
  $region41: #{tpu_custom_call.1} parent=0 // pred_fallthru
    _
  // Predicated region
  $region42: #{tpu_custom_call.1} parent=0 // pred_check
    _
  $region43: #{tpu_custom_call.1} parent=0 // pred_check_branch
    %39 = sbr.rel (0) target = $region45
  $region44: #{tpu_custom_call.1} parent=0 // pred_region
    _
  $region45: #{tpu_custom_call.1} parent=0 // pred_fallthru
    _
  // Predicated region
  $region46: #{tpu_custom_call.1} parent=0 // pred_check
    _
  $region47: #{tpu_custom_call.1} parent=0 // pred_check_branch
    %41 = sbr.rel (0) target = $region49
  $region48: #{tpu_custom_call.1} parent=0 // pred_region
    _
  $region49: #{tpu_custom_call.1} parent=0 // pred_fallthru
    _
  // Predicated region
  $region50: #{tpu_custom_call.1} parent=0 // pred_check
    _
  $region51: #{tpu_custom_call.1} parent=0 // pred_check_branch
    %43 = sbr.rel (0) target = $region53
  $region52: #{tpu_custom_call.1} parent=0 // pred_region
    _
  $region53: #{tpu_custom_call.1} parent=0 // pred_fallthru
    _
  %v44 = vld [vmem:[%s0] sm:$0xf]
  %45 = vxpose.xlu0.b32.start [1/16] %v44, 128
  %46 = vxpose.xlu0.b32.cont [2/16] 0.0, 128
  %47 = vxpose.xlu0.b32.cont [3/16] 0.0, 128
  %48 = vxpose.xlu0.b32.cont [4/16] 0.0, 128
  %49 = vxpose.xlu0.b32.cont [5/16] 0.0, 128
  %50 = vxpose.xlu0.b32.cont [6/16] 0.0, 128
  %51 = vxpose.xlu0.b32.cont [7/16] 0.0, 128
  %52 = vxpose.xlu0.b32.cont [8/16] 0.0, 128
  %53 = vxpose.xlu0.b32.cont [9/16] 0.0, 128
  %54 = vxpose.xlu0.b32.cont [10/16] 0.0, 128
  %55 = vxpose.xlu0.b32.cont [11/16] 0.0, 128
  %56 = vxpose.xlu0.b32.cont [12/16] 0.0, 128
  %57 = vxpose.xlu0.b32.cont [13/16] 0.0, 128
  %58 = vxpose.xlu0.b32.cont [14/16] 0.0, 128
  %59 = vxpose.xlu0.b32.cont [15/16] 0.0, 128
  %60 = vxpose.xlu0.b32.end [16/16] 0.0, 128
  %v61 = vpop.trf.xlu0
  %v62 = vpop.trf.xlu0
  %v63 = vpop.trf.xlu0
  %v64 = vpop.trf.xlu0
  %v65 = vpop.trf.xlu0
  %v66 = vpop.trf.xlu0
  %v67 = vpop.trf.xlu0
  %v68 = vpop.trf.xlu0
  %v69 = vpop.trf.xlu0
  %v70 = vpop.trf.xlu0
  %v71 = vpop.trf.xlu0
  %v72 = vpop.trf.xlu0
  %v73 = vpop.trf.xlu0
  %v74 = vpop.trf.xlu0
  %v75 = vpop.trf.xlu0
  %v76 = vpop.trf.xlu0
  %s77 = scalar_lea.vmem %s0, 4
  %v78 = vld [vmem:[%s77] sm:$0xf]
  %79 = vxpose.xlu0.b32.start [1/16] %v78, 128
  %80 = vxpose.xlu0.b32.cont [2/16] 0.0, 128
  %81 = vxpose.xlu0.b32.cont [3/16] 0.0, 128
  %82 = vxpose.xlu0.b32.cont [4/16] 0.0, 128
  %83 = vxpose.xlu0.b32.cont [5/16] 0.0, 128
  %84 = vxpose.xlu0.b32.cont [6/16] 0.0, 128
  %85 = vxpose.xlu0.b32.cont [7/16] 0.0, 128
  %86 = vxpose.xlu0.b32.cont [8/16] 0.0, 128
  %87 = vxpose.xlu0.b32.cont [9/16] 0.0, 128
  %88 = vxpose.xlu0.b32.cont [10/16] 0.0, 128
  %89 = vxpose.xlu0.b32.cont [11/16] 0.0, 128
  %90 = vxpose.xlu0.b32.cont [12/16] 0.0, 128
  %91 = vxpose.xlu0.b32.cont [13/16] 0.0, 128
  %92 = vxpose.xlu0.b32.cont [14/16] 0.0, 128
  %93 = vxpose.xlu0.b32.cont [15/16] 0.0, 128
  %94 = vxpose.xlu0.b32.end [16/16] 0.0, 128
  %v95 = vpop.trf.xlu0
  %v96 = vpop.trf.xlu0
  %v97 = vpop.trf.xlu0
  %v98 = vpop.trf.xlu0
  %v99 = vpop.trf.xlu0
  %v100 = vpop.trf.xlu0
  %v101 = vpop.trf.xlu0
  %v102 = vpop.trf.xlu0
  %v103 = vpop.trf.xlu0
  %v104 = vpop.trf.xlu0
  %v105 = vpop.trf.xlu0
  %v106 = vpop.trf.xlu0
  %v107 = vpop.trf.xlu0
  %v108 = vpop.trf.xlu0
  %v109 = vpop.trf.xlu0
  %v110 = vpop.trf.xlu0
  %s111 = scalar_lea.vmem %s0, 8
  %v112 = vld [vmem:[%s111] sm:$0xf]
  %113 = vxpose.xlu0.b32.start [1/16] %v112, 128
  %114 = vxpose.xlu0.b32.cont [2/16] 0.0, 128
  %115 = vxpose.xlu0.b32.cont [3/16] 0.0, 128
  %116 = vxpose.xlu0.b32.cont [4/16] 0.0, 128
  %117 = vxpose.xlu0.b32.cont [5/16] 0.0, 128
  %118 = vxpose.xlu0.b32.cont [6/16] 0.0, 128
  %119 = vxpose.xlu0.b32.cont [7/16] 0.0, 128
  %120 = vxpose.xlu0.b32.cont [8/16] 0.0, 128
  %121 = vxpose.xlu0.b32.cont [9/16] 0.0, 128
  %122 = vxpose.xlu0.b32.cont [10/16] 0.0, 128
  %123 = vxpose.xlu0.b32.cont [11/16] 0.0, 128
  %124 = vxpose.xlu0.b32.cont [12/16] 0.0, 128
  %125 = vxpose.xlu0.b32.cont [13/16] 0.0, 128
  %126 = vxpose.xlu0.b32.cont [14/16] 0.0, 128
  %127 = vxpose.xlu0.b32.cont [15/16] 0.0, 128
  %128 = vxpose.xlu0.b32.end [16/16] 0.0, 128
  %v129 = vpop.trf.xlu0
  %v130 = vpop.trf.xlu0
  %v131 = vpop.trf.xlu0
  %v132 = vpop.trf.xlu0
  %v133 = vpop.trf.xlu0
  %v134 = vpop.trf.xlu0
  %v135 = vpop.trf.xlu0
  %v136 = vpop.trf.xlu0
  %v137 = vpop.trf.xlu0
  %v138 = vpop.trf.xlu0
  %v139 = vpop.trf.xlu0
  %v140 = vpop.trf.xlu0
  %v141 = vpop.trf.xlu0
  %v142 = vpop.trf.xlu0
  %v143 = vpop.trf.xlu0
  %v144 = vpop.trf.xlu0
  %s145 = scalar_lea.vmem %s0, 12
  %v146 = vld [vmem:[%s145] sm:$0xf]
  %147 = vxpose.xlu0.b32.start [1/16] %v146, 128
  %148 = vxpose.xlu0.b32.cont [2/16] 0.0, 128
  %149 = vxpose.xlu0.b32.cont [3/16] 0.0, 128
  %150 = vxpose.xlu0.b32.cont [4/16] 0.0, 128
  %151 = vxpose.xlu0.b32.cont [5/16] 0.0, 128
  %152 = vxpose.xlu0.b32.cont [6/16] 0.0, 128
  %153 = vxpose.xlu0.b32.cont [7/16] 0.0, 128
  %154 = vxpose.xlu0.b32.cont [8/16] 0.0, 128
  %155 = vxpose.xlu0.b32.cont [9/16] 0.0, 128
  %156 = vxpose.xlu0.b32.cont [10/16] 0.0, 128
  %157 = vxpose.xlu0.b32.cont [11/16] 0.0, 128
  %158 = vxpose.xlu0.b32.cont [12/16] 0.0, 128
  %159 = vxpose.xlu0.b32.cont [13/16] 0.0, 128
  %160 = vxpose.xlu0.b32.cont [14/16] 0.0, 128
  %161 = vxpose.xlu0.b32.cont [15/16] 0.0, 128
  %162 = vxpose.xlu0.b32.end [16/16] 0.0, 128
  %v163 = vpop.trf.xlu0
  %v164 = vpop.trf.xlu0
  %v165 = vpop.trf.xlu0
  %v166 = vpop.trf.xlu0
  %v167 = vpop.trf.xlu0
  %v168 = vpop.trf.xlu0
  %v169 = vpop.trf.xlu0
  %v170 = vpop.trf.xlu0
  %v171 = vpop.trf.xlu0
  %v172 = vpop.trf.xlu0
  %v173 = vpop.trf.xlu0
  %v174 = vpop.trf.xlu0
  %v175 = vpop.trf.xlu0
  %v176 = vpop.trf.xlu0
  %v177 = vpop.trf.xlu0
  %v178 = vpop.trf.xlu0
  %v179 = vld [vmem:[%s1] sm:$0xff]
  %v180 = vld [vmem:[%s1 + $0x8] sm:$0xff]
  %v181 = vld [vmem:[%s1 + $0x10] sm:$0xf]
  %v182 = vld [vmem:[%s2] sm:$0x1]
  %vm187 = vcmask 1043456
  %v188 = vrot.slane %v95, 4
  %v189 = vrot.slane %v96, 4
  %v190 = vsel %vm187, %v188, %v189
  %v191 = vrot.slane %v97, 4
  %v192 = vsel %vm187, %v189, %v191
  %v193 = vrot.slane %v98, 4
  %v194 = vsel %vm187, %v191, %v193
  %v200 = vrot.slane %v163, 4
  %v201 = vrot.slane %v164, 4
  %v202 = vsel %vm187, %v200, %v201
  %v203 = vrot.slane %v165, 4
  %v204 = vsel %vm187, %v201, %v203
  %v205 = vrot.slane %v166, 4
  %v206 = vsel %vm187, %v203, %v205
  %v208 = vsel %vm187, %v64, %v188
  %v209 = vsel %vm187, %v132, %v200
  %vm214 = vcmask 1046528
  %v215 = vrot.slane %v61, 1
  %v216 = vrot.slane %v62, 1
  %v217 = vsel %vm214, %v215, %v216
  %v218 = vrot.slane %v63, 1
  %v219 = vsel %vm214, %v216, %v218
  %v220 = vrot.slane %v64, 1
  %v221 = vsel %vm214, %v218, %v220
  %vm223 = vcmask 1042432
  %v224 = vrot.slane %v95, 5
  %v225 = vrot.slane %v96, 5
  %v226 = vsel %vm223, %v224, %v225
  %v227 = vrot.slane %v97, 5
  %v228 = vsel %vm223, %v225, %v227
  %v229 = vrot.slane %v98, 5
  %v230 = vsel %vm223, %v227, %v229
  %v236 = vrot.slane %v129, 1
  %v237 = vrot.slane %v130, 1
  %v238 = vsel %vm214, %v236, %v237
  %v239 = vrot.slane %v131, 1
  %v240 = vsel %vm214, %v237, %v239
  %v241 = vrot.slane %v132, 1
  %v242 = vsel %vm214, %v239, %v241
  %v244 = vrot.slane %v163, 5
  %v245 = vrot.slane %v164, 5
  %v246 = vsel %vm223, %v244, %v245
  %v247 = vrot.slane %v165, 5
  %v248 = vsel %vm223, %v245, %v247
  %v249 = vrot.slane %v166, 5
  %v250 = vsel %vm223, %v247, %v249
  %v252 = vsel %vm187, %v220, %v224
  %v253 = vsel %vm187, %v241, %v244
  %v255 = vrot.slane %v179, 4
  %vm256 = vcmask 31744
  %v257 = vsel %vm256, %v217, 0
  %v259 = vsel %vm256, %v219, 0
  %v261 = vsel %vm256, %v221, 0
  %v264 = vsel %vm256, %v252, 0
  %v266 = vsel %vm256, %v226, 0
  %v268 = vsel %vm256, %v228, 0
  %v270 = vsel %vm256, %v230, 0
  %v272 = vsel %vm256, %v238, 0
  %v274 = vsel %vm256, %v240, 0
  %v276 = vsel %vm256, %v242, 0
  %v279 = vsel %vm256, %v253, 0
  %v281 = vsel %vm256, %v246, 0
  %v283 = vsel %vm256, %v248, 0
  %v285 = vsel %vm256, %v250, 0
  %v287 = vsel %vm187, %v255, 0
  %289 = vmatprep.subr.mxu0 0.0
  %290 = vmatpush1.msra.mxu0 0.0
  %291 = vmatprep.subr.mxu0 0.0
  %292 = vmatpush1.msra.mxu0 0.0
  %293 = vmatprep.subr.mxu0 0.0
  %294 = vmatpush1.msra.mxu0 0.0
  %295 = vmatprep.subr.mxu0 0.0
  %296 = vmatpush1.msra.mxu0 0.0
  %297 = vmatprep.subr.mxu0 0.0
  %298 = vmatpush1.msra.mxu0 0.0
  %299 = vmatprep.subr.mxu0 0.0
  %300 = vmatpush1.msra.mxu0 0.0
  %301 = vmatprep.subr.mxu0 0.0
  %302 = vmatpush1.msra.mxu0 0.0
  %303 = vmatprep.subr.mxu0 0.0
  %304 = vmatpush1.msra.mxu0 0.0
  %305 = vmatprep.subr.mxu0 0.0
  %306 = vmatpush1.msra.mxu0 0.0
  %307 = vmatprep.subr.mxu0 0.0
  %308 = vmatpush1.msra.mxu0 0.0
  %309 = vmatprep.subr.mxu0 0.0
  %310 = vmatpush1.msra.mxu0 0.0
  %311 = vmatprep.subr.mxu0 0.0
  %312 = vmatpush1.msra.mxu0 0.0
  %313 = vmatprep.subr.mxu0 0.0
  %314 = vmatpush1.msra.mxu0 0.0
  %315 = vmatprep.subr.mxu0 0.0
  %316 = vmatpush1.msra.mxu0 0.0
  %317 = vmatprep.subr.mxu0 0.0
  %318 = vmatpush1.msra.mxu0 0.0
  %319 = vmatprep.subr.mxu0 0.0
  %320 = vmatpush1.msra.mxu0 %v287
  %321 = vmatprep.subr.mxu0 0.0
  %322 = vmatpush2.msra.mxu0 0.0
  %323 = vmatprep.subr.mxu0 0.0
  %324 = vmatpush2.msra.mxu0 0.0
  %325 = vmatprep.subr.mxu0 0.0
  %326 = vmatpush2.msra.mxu0 0.0
  %327 = vmatprep.subr.mxu0 0.0
  %328 = vmatpush2.msra.mxu0 0.0
  %329 = vmatprep.subr.mxu0 0.0
  %330 = vmatpush2.msra.mxu0 0.0
  %331 = vmatprep.subr.mxu0 0.0
  %332 = vmatpush2.msra.mxu0 0.0
  %333 = vmatprep.subr.mxu0 0.0
  %334 = vmatpush2.msra.mxu0 0.0
  %335 = vmatprep.subr.mxu0 0.0
  %336 = vmatpush2.msra.mxu0 0.0
  %337 = vmatprep.subr.mxu0 0.0
  %338 = vmatpush2.msra.mxu0 0.0
  %339 = vmatprep.subr.mxu0 0.0
  %340 = vmatpush2.msra.mxu0 0.0
  %341 = vmatprep.subr.mxu0 0.0
  %342 = vmatpush2.msra.mxu0 0.0
  %343 = vmatprep.subr.mxu0 0.0
  %344 = vmatpush2.msra.mxu0 0.0
  %345 = vmatprep.subr.mxu0 0.0
  %346 = vmatpush2.msra.mxu0 0.0
  %347 = vmatprep.subr.mxu0 0.0
  %348 = vmatpush2.msra.mxu0 0.0
  %349 = vmatprep.subr.mxu0 0.0
  %350 = vmatpush2.msra.mxu0 0.0
  %351 = vmatprep.subr.mxu0 0.0
  %352 = vmatpush2.msra.mxu0 0.0
  %353 = vmatprep.mubr.f32.mxu0 0.0
  %354 = vmatmul.mubr.f32.gmra.mxu0 %v257
  %v355 = vpop.f32.mrf.mxu0
  %v356 = vadd.f32 0.0, %v355
  %v357 = vpop.f32.mrf.mxu0
  %358 = vmatprep.mubr.f32.mxu0 0.0
  %359 = vmatmul.mubr.f32.gmra.mxu0 %v259
  %v360 = vpop.f32.mrf.mxu0
  %v361 = vadd.f32 0.0, %v360
  %v362 = vpop.f32.mrf.mxu0
  %363 = vmatprep.mubr.f32.mxu0 0.0
  %364 = vmatmul.mubr.f32.gmra.mxu0 %v261
  %v365 = vpop.f32.mrf.mxu0
  %v366 = vadd.f32 0.0, %v365
  %v367 = vpop.f32.mrf.mxu0
  %368 = vmatprep.mubr.f32.mxu0 0.0
  %369 = vmatmul.mubr.f32.gmra.mxu0 %v264
  %v370 = vpop.f32.mrf.mxu0
  %v371 = vadd.f32 0.0, %v370
  %v372 = vpop.f32.mrf.mxu0
  %373 = vmatprep.mubr.f32.mxu0 0.0
  %374 = vmatmul.mubr.f32.gmra.mxu0 %v266
  %v375 = vpop.f32.mrf.mxu0
  %v376 = vadd.f32 0.0, %v375
  %v377 = vpop.f32.mrf.mxu0
  %378 = vmatprep.mubr.f32.mxu0 0.0
  %379 = vmatmul.mubr.f32.gmra.mxu0 %v268
  %v380 = vpop.f32.mrf.mxu0
  %v381 = vadd.f32 0.0, %v380
  %v382 = vpop.f32.mrf.mxu0
  %383 = vmatprep.mubr.f32.mxu0 0.0
  %384 = vmatmul.mubr.f32.gmra.mxu0 %v270
  %v385 = vpop.f32.mrf.mxu0
  %v386 = vadd.f32 0.0, %v385
  %v387 = vpop.f32.mrf.mxu0
  %388 = vmatprep.mubr.f32.mxu0 0.0
  %389 = vmatmul.mubr.f32.gmra.mxu0 %v272
  %v390 = vpop.f32.mrf.mxu0
  %v391 = vadd.f32 0.0, %v390
  %v392 = vpop.f32.mrf.mxu0
  %393 = vmatprep.mubr.f32.mxu0 0.0
  %394 = vmatmul.mubr.f32.gmra.mxu0 %v274
  %v395 = vpop.f32.mrf.mxu0
  %v396 = vadd.f32 0.0, %v395
  %v397 = vpop.f32.mrf.mxu0
  %398 = vmatprep.mubr.f32.mxu0 0.0
  %399 = vmatmul.mubr.f32.gmra.mxu0 %v276
  %v400 = vpop.f32.mrf.mxu0
  %v401 = vadd.f32 0.0, %v400
  %v402 = vpop.f32.mrf.mxu0
  %403 = vmatprep.mubr.f32.mxu0 0.0
  %404 = vmatmul.mubr.f32.gmra.mxu0 %v279
  %v405 = vpop.f32.mrf.mxu0
  %v406 = vadd.f32 0.0, %v405
  %v407 = vpop.f32.mrf.mxu0
  %408 = vmatprep.mubr.f32.mxu0 0.0
  %409 = vmatmul.mubr.f32.gmra.mxu0 %v281
  %v410 = vpop.f32.mrf.mxu0
  %v411 = vadd.f32 0.0, %v410
  %v412 = vpop.f32.mrf.mxu0
  %413 = vmatprep.mubr.f32.mxu0 0.0
  %414 = vmatmul.mubr.f32.gmra.mxu0 %v283
  %v415 = vpop.f32.mrf.mxu0
  %v416 = vadd.f32 0.0, %v415
  %v417 = vpop.f32.mrf.mxu0
  %418 = vmatprep.mubr.f32.mxu0 0.0
  %419 = vmatmul.mubr.f32.gmra.mxu0 %v285
  %v420 = vpop.f32.mrf.mxu0
  %v421 = vadd.f32 0.0, %v420
  %v422 = vpop.f32.mrf.mxu0
  %423 = vdwg.mxu0
  %v424 = vsel %vm256, %v61, 0
  %v426 = vsel %vm256, %v62, 0
  %v428 = vsel %vm256, %v63, 0
  %v431 = vsel %vm256, %v208, 0
  %v433 = vsel %vm256, %v190, 0
  %v435 = vsel %vm256, %v192, 0
  %v437 = vsel %vm256, %v194, 0
  %v439 = vsel %vm256, %v129, 0
  %v441 = vsel %vm256, %v130, 0
  %v443 = vsel %vm256, %v131, 0
  %v446 = vsel %vm256, %v209, 0
  %v448 = vsel %vm256, %v202, 0
  %v450 = vsel %vm256, %v204, 0
  %v452 = vsel %vm256, %v206, 0
  %v454 = vsel %vm187, %v179, 0
  %456 = vmatprep.subr.mxu0 0.0
  %457 = vmatpush1.msra.mxu0 0.0
  %458 = vmatprep.subr.mxu0 0.0
  %459 = vmatpush1.msra.mxu0 0.0
  %460 = vmatprep.subr.mxu0 0.0
  %461 = vmatpush1.msra.mxu0 0.0
  %462 = vmatprep.subr.mxu0 0.0
  %463 = vmatpush1.msra.mxu0 0.0
  %464 = vmatprep.subr.mxu0 0.0
  %465 = vmatpush1.msra.mxu0 0.0
  %466 = vmatprep.subr.mxu0 0.0
  %467 = vmatpush1.msra.mxu0 0.0
  %468 = vmatprep.subr.mxu0 0.0
  %469 = vmatpush1.msra.mxu0 0.0
  %470 = vmatprep.subr.mxu0 0.0
  %471 = vmatpush1.msra.mxu0 0.0
  %472 = vmatprep.subr.mxu0 0.0
  %473 = vmatpush1.msra.mxu0 0.0
  %474 = vmatprep.subr.mxu0 0.0
  %475 = vmatpush1.msra.mxu0 0.0
  %476 = vmatprep.subr.mxu0 0.0
  %477 = vmatpush1.msra.mxu0 0.0
  %478 = vmatprep.subr.mxu0 0.0
  %479 = vmatpush1.msra.mxu0 0.0
  %480 = vmatprep.subr.mxu0 0.0
  %481 = vmatpush1.msra.mxu0 0.0
  %482 = vmatprep.subr.mxu0 0.0
  %483 = vmatpush1.msra.mxu0 0.0
  %484 = vmatprep.subr.mxu0 0.0
  %485 = vmatpush1.msra.mxu0 0.0
  %486 = vmatprep.subr.mxu0 0.0
  %487 = vmatpush1.msra.mxu0 %v454
  %488 = vmatprep.subr.mxu0 0.0
  %489 = vmatpush2.msra.mxu0 0.0
  %490 = vmatprep.subr.mxu0 0.0
  %491 = vmatpush2.msra.mxu0 0.0
  %492 = vmatprep.subr.mxu0 0.0
  %493 = vmatpush2.msra.mxu0 0.0
  %494 = vmatprep.subr.mxu0 0.0
  %495 = vmatpush2.msra.mxu0 0.0
  %496 = vmatprep.subr.mxu0 0.0
  %497 = vmatpush2.msra.mxu0 0.0
  %498 = vmatprep.subr.mxu0 0.0
  %499 = vmatpush2.msra.mxu0 0.0
  %500 = vmatprep.subr.mxu0 0.0
  %501 = vmatpush2.msra.mxu0 0.0
  %502 = vmatprep.subr.mxu0 0.0
  %503 = vmatpush2.msra.mxu0 0.0
  %504 = vmatprep.subr.mxu0 0.0
  %505 = vmatpush2.msra.mxu0 0.0
  %506 = vmatprep.subr.mxu0 0.0
  %507 = vmatpush2.msra.mxu0 0.0
  %508 = vmatprep.subr.mxu0 0.0
  %509 = vmatpush2.msra.mxu0 0.0
  %510 = vmatprep.subr.mxu0 0.0
  %511 = vmatpush2.msra.mxu0 0.0
  %512 = vmatprep.subr.mxu0 0.0
  %513 = vmatpush2.msra.mxu0 0.0
  %514 = vmatprep.subr.mxu0 0.0
  %515 = vmatpush2.msra.mxu0 0.0
  %516 = vmatprep.subr.mxu0 0.0
  %517 = vmatpush2.msra.mxu0 0.0
  %518 = vmatprep.subr.mxu0 0.0
  %519 = vmatpush2.msra.mxu0 0.0
  %520 = vmatprep.mubr.f32.mxu0 0.0
  %521 = vmatmul.mubr.f32.gmra.mxu0 %v424
  %v522 = vpop.f32.mrf.mxu0
  %v523 = vadd.f32 %v356, %v522
  %v524 = vpop.f32.mrf.mxu0
  %525 = vmatprep.mubr.f32.mxu0 0.0
  %526 = vmatmul.mubr.f32.gmra.mxu0 %v426
  %v527 = vpop.f32.mrf.mxu0
  %v528 = vadd.f32 %v361, %v527
  %v529 = vpop.f32.mrf.mxu0
  %530 = vmatprep.mubr.f32.mxu0 0.0
  %531 = vmatmul.mubr.f32.gmra.mxu0 %v428
  %v532 = vpop.f32.mrf.mxu0
  %v533 = vadd.f32 %v366, %v532
  %v534 = vpop.f32.mrf.mxu0
  %535 = vmatprep.mubr.f32.mxu0 0.0
  %536 = vmatmul.mubr.f32.gmra.mxu0 %v431
  %v537 = vpop.f32.mrf.mxu0
  %v538 = vadd.f32 %v371, %v537
  %v539 = vpop.f32.mrf.mxu0
  %540 = vmatprep.mubr.f32.mxu0 0.0
  %541 = vmatmul.mubr.f32.gmra.mxu0 %v433
  %v542 = vpop.f32.mrf.mxu0
  %v543 = vadd.f32 %v376, %v542
  %v544 = vpop.f32.mrf.mxu0
  %545 = vmatprep.mubr.f32.mxu0 0.0
  %546 = vmatmul.mubr.f32.gmra.mxu0 %v435
  %v547 = vpop.f32.mrf.mxu0
  %v548 = vadd.f32 %v381, %v547
  %v549 = vpop.f32.mrf.mxu0
  %550 = vmatprep.mubr.f32.mxu0 0.0
  %551 = vmatmul.mubr.f32.gmra.mxu0 %v437
  %v552 = vpop.f32.mrf.mxu0
  %v553 = vadd.f32 %v386, %v552
  %v554 = vpop.f32.mrf.mxu0
  %555 = vmatprep.mubr.f32.mxu0 0.0
  %556 = vmatmul.mubr.f32.gmra.mxu0 %v439
  %v557 = vpop.f32.mrf.mxu0
  %v558 = vadd.f32 %v391, %v557
  %v559 = vpop.f32.mrf.mxu0
  %560 = vmatprep.mubr.f32.mxu0 0.0
  %561 = vmatmul.mubr.f32.gmra.mxu0 %v441
  %v562 = vpop.f32.mrf.mxu0
  %v563 = vadd.f32 %v396, %v562
  %v564 = vpop.f32.mrf.mxu0
  %565 = vmatprep.mubr.f32.mxu0 0.0
  %566 = vmatmul.mubr.f32.gmra.mxu0 %v443
  %v567 = vpop.f32.mrf.mxu0
  %v568 = vadd.f32 %v401, %v567
  %v569 = vpop.f32.mrf.mxu0
  %570 = vmatprep.mubr.f32.mxu0 0.0
  %571 = vmatmul.mubr.f32.gmra.mxu0 %v446
  %v572 = vpop.f32.mrf.mxu0
  %v573 = vadd.f32 %v406, %v572
  %v574 = vpop.f32.mrf.mxu0
  %575 = vmatprep.mubr.f32.mxu0 0.0
  %576 = vmatmul.mubr.f32.gmra.mxu0 %v448
  %v577 = vpop.f32.mrf.mxu0
  %v578 = vadd.f32 %v411, %v577
  %v579 = vpop.f32.mrf.mxu0
  %580 = vmatprep.mubr.f32.mxu0 0.0
  %581 = vmatmul.mubr.f32.gmra.mxu0 %v450
  %v582 = vpop.f32.mrf.mxu0
  %v583 = vadd.f32 %v416, %v582
  %v584 = vpop.f32.mrf.mxu0
  %585 = vmatprep.mubr.f32.mxu0 0.0
  %586 = vmatmul.mubr.f32.gmra.mxu0 %v452
  %v587 = vpop.f32.mrf.mxu0
  %v588 = vadd.f32 %v421, %v587
  %v589 = vpop.f32.mrf.mxu0
  %590 = vdwg.mxu0
  %vm591 = vcmask 1045504
  %v592 = vrot.slane %v61, 2
  %v593 = vrot.slane %v62, 2
  %v594 = vsel %vm591, %v592, %v593
  %v595 = vrot.slane %v63, 2
  %v596 = vsel %vm591, %v593, %v595
  %v597 = vrot.slane %v64, 2
  %v598 = vsel %vm591, %v595, %v597
  %vm600 = vcmask 1041408
  %v601 = vrot.slane %v95, 6
  %v602 = vrot.slane %v96, 6
  %v603 = vsel %vm600, %v601, %v602
  %v604 = vrot.slane %v97, 6
  %v605 = vsel %vm600, %v602, %v604
  %v606 = vrot.slane %v98, 6
  %v607 = vsel %vm600, %v604, %v606
  %v609 = vrot.slane %v129, 2
  %v610 = vrot.slane %v130, 2
  %v611 = vsel %vm591, %v609, %v610
  %v612 = vrot.slane %v131, 2
  %v613 = vsel %vm591, %v610, %v612
  %v614 = vrot.slane %v132, 2
  %v615 = vsel %vm591, %v612, %v614
  %v617 = vrot.slane %v163, 6
  %v618 = vrot.slane %v164, 6
  %v619 = vsel %vm600, %v617, %v618
  %v620 = vrot.slane %v165, 6
  %v621 = vsel %vm600, %v618, %v620
  %v622 = vrot.slane %v166, 6
  %v623 = vsel %vm600, %v620, %v622
  %v625 = vsel %vm187, %v597, %v601
  %v626 = vsel %vm187, %v614, %v617
  %v627 = vsel %vm256, %v594, 0
  %v629 = vsel %vm256, %v596, 0
  %v631 = vsel %vm256, %v598, 0
  %v634 = vsel %vm256, %v625, 0
  %v636 = vsel %vm256, %v603, 0
  %v638 = vsel %vm256, %v605, 0
  %v640 = vsel %vm256, %v607, 0
  %v642 = vsel %vm256, %v611, 0
  %v644 = vsel %vm256, %v613, 0
  %v646 = vsel %vm256, %v615, 0
  %v649 = vsel %vm256, %v626, 0
  %v651 = vsel %vm256, %v619, 0
  %v653 = vsel %vm256, %v621, 0
  %v655 = vsel %vm256, %v623, 0
  %v658 = vsel %vm187, %v180, 0
  %660 = vmatprep.subr.mxu0 0.0
  %661 = vmatpush1.msra.mxu0 0.0
  %662 = vmatprep.subr.mxu0 0.0
  %663 = vmatpush1.msra.mxu0 0.0
  %664 = vmatprep.subr.mxu0 0.0
  %665 = vmatpush1.msra.mxu0 0.0
  %666 = vmatprep.subr.mxu0 0.0
  %667 = vmatpush1.msra.mxu0 0.0
  %668 = vmatprep.subr.mxu0 0.0
  %669 = vmatpush1.msra.mxu0 0.0
  %670 = vmatprep.subr.mxu0 0.0
  %671 = vmatpush1.msra.mxu0 0.0
  %672 = vmatprep.subr.mxu0 0.0
  %673 = vmatpush1.msra.mxu0 0.0
  %674 = vmatprep.subr.mxu0 0.0
  %675 = vmatpush1.msra.mxu0 0.0
  %676 = vmatprep.subr.mxu0 0.0
  %677 = vmatpush1.msra.mxu0 0.0
  %678 = vmatprep.subr.mxu0 0.0
  %679 = vmatpush1.msra.mxu0 0.0
  %680 = vmatprep.subr.mxu0 0.0
  %681 = vmatpush1.msra.mxu0 0.0
  %682 = vmatprep.subr.mxu0 0.0
  %683 = vmatpush1.msra.mxu0 0.0
  %684 = vmatprep.subr.mxu0 0.0
  %685 = vmatpush1.msra.mxu0 0.0
  %686 = vmatprep.subr.mxu0 0.0
  %687 = vmatpush1.msra.mxu0 0.0
  %688 = vmatprep.subr.mxu0 0.0
  %689 = vmatpush1.msra.mxu0 0.0
  %690 = vmatprep.subr.mxu0 0.0
  %691 = vmatpush1.msra.mxu0 %v658
  %692 = vmatprep.subr.mxu0 0.0
  %693 = vmatpush2.msra.mxu0 0.0
  %694 = vmatprep.subr.mxu0 0.0
  %695 = vmatpush2.msra.mxu0 0.0
  %696 = vmatprep.subr.mxu0 0.0
  %697 = vmatpush2.msra.mxu0 0.0
  %698 = vmatprep.subr.mxu0 0.0
  %699 = vmatpush2.msra.mxu0 0.0
  %700 = vmatprep.subr.mxu0 0.0
  %701 = vmatpush2.msra.mxu0 0.0
  %702 = vmatprep.subr.mxu0 0.0
  %703 = vmatpush2.msra.mxu0 0.0
  %704 = vmatprep.subr.mxu0 0.0
  %705 = vmatpush2.msra.mxu0 0.0
  %706 = vmatprep.subr.mxu0 0.0
  %707 = vmatpush2.msra.mxu0 0.0
  %708 = vmatprep.subr.mxu0 0.0
  %709 = vmatpush2.msra.mxu0 0.0
  %710 = vmatprep.subr.mxu0 0.0
  %711 = vmatpush2.msra.mxu0 0.0
  %712 = vmatprep.subr.mxu0 0.0
  %713 = vmatpush2.msra.mxu0 0.0
  %714 = vmatprep.subr.mxu0 0.0
  %715 = vmatpush2.msra.mxu0 0.0
  %716 = vmatprep.subr.mxu0 0.0
  %717 = vmatpush2.msra.mxu0 0.0
  %718 = vmatprep.subr.mxu0 0.0
  %719 = vmatpush2.msra.mxu0 0.0
  %720 = vmatprep.subr.mxu0 0.0
  %721 = vmatpush2.msra.mxu0 0.0
  %722 = vmatprep.subr.mxu0 0.0
  %723 = vmatpush2.msra.mxu0 0.0
  %724 = vmatprep.mubr.f32.mxu0 0.0
  %725 = vmatmul.mubr.f32.gmra.mxu0 %v627
  %v726 = vpop.f32.mrf.mxu0
  %v727 = vadd.f32 0.0, %v726
  %v728 = vpop.f32.mrf.mxu0
  %729 = vmatprep.mubr.f32.mxu0 0.0
  %730 = vmatmul.mubr.f32.gmra.mxu0 %v629
  %v731 = vpop.f32.mrf.mxu0
  %v732 = vadd.f32 0.0, %v731
  %v733 = vpop.f32.mrf.mxu0
  %734 = vmatprep.mubr.f32.mxu0 0.0
  %735 = vmatmul.mubr.f32.gmra.mxu0 %v631
  %v736 = vpop.f32.mrf.mxu0
  %v737 = vadd.f32 0.0, %v736
  %v738 = vpop.f32.mrf.mxu0
  %739 = vmatprep.mubr.f32.mxu0 0.0
  %740 = vmatmul.mubr.f32.gmra.mxu0 %v634
  %v741 = vpop.f32.mrf.mxu0
  %v742 = vadd.f32 0.0, %v741
  %v743 = vpop.f32.mrf.mxu0
  %744 = vmatprep.mubr.f32.mxu0 0.0
  %745 = vmatmul.mubr.f32.gmra.mxu0 %v636
  %v746 = vpop.f32.mrf.mxu0
  %v747 = vadd.f32 0.0, %v746
  %v748 = vpop.f32.mrf.mxu0
  %749 = vmatprep.mubr.f32.mxu0 0.0
  %750 = vmatmul.mubr.f32.gmra.mxu0 %v638
  %v751 = vpop.f32.mrf.mxu0
  %v752 = vadd.f32 0.0, %v751
  %v753 = vpop.f32.mrf.mxu0
  %754 = vmatprep.mubr.f32.mxu0 0.0
  %755 = vmatmul.mubr.f32.gmra.mxu0 %v640
  %v756 = vpop.f32.mrf.mxu0
  %v757 = vadd.f32 0.0, %v756
  %v758 = vpop.f32.mrf.mxu0
  %759 = vmatprep.mubr.f32.mxu0 0.0
  %760 = vmatmul.mubr.f32.gmra.mxu0 %v642
  %v761 = vpop.f32.mrf.mxu0
  %v762 = vadd.f32 0.0, %v761
  %v763 = vpop.f32.mrf.mxu0
  %764 = vmatprep.mubr.f32.mxu0 0.0
  %765 = vmatmul.mubr.f32.gmra.mxu0 %v644
  %v766 = vpop.f32.mrf.mxu0
  %v767 = vadd.f32 0.0, %v766
  %v768 = vpop.f32.mrf.mxu0
  %769 = vmatprep.mubr.f32.mxu0 0.0
  %770 = vmatmul.mubr.f32.gmra.mxu0 %v646
  %v771 = vpop.f32.mrf.mxu0
  %v772 = vadd.f32 0.0, %v771
  %v773 = vpop.f32.mrf.mxu0
  %774 = vmatprep.mubr.f32.mxu0 0.0
  %775 = vmatmul.mubr.f32.gmra.mxu0 %v649
  %v776 = vpop.f32.mrf.mxu0
  %v777 = vadd.f32 0.0, %v776
  %v778 = vpop.f32.mrf.mxu0
  %779 = vmatprep.mubr.f32.mxu0 0.0
  %780 = vmatmul.mubr.f32.gmra.mxu0 %v651
  %v781 = vpop.f32.mrf.mxu0
  %v782 = vadd.f32 0.0, %v781
  %v783 = vpop.f32.mrf.mxu0
  %784 = vmatprep.mubr.f32.mxu0 0.0
  %785 = vmatmul.mubr.f32.gmra.mxu0 %v653
  %v786 = vpop.f32.mrf.mxu0
  %v787 = vadd.f32 0.0, %v786
  %v788 = vpop.f32.mrf.mxu0
  %789 = vmatprep.mubr.f32.mxu0 0.0
  %790 = vmatmul.mubr.f32.gmra.mxu0 %v655
  %v791 = vpop.f32.mrf.mxu0
  %v792 = vadd.f32 0.0, %v791
  %v793 = vpop.f32.mrf.mxu0
  %794 = vdwg.mxu0
  %v795 = vadd.f32 %v523, %v727
  %v796 = vadd.f32 %v528, %v732
  %v797 = vadd.f32 %v533, %v737
  %v798 = vadd.f32 %v538, %v742
  %v799 = vadd.f32 %v543, %v747
  %v800 = vadd.f32 %v548, %v752
  %v801 = vadd.f32 %v553, %v757
  %v802 = vadd.f32 %v558, %v762
  %v803 = vadd.f32 %v563, %v767
  %v804 = vadd.f32 %v568, %v772
  %v805 = vadd.f32 %v573, %v777
  %v806 = vadd.f32 %v578, %v782
  %v807 = vadd.f32 %v583, %v787
  %v808 = vadd.f32 %v588, %v792
  %vm809 = vcmask 1044480
  %v810 = vrot.slane %v61, 3
  %v811 = vrot.slane %v62, 3
  %v812 = vsel %vm809, %v810, %v811
  %v813 = vrot.slane %v63, 3
  %v814 = vsel %vm809, %v811, %v813
  %v815 = vrot.slane %v64, 3
  %v816 = vsel %vm809, %v813, %v815
  %vm818 = vcmask 1040384
  %v819 = vrot.slane %v95, 7
  %v820 = vrot.slane %v96, 7
  %v821 = vsel %vm818, %v819, %v820
  %v822 = vrot.slane %v97, 7
  %v823 = vsel %vm818, %v820, %v822
  %v824 = vrot.slane %v98, 7
  %v825 = vsel %vm818, %v822, %v824
  %v827 = vrot.slane %v129, 3
  %v828 = vrot.slane %v130, 3
  %v829 = vsel %vm809, %v827, %v828
  %v830 = vrot.slane %v131, 3
  %v831 = vsel %vm809, %v828, %v830
  %v832 = vrot.slane %v132, 3
  %v833 = vsel %vm809, %v830, %v832
  %v835 = vrot.slane %v163, 7
  %v836 = vrot.slane %v164, 7
  %v837 = vsel %vm818, %v835, %v836
  %v838 = vrot.slane %v165, 7
  %v839 = vsel %vm818, %v836, %v838
  %v840 = vrot.slane %v166, 7
  %v841 = vsel %vm818, %v838, %v840
  %v843 = vsel %vm187, %v815, %v819
  %v844 = vsel %vm187, %v832, %v835
  %v845 = vrot.slane %v180, 4
  %v846 = vsel %vm256, %v812, 0
  %v848 = vsel %vm256, %v814, 0
  %v850 = vsel %vm256, %v816, 0
  %v853 = vsel %vm256, %v843, 0
  %v855 = vsel %vm256, %v821, 0
  %v857 = vsel %vm256, %v823, 0
  %v859 = vsel %vm256, %v825, 0
  %v861 = vsel %vm256, %v829, 0
  %v863 = vsel %vm256, %v831, 0
  %v865 = vsel %vm256, %v833, 0
  %v868 = vsel %vm256, %v844, 0
  %v870 = vsel %vm256, %v837, 0
  %v872 = vsel %vm256, %v839, 0
  %v874 = vsel %vm256, %v841, 0
  %v876 = vsel %vm187, %v845, 0
  %878 = vmatprep.subr.mxu0 0.0
  %879 = vmatpush1.msra.mxu0 0.0
  %880 = vmatprep.subr.mxu0 0.0
  %881 = vmatpush1.msra.mxu0 0.0
  %882 = vmatprep.subr.mxu0 0.0
  %883 = vmatpush1.msra.mxu0 0.0
  %884 = vmatprep.subr.mxu0 0.0
  %885 = vmatpush1.msra.mxu0 0.0
  %886 = vmatprep.subr.mxu0 0.0
  %887 = vmatpush1.msra.mxu0 0.0
  %888 = vmatprep.subr.mxu0 0.0
  %889 = vmatpush1.msra.mxu0 0.0
  %890 = vmatprep.subr.mxu0 0.0
  %891 = vmatpush1.msra.mxu0 0.0
  %892 = vmatprep.subr.mxu0 0.0
  %893 = vmatpush1.msra.mxu0 0.0
  %894 = vmatprep.subr.mxu0 0.0
  %895 = vmatpush1.msra.mxu0 0.0
  %896 = vmatprep.subr.mxu0 0.0
  %897 = vmatpush1.msra.mxu0 0.0
  %898 = vmatprep.subr.mxu0 0.0
  %899 = vmatpush1.msra.mxu0 0.0
  %900 = vmatprep.subr.mxu0 0.0
  %901 = vmatpush1.msra.mxu0 0.0
  %902 = vmatprep.subr.mxu0 0.0
  %903 = vmatpush1.msra.mxu0 0.0
  %904 = vmatprep.subr.mxu0 0.0
  %905 = vmatpush1.msra.mxu0 0.0
  %906 = vmatprep.subr.mxu0 0.0
  %907 = vmatpush1.msra.mxu0 0.0
  %908 = vmatprep.subr.mxu0 0.0
  %909 = vmatpush1.msra.mxu0 %v876
  %910 = vmatprep.subr.mxu0 0.0
  %911 = vmatpush2.msra.mxu0 0.0
  %912 = vmatprep.subr.mxu0 0.0
  %913 = vmatpush2.msra.mxu0 0.0
  %914 = vmatprep.subr.mxu0 0.0
  %915 = vmatpush2.msra.mxu0 0.0
  %916 = vmatprep.subr.mxu0 0.0
  %917 = vmatpush2.msra.mxu0 0.0
  %918 = vmatprep.subr.mxu0 0.0
  %919 = vmatpush2.msra.mxu0 0.0
  %920 = vmatprep.subr.mxu0 0.0
  %921 = vmatpush2.msra.mxu0 0.0
  %922 = vmatprep.subr.mxu0 0.0
  %923 = vmatpush2.msra.mxu0 0.0
  %924 = vmatprep.subr.mxu0 0.0
  %925 = vmatpush2.msra.mxu0 0.0
  %926 = vmatprep.subr.mxu0 0.0
  %927 = vmatpush2.msra.mxu0 0.0
  %928 = vmatprep.subr.mxu0 0.0
  %929 = vmatpush2.msra.mxu0 0.0
  %930 = vmatprep.subr.mxu0 0.0
  %931 = vmatpush2.msra.mxu0 0.0
  %932 = vmatprep.subr.mxu0 0.0
  %933 = vmatpush2.msra.mxu0 0.0
  %934 = vmatprep.subr.mxu0 0.0
  %935 = vmatpush2.msra.mxu0 0.0
  %936 = vmatprep.subr.mxu0 0.0
  %937 = vmatpush2.msra.mxu0 0.0
  %938 = vmatprep.subr.mxu0 0.0
  %939 = vmatpush2.msra.mxu0 0.0
  %940 = vmatprep.subr.mxu0 0.0
  %941 = vmatpush2.msra.mxu0 0.0
  %942 = vmatprep.mubr.f32.mxu0 0.0
  %943 = vmatmul.mubr.f32.gmra.mxu0 %v846
  %v944 = vpop.f32.mrf.mxu0
  %v945 = vadd.f32 0.0, %v944
  %v946 = vpop.f32.mrf.mxu0
  %947 = vmatprep.mubr.f32.mxu0 0.0
  %948 = vmatmul.mubr.f32.gmra.mxu0 %v848
  %v949 = vpop.f32.mrf.mxu0
  %v950 = vadd.f32 0.0, %v949
  %v951 = vpop.f32.mrf.mxu0
  %952 = vmatprep.mubr.f32.mxu0 0.0
  %953 = vmatmul.mubr.f32.gmra.mxu0 %v850
  %v954 = vpop.f32.mrf.mxu0
  %v955 = vadd.f32 0.0, %v954
  %v956 = vpop.f32.mrf.mxu0
  %957 = vmatprep.mubr.f32.mxu0 0.0
  %958 = vmatmul.mubr.f32.gmra.mxu0 %v853
  %v959 = vpop.f32.mrf.mxu0
  %v960 = vadd.f32 0.0, %v959
  %v961 = vpop.f32.mrf.mxu0
  %962 = vmatprep.mubr.f32.mxu0 0.0
  %963 = vmatmul.mubr.f32.gmra.mxu0 %v855
  %v964 = vpop.f32.mrf.mxu0
  %v965 = vadd.f32 0.0, %v964
  %v966 = vpop.f32.mrf.mxu0
  %967 = vmatprep.mubr.f32.mxu0 0.0
  %968 = vmatmul.mubr.f32.gmra.mxu0 %v857
  %v969 = vpop.f32.mrf.mxu0
  %v970 = vadd.f32 0.0, %v969
  %v971 = vpop.f32.mrf.mxu0
  %972 = vmatprep.mubr.f32.mxu0 0.0
  %973 = vmatmul.mubr.f32.gmra.mxu0 %v859
  %v974 = vpop.f32.mrf.mxu0
  %v975 = vadd.f32 0.0, %v974
  %v976 = vpop.f32.mrf.mxu0
  %977 = vmatprep.mubr.f32.mxu0 0.0
  %978 = vmatmul.mubr.f32.gmra.mxu0 %v861
  %v979 = vpop.f32.mrf.mxu0
  %v980 = vadd.f32 0.0, %v979
  %v981 = vpop.f32.mrf.mxu0
  %982 = vmatprep.mubr.f32.mxu0 0.0
  %983 = vmatmul.mubr.f32.gmra.mxu0 %v863
  %v984 = vpop.f32.mrf.mxu0
  %v985 = vadd.f32 0.0, %v984
  %v986 = vpop.f32.mrf.mxu0
  %987 = vmatprep.mubr.f32.mxu0 0.0
  %988 = vmatmul.mubr.f32.gmra.mxu0 %v865
  %v989 = vpop.f32.mrf.mxu0
  %v990 = vadd.f32 0.0, %v989
  %v991 = vpop.f32.mrf.mxu0
  %992 = vmatprep.mubr.f32.mxu0 0.0
  %993 = vmatmul.mubr.f32.gmra.mxu0 %v868
  %v994 = vpop.f32.mrf.mxu0
  %v995 = vadd.f32 0.0, %v994
  %v996 = vpop.f32.mrf.mxu0
  %997 = vmatprep.mubr.f32.mxu0 0.0
  %998 = vmatmul.mubr.f32.gmra.mxu0 %v870
  %v999 = vpop.f32.mrf.mxu0
  %v1000 = vadd.f32 0.0, %v999
  %v1001 = vpop.f32.mrf.mxu0
  %1002 = vmatprep.mubr.f32.mxu0 0.0
  %1003 = vmatmul.mubr.f32.gmra.mxu0 %v872
  %v1004 = vpop.f32.mrf.mxu0
  %v1005 = vadd.f32 0.0, %v1004
  %v1006 = vpop.f32.mrf.mxu0
  %1007 = vmatprep.mubr.f32.mxu0 0.0
  %1008 = vmatmul.mubr.f32.gmra.mxu0 %v874
  %v1009 = vpop.f32.mrf.mxu0
  %v1010 = vadd.f32 0.0, %v1009
  %v1011 = vpop.f32.mrf.mxu0
  %1012 = vdwg.mxu0
  %v1013 = vadd.f32 %v795, %v945
  %v1014 = vadd.f32 %v796, %v950
  %v1015 = vadd.f32 %v797, %v955
  %v1016 = vadd.f32 %v798, %v960
  %v1017 = vadd.f32 %v799, %v965
  %v1018 = vadd.f32 %v800, %v970
  %v1019 = vadd.f32 %v801, %v975
  %v1020 = vadd.f32 %v802, %v980
  %v1021 = vadd.f32 %v803, %v985
  %v1022 = vadd.f32 %v804, %v990
  %v1023 = vadd.f32 %v805, %v995
  %v1024 = vadd.f32 %v806, %v1000
  %v1025 = vadd.f32 %v807, %v1005
  %v1026 = vadd.f32 %v808, %v1010
  %v1027 = vrot.slane %v61, 4
  %v1028 = vrot.slane %v62, 4
  %v1029 = vsel %vm187, %v1027, %v1028
  %v1030 = vrot.slane %v63, 4
  %v1031 = vsel %vm187, %v1028, %v1030
  %v1032 = vrot.slane %v64, 4
  %v1033 = vsel %vm187, %v1030, %v1032
  %v1035 = vrot.slane %v129, 4
  %v1036 = vrot.slane %v130, 4
  %v1037 = vsel %vm187, %v1035, %v1036
  %v1038 = vrot.slane %v131, 4
  %v1039 = vsel %vm187, %v1036, %v1038
  %v1040 = vrot.slane %v132, 4
  %v1041 = vsel %vm187, %v1038, %v1040
  %v1043 = vsel %vm187, %v1032, %v95
  %v1044 = vsel %vm187, %v1040, %v163
  %v1045 = vsel %vm256, %v1029, 0
  %v1047 = vsel %vm256, %v1031, 0
  %v1049 = vsel %vm256, %v1033, 0
  %v1052 = vsel %vm256, %v1043, 0
  %v1054 = vsel %vm256, %v96, 0
  %v1056 = vsel %vm256, %v97, 0
  %v1058 = vsel %vm256, %v98, 0
  %v1060 = vsel %vm256, %v1037, 0
  %v1062 = vsel %vm256, %v1039, 0
  %v1064 = vsel %vm256, %v1041, 0
  %v1067 = vsel %vm256, %v1044, 0
  %v1069 = vsel %vm256, %v164, 0
  %v1071 = vsel %vm256, %v165, 0
  %v1073 = vsel %vm256, %v166, 0
  %v1076 = vsel %vm187, %v181, 0
  %1078 = vmatprep.subr.mxu0 0.0
  %1079 = vmatpush1.msra.mxu0 0.0
  %1080 = vmatprep.subr.mxu0 0.0
  %1081 = vmatpush1.msra.mxu0 0.0
  %1082 = vmatprep.subr.mxu0 0.0
  %1083 = vmatpush1.msra.mxu0 0.0
  %1084 = vmatprep.subr.mxu0 0.0
  %1085 = vmatpush1.msra.mxu0 0.0
  %1086 = vmatprep.subr.mxu0 0.0
  %1087 = vmatpush1.msra.mxu0 0.0
  %1088 = vmatprep.subr.mxu0 0.0
  %1089 = vmatpush1.msra.mxu0 0.0
  %1090 = vmatprep.subr.mxu0 0.0
  %1091 = vmatpush1.msra.mxu0 0.0
  %1092 = vmatprep.subr.mxu0 0.0
  %1093 = vmatpush1.msra.mxu0 0.0
  %1094 = vmatprep.subr.mxu0 0.0
  %1095 = vmatpush1.msra.mxu0 0.0
  %1096 = vmatprep.subr.mxu0 0.0
  %1097 = vmatpush1.msra.mxu0 0.0
  %1098 = vmatprep.subr.mxu0 0.0
  %1099 = vmatpush1.msra.mxu0 0.0
  %1100 = vmatprep.subr.mxu0 0.0
  %1101 = vmatpush1.msra.mxu0 0.0
  %1102 = vmatprep.subr.mxu0 0.0
  %1103 = vmatpush1.msra.mxu0 0.0
  %1104 = vmatprep.subr.mxu0 0.0
  %1105 = vmatpush1.msra.mxu0 0.0
  %1106 = vmatprep.subr.mxu0 0.0
  %1107 = vmatpush1.msra.mxu0 0.0
  %1108 = vmatprep.subr.mxu0 0.0
  %1109 = vmatpush1.msra.mxu0 %v1076
  %1110 = vmatprep.subr.mxu0 0.0
  %1111 = vmatpush2.msra.mxu0 0.0
  %1112 = vmatprep.subr.mxu0 0.0
  %1113 = vmatpush2.msra.mxu0 0.0
  %1114 = vmatprep.subr.mxu0 0.0
  %1115 = vmatpush2.msra.mxu0 0.0
  %1116 = vmatprep.subr.mxu0 0.0
  %1117 = vmatpush2.msra.mxu0 0.0
  %1118 = vmatprep.subr.mxu0 0.0
  %1119 = vmatpush2.msra.mxu0 0.0
  %1120 = vmatprep.subr.mxu0 0.0
  %1121 = vmatpush2.msra.mxu0 0.0
  %1122 = vmatprep.subr.mxu0 0.0
  %1123 = vmatpush2.msra.mxu0 0.0
  %1124 = vmatprep.subr.mxu0 0.0
  %1125 = vmatpush2.msra.mxu0 0.0
  %1126 = vmatprep.subr.mxu0 0.0
  %1127 = vmatpush2.msra.mxu0 0.0
  %1128 = vmatprep.subr.mxu0 0.0
  %1129 = vmatpush2.msra.mxu0 0.0
  %1130 = vmatprep.subr.mxu0 0.0
  %1131 = vmatpush2.msra.mxu0 0.0
  %1132 = vmatprep.subr.mxu0 0.0
  %1133 = vmatpush2.msra.mxu0 0.0
  %1134 = vmatprep.subr.mxu0 0.0
  %1135 = vmatpush2.msra.mxu0 0.0
  %1136 = vmatprep.subr.mxu0 0.0
  %1137 = vmatpush2.msra.mxu0 0.0
  %1138 = vmatprep.subr.mxu0 0.0
  %1139 = vmatpush2.msra.mxu0 0.0
  %1140 = vmatprep.subr.mxu0 0.0
  %1141 = vmatpush2.msra.mxu0 0.0
  %1142 = vmatprep.mubr.f32.mxu0 0.0
  %1143 = vmatmul.mubr.f32.gmra.mxu0 %v1045
  %v1144 = vpop.f32.mrf.mxu0
  %v1145 = vadd.f32 0.0, %v1144
  %v1146 = vpop.f32.mrf.mxu0
  %1147 = vmatprep.mubr.f32.mxu0 0.0
  %1148 = vmatmul.mubr.f32.gmra.mxu0 %v1047
  %v1149 = vpop.f32.mrf.mxu0
  %v1150 = vadd.f32 0.0, %v1149
  %v1151 = vpop.f32.mrf.mxu0
  %1152 = vmatprep.mubr.f32.mxu0 0.0
  %1153 = vmatmul.mubr.f32.gmra.mxu0 %v1049
  %v1154 = vpop.f32.mrf.mxu0
  %v1155 = vadd.f32 0.0, %v1154
  %v1156 = vpop.f32.mrf.mxu0
  %1157 = vmatprep.mubr.f32.mxu0 0.0
  %1158 = vmatmul.mubr.f32.gmra.mxu0 %v1052
  %v1159 = vpop.f32.mrf.mxu0
  %v1160 = vadd.f32 0.0, %v1159
  %v1161 = vpop.f32.mrf.mxu0
  %1162 = vmatprep.mubr.f32.mxu0 0.0
  %1163 = vmatmul.mubr.f32.gmra.mxu0 %v1054
  %v1164 = vpop.f32.mrf.mxu0
  %v1165 = vadd.f32 0.0, %v1164
  %v1166 = vpop.f32.mrf.mxu0
  %1167 = vmatprep.mubr.f32.mxu0 0.0
  %1168 = vmatmul.mubr.f32.gmra.mxu0 %v1056
  %v1169 = vpop.f32.mrf.mxu0
  %v1170 = vadd.f32 0.0, %v1169
  %v1171 = vpop.f32.mrf.mxu0
  %1172 = vmatprep.mubr.f32.mxu0 0.0
  %1173 = vmatmul.mubr.f32.gmra.mxu0 %v1058
  %v1174 = vpop.f32.mrf.mxu0
  %v1175 = vadd.f32 0.0, %v1174
  %v1176 = vpop.f32.mrf.mxu0
  %1177 = vmatprep.mubr.f32.mxu0 0.0
  %1178 = vmatmul.mubr.f32.gmra.mxu0 %v1060
  %v1179 = vpop.f32.mrf.mxu0
  %v1180 = vadd.f32 0.0, %v1179
  %v1181 = vpop.f32.mrf.mxu0
  %1182 = vmatprep.mubr.f32.mxu0 0.0
  %1183 = vmatmul.mubr.f32.gmra.mxu0 %v1062
  %v1184 = vpop.f32.mrf.mxu0
  %v1185 = vadd.f32 0.0, %v1184
  %v1186 = vpop.f32.mrf.mxu0
  %1187 = vmatprep.mubr.f32.mxu0 0.0
  %1188 = vmatmul.mubr.f32.gmra.mxu0 %v1064
  %v1189 = vpop.f32.mrf.mxu0
  %v1190 = vadd.f32 0.0, %v1189
  %v1191 = vpop.f32.mrf.mxu0
  %1192 = vmatprep.mubr.f32.mxu0 0.0
  %1193 = vmatmul.mubr.f32.gmra.mxu0 %v1067
  %v1194 = vpop.f32.mrf.mxu0
  %v1195 = vadd.f32 0.0, %v1194
  %v1196 = vpop.f32.mrf.mxu0
  %1197 = vmatprep.mubr.f32.mxu0 0.0
  %1198 = vmatmul.mubr.f32.gmra.mxu0 %v1069
  %v1199 = vpop.f32.mrf.mxu0
  %v1200 = vadd.f32 0.0, %v1199
  %v1201 = vpop.f32.mrf.mxu0
  %1202 = vmatprep.mubr.f32.mxu0 0.0
  %1203 = vmatmul.mubr.f32.gmra.mxu0 %v1071
  %v1204 = vpop.f32.mrf.mxu0
  %v1205 = vadd.f32 0.0, %v1204
  %v1206 = vpop.f32.mrf.mxu0
  %1207 = vmatprep.mubr.f32.mxu0 0.0
  %1208 = vmatmul.mubr.f32.gmra.mxu0 %v1073
  %v1209 = vpop.f32.mrf.mxu0
  %v1210 = vadd.f32 0.0, %v1209
  %v1211 = vpop.f32.mrf.mxu0
  %1212 = vdwg.mxu0
  %v1213 = vadd.f32 %v1013, %v1145
  %v1214 = vadd.f32 %v1014, %v1150
  %v1215 = vadd.f32 %v1015, %v1155
  %v1216 = vadd.f32 %v1016, %v1160
  %v1217 = vadd.f32 %v1017, %v1165
  %v1218 = vadd.f32 %v1018, %v1170
  %v1219 = vadd.f32 %v1019, %v1175
  %v1220 = vadd.f32 %v1020, %v1180
  %v1221 = vadd.f32 %v1021, %v1185
  %v1222 = vadd.f32 %v1022, %v1190
  %v1223 = vadd.f32 %v1023, %v1195
  %v1224 = vadd.f32 %v1024, %v1200
  %v1225 = vadd.f32 %v1025, %v1205
  %v1226 = vadd.f32 %v1026, %v1210
  %v1228 = vlaneseq
  %v1229 = vshrl.u32 %v1228, 7
  %v1230 = vsub.s32 0, %v1229
  %v1231 = vrot.slane %v182, %v1230
  %v1233 = vadd.f32 %v1213, %v1231
  %v1234 = vadd.f32 %v1214, %v1231
  %v1235 = vadd.f32 %v1215, %v1231
  %v1236 = vadd.f32 %v1216, %v1231
  %v1237 = vadd.f32 %v1217, %v1231
  %v1238 = vadd.f32 %v1218, %v1231
  %v1239 = vadd.f32 %v1219, %v1231
  %v1240 = vadd.f32 %v1220, %v1231
  %v1241 = vadd.f32 %v1221, %v1231
  %v1242 = vadd.f32 %v1222, %v1231
  %v1243 = vadd.f32 %v1223, %v1231
  %v1244 = vadd.f32 %v1224, %v1231
  %v1245 = vadd.f32 %v1225, %v1231
  %v1246 = vadd.f32 %v1226, %v1231
  %v1247 = vld [vmem:[%s3] sm:$0x1]
  %v1248 = vld [vmem:[%s4] sm:$0x1]
  %vm1249 = vcmask 64512
  %v1250 = vsel %vm1249, %v1233, 0.0
  %v1251 = vsel %vm1249, %v1234, 0.0
  %v1252 = vadd.f32 %v1250, %v1251
  %v1253 = vsel %vm1249, %v1235, 0.0
  %v1254 = vadd.f32 %v1252, %v1253
  %v1255 = vsel %vm1249, %v1236, 0.0
  %v1256 = vadd.f32 %v1254, %v1255
  %v1257 = vsel %vm1249, %v1237, 0.0
  %v1258 = vadd.f32 %v1256, %v1257
  %v1259 = vsel %vm1249, %v1238, 0.0
  %v1260 = vadd.f32 %v1258, %v1259
  %v1261 = vsel %vm1249, %v1239, 0.0
  %v1262 = vadd.f32 %v1260, %v1261
  %v1263 = vsel %vm1249, %v1240, 0.0
  %v1264 = vadd.f32 %v1262, %v1263
  %v1265 = vsel %vm1249, %v1241, 0.0
  %v1266 = vadd.f32 %v1264, %v1265
  %v1267 = vsel %vm1249, %v1242, 0.0
  %v1268 = vadd.f32 %v1266, %v1267
  %v1269 = vsel %vm1249, %v1243, 0.0
  %v1270 = vadd.f32 %v1268, %v1269
  %v1271 = vsel %vm1249, %v1244, 0.0
  %v1272 = vadd.f32 %v1270, %v1271
  %v1273 = vsel %vm1249, %v1245, 0.0
  %v1274 = vadd.f32 %v1272, %v1273
  %v1275 = vsel %vm1249, %v1246, 0.0
  %v1276 = vadd.f32 %v1274, %v1275
  %v1277 = vrot.slane %v1276, 4
  %v1278 = vadd.f32 %v1276, %v1277
  %v1279 = vrot.slane %v1278, 2
  %v1280 = vadd.f32 %v1278, %v1279
  %v1281 = vrot.slane %v1280, 1
  %v1282 = vadd.f32 %v1280, %v1281
  %v1283 = vrcp.pop 112.0
  %v1284 = vmul.f32 %v1282, %v1283
  %v1285 = vsub.f32 %v1233, %v1284
  %v1286 = vsub.f32 %v1234, %v1284
  %v1287 = vsub.f32 %v1235, %v1284
  %v1288 = vsub.f32 %v1236, %v1284
  %v1289 = vsub.f32 %v1237, %v1284
  %v1290 = vsub.f32 %v1238, %v1284
  %v1291 = vsub.f32 %v1239, %v1284
  %v1292 = vsub.f32 %v1240, %v1284
  %v1293 = vsub.f32 %v1241, %v1284
  %v1294 = vsub.f32 %v1242, %v1284
  %v1295 = vsub.f32 %v1243, %v1284
  %v1296 = vsub.f32 %v1244, %v1284
  %v1297 = vsub.f32 %v1245, %v1284
  %v1298 = vsub.f32 %v1246, %v1284
  %v1299 = vmul.f32 %v1285, %v1285
  %v1300 = vmul.f32 %v1286, %v1286
  %v1301 = vmul.f32 %v1287, %v1287
  %v1302 = vmul.f32 %v1288, %v1288
  %v1303 = vmul.f32 %v1289, %v1289
  %v1304 = vmul.f32 %v1290, %v1290
  %v1305 = vmul.f32 %v1291, %v1291
  %v1306 = vmul.f32 %v1292, %v1292
  %v1307 = vmul.f32 %v1293, %v1293
  %v1308 = vmul.f32 %v1294, %v1294
  %v1309 = vmul.f32 %v1295, %v1295
  %v1310 = vmul.f32 %v1296, %v1296
  %v1311 = vmul.f32 %v1297, %v1297
  %v1312 = vmul.f32 %v1298, %v1298
  %v1313 = vsel %vm1249, %v1299, 0.0
  %v1314 = vsel %vm1249, %v1300, 0.0
  %v1315 = vadd.f32 %v1313, %v1314
  %v1316 = vsel %vm1249, %v1301, 0.0
  %v1317 = vadd.f32 %v1315, %v1316
  %v1318 = vsel %vm1249, %v1302, 0.0
  %v1319 = vadd.f32 %v1317, %v1318
  %v1320 = vsel %vm1249, %v1303, 0.0
  %v1321 = vadd.f32 %v1319, %v1320
  %v1322 = vsel %vm1249, %v1304, 0.0
  %v1323 = vadd.f32 %v1321, %v1322
  %v1324 = vsel %vm1249, %v1305, 0.0
  %v1325 = vadd.f32 %v1323, %v1324
  %v1326 = vsel %vm1249, %v1306, 0.0
  %v1327 = vadd.f32 %v1325, %v1326
  %v1328 = vsel %vm1249, %v1307, 0.0
  %v1329 = vadd.f32 %v1327, %v1328
  %v1330 = vsel %vm1249, %v1308, 0.0
  %v1331 = vadd.f32 %v1329, %v1330
  %v1332 = vsel %vm1249, %v1309, 0.0
  %v1333 = vadd.f32 %v1331, %v1332
  %v1334 = vsel %vm1249, %v1310, 0.0
  %v1335 = vadd.f32 %v1333, %v1334
  %v1336 = vsel %vm1249, %v1311, 0.0
  %v1337 = vadd.f32 %v1335, %v1336
  %v1338 = vsel %vm1249, %v1312, 0.0
  %v1339 = vadd.f32 %v1337, %v1338
  %v1340 = vrot.slane %v1339, 4
  %v1341 = vadd.f32 %v1339, %v1340
  %v1342 = vrot.slane %v1341, 2
  %v1343 = vadd.f32 %v1341, %v1342
  %v1344 = vrot.slane %v1343, 1
  %v1345 = vadd.f32 %v1343, %v1344
  %v1346 = vmul.f32 %v1345, %v1283
  %v1347 = vadd.f32 %v1346, 1e-05
  %v1348 = vrsqrt.pop %v1347
  %v1349 = vmul.f32 %v1285, %v1348
  %v1350 = vmul.f32 %v1286, %v1348
  %v1351 = vmul.f32 %v1287, %v1348
  %v1352 = vmul.f32 %v1288, %v1348
  %v1353 = vmul.f32 %v1289, %v1348
  %v1354 = vmul.f32 %v1290, %v1348
  %v1355 = vmul.f32 %v1291, %v1348
  %v1356 = vmul.f32 %v1292, %v1348
  %v1357 = vmul.f32 %v1293, %v1348
  %v1358 = vmul.f32 %v1294, %v1348
  %v1359 = vmul.f32 %v1295, %v1348
  %v1360 = vmul.f32 %v1296, %v1348
  %v1361 = vmul.f32 %v1297, %v1348
  %v1362 = vmul.f32 %v1298, %v1348
  %v1364 = vlaneseq
  %v1365 = vshrl.u32 %v1364, 7
  %v1366 = vsub.s32 0, %v1365
  %v1367 = vrot.slane %v1247, %v1366
  %v1369 = vmul.f32 %v1349, %v1367
  %v1370 = vmul.f32 %v1350, %v1367
  %v1371 = vmul.f32 %v1351, %v1367
  %v1372 = vmul.f32 %v1352, %v1367
  %v1373 = vmul.f32 %v1353, %v1367
  %v1374 = vmul.f32 %v1354, %v1367
  %v1375 = vmul.f32 %v1355, %v1367
  %v1376 = vmul.f32 %v1356, %v1367
  %v1377 = vmul.f32 %v1357, %v1367
  %v1378 = vmul.f32 %v1358, %v1367
  %v1379 = vmul.f32 %v1359, %v1367
  %v1380 = vmul.f32 %v1360, %v1367
  %v1381 = vmul.f32 %v1361, %v1367
  %v1382 = vmul.f32 %v1362, %v1367
  %v1384 = vlaneseq
  %v1385 = vshrl.u32 %v1384, 7
  %v1386 = vsub.s32 0, %v1385
  %v1387 = vrot.slane %v1248, %v1386
  %v1389 = vadd.f32 %v1369, %v1387
  %v1390 = vadd.f32 %v1370, %v1387
  %v1391 = vadd.f32 %v1371, %v1387
  %v1392 = vadd.f32 %v1372, %v1387
  %v1393 = vadd.f32 %v1373, %v1387
  %v1394 = vadd.f32 %v1374, %v1387
  %v1395 = vadd.f32 %v1375, %v1387
  %v1396 = vadd.f32 %v1376, %v1387
  %v1397 = vadd.f32 %v1377, %v1387
  %v1398 = vadd.f32 %v1378, %v1387
  %v1399 = vadd.f32 %v1379, %v1387
  %v1400 = vadd.f32 %v1380, %v1387
  %v1401 = vadd.f32 %v1381, %v1387
  %v1402 = vadd.f32 %v1382, %v1387
  %v1403 = vmax.f32 %v1389, 0.0
  %v1404 = vmax.f32 %v1390, 0.0
  %v1405 = vmax.f32 %v1391, 0.0
  %v1406 = vmax.f32 %v1392, 0.0
  %v1407 = vmax.f32 %v1393, 0.0
  %v1408 = vmax.f32 %v1394, 0.0
  %v1409 = vmax.f32 %v1395, 0.0
  %v1410 = vmax.f32 %v1396, 0.0
  %v1411 = vmax.f32 %v1397, 0.0
  %v1412 = vmax.f32 %v1398, 0.0
  %v1413 = vmax.f32 %v1399, 0.0
  %v1414 = vmax.f32 %v1400, 0.0
  %v1415 = vmax.f32 %v1401, 0.0
  %v1416 = vmax.f32 %v1402, 0.0
  %v1417 = vld [vmem:[%s5] sm:$0xff]
  %v1418 = vld [vmem:[%s5 + $0x8] sm:$0xff]
  %v1419 = vld [vmem:[%s5 + $0x10] sm:$0xff]
  %v1420 = vld [vmem:[%s6] sm:$0x1]
  %v1425 = vrot.slane %v1406, 2
  %v1426 = vrot.slane %v1407, 2
  %v1427 = vsel %vm591, %v1425, %v1426
  %v1428 = vrot.slane %v1408, 2
  %v1429 = vsel %vm591, %v1426, %v1428
  %v1430 = vrot.slane %v1409, 2
  %v1431 = vsel %vm591, %v1428, %v1430
  %v1438 = vrot.slane %v1410, 4
  %v1439 = vrot.slane %v1411, 4
  %v1440 = vsel %vm187, %v1438, %v1439
  %v1441 = vrot.slane %v1412, 4
  %v1442 = vsel %vm187, %v1439, %v1441
  %v1443 = vrot.slane %v1413, 4
  %v1444 = vsel %vm187, %v1441, %v1443
  %v1450 = vrot.slane %v1413, 6
  %v1451 = vrot.slane %v1414, 6
  %v1452 = vsel %vm600, %v1450, %v1451
  %v1453 = vrot.slane %v1415, 6
  %v1454 = vsel %vm600, %v1451, %v1453
  %v1455 = vrot.slane %v1416, 6
  %v1456 = vsel %vm600, %v1453, %v1455
  %v1458 = vsel %vm600, %v1406, %v1427
  %v1459 = vsel %vm187, %v1430, %v1438
  %v1460 = vsel %vm591, %v1444, %v1450
  %v1464 = vrot.slane %v1403, 1
  %v1465 = vrot.slane %v1404, 1
  %v1466 = vsel %vm214, %v1464, %v1465
  %v1467 = vrot.slane %v1405, 1
  %v1468 = vsel %vm214, %v1465, %v1467
  %v1469 = vrot.slane %v1406, 1
  %v1470 = vsel %vm214, %v1467, %v1469
  %v1472 = vrot.slane %v1406, 3
  %v1473 = vrot.slane %v1407, 3
  %v1474 = vsel %vm809, %v1472, %v1473
  %v1475 = vrot.slane %v1408, 3
  %v1476 = vsel %vm809, %v1473, %v1475
  %v1477 = vrot.slane %v1409, 3
  %v1478 = vsel %vm809, %v1475, %v1477
  %v1481 = vrot.slane %v1410, 5
  %v1482 = vrot.slane %v1411, 5
  %v1483 = vsel %vm223, %v1481, %v1482
  %v1484 = vrot.slane %v1412, 5
  %v1485 = vsel %vm223, %v1482, %v1484
  %v1486 = vrot.slane %v1413, 5
  %v1487 = vsel %vm223, %v1484, %v1486
  %v1490 = vrot.slane %v1413, 7
  %v1491 = vrot.slane %v1414, 7
  %v1492 = vsel %vm818, %v1490, %v1491
  %v1493 = vrot.slane %v1415, 7
  %v1494 = vsel %vm818, %v1491, %v1493
  %v1495 = vrot.slane %v1416, 7
  %v1496 = vsel %vm818, %v1493, %v1495
  %v1498 = vsel %vm600, %v1469, %v1474
  %v1499 = vsel %vm187, %v1477, %v1481
  %v1500 = vsel %vm591, %v1487, %v1490
  %v1501 = vsel %vm1249, %v1466, 0
  %v1503 = vsel %vm1249, %v1468, 0
  %v1505 = vsel %vm1249, %v1470, 0
  %v1508 = vsel %vm1249, %v1498, 0
  %v1510 = vsel %vm1249, %v1476, 0
  %v1512 = vsel %vm1249, %v1478, 0
  %v1515 = vsel %vm1249, %v1499, 0
  %v1517 = vsel %vm1249, %v1483, 0
  %v1519 = vsel %vm1249, %v1485, 0
  %v1522 = vsel %vm1249, %v1500, 0
  %v1524 = vsel %vm1249, %v1492, 0
  %v1526 = vsel %vm1249, %v1494, 0
  %v1528 = vsel %vm1249, %v1496, 0
  %1530 = vmatprep.subr.mxu0 0.0
  %1531 = vmatpush1.msra.mxu0 0.0
  %1532 = vmatprep.subr.mxu0 0.0
  %1533 = vmatpush1.msra.mxu0 0.0
  %1534 = vmatprep.subr.mxu0 0.0
  %1535 = vmatpush1.msra.mxu0 0.0
  %1536 = vmatprep.subr.mxu0 0.0
  %1537 = vmatpush1.msra.mxu0 0.0
  %1538 = vmatprep.subr.mxu0 0.0
  %1539 = vmatpush1.msra.mxu0 0.0
  %1540 = vmatprep.subr.mxu0 0.0
  %1541 = vmatpush1.msra.mxu0 0.0
  %1542 = vmatprep.subr.mxu0 0.0
  %1543 = vmatpush1.msra.mxu0 0.0
  %1544 = vmatprep.subr.mxu0 0.0
  %1545 = vmatpush1.msra.mxu0 0.0
  %1546 = vmatprep.subr.mxu0 0.0
  %1547 = vmatpush1.msra.mxu0 0.0
  %1548 = vmatprep.subr.mxu0 0.0
  %1549 = vmatpush1.msra.mxu0 0.0
  %1550 = vmatprep.subr.mxu0 0.0
  %1551 = vmatpush1.msra.mxu0 0.0
  %1552 = vmatprep.subr.mxu0 0.0
  %1553 = vmatpush1.msra.mxu0 0.0
  %1554 = vmatprep.subr.mxu0 0.0
  %1555 = vmatpush1.msra.mxu0 0.0
  %1556 = vmatprep.subr.mxu0 0.0
  %1557 = vmatpush1.msra.mxu0 0.0
  %1558 = vmatprep.subr.mxu0 0.0
  %1559 = vmatpush1.msra.mxu0 0.0
  %1560 = vmatprep.subr.mxu0 0.0
  %1561 = vmatpush1.msra.mxu0 %v1418
  %1562 = vmatprep.subr.mxu0 0.0
  %1563 = vmatpush2.msra.mxu0 0.0
  %1564 = vmatprep.subr.mxu0 0.0
  %1565 = vmatpush2.msra.mxu0 0.0
  %1566 = vmatprep.subr.mxu0 0.0
  %1567 = vmatpush2.msra.mxu0 0.0
  %1568 = vmatprep.subr.mxu0 0.0
  %1569 = vmatpush2.msra.mxu0 0.0
  %1570 = vmatprep.subr.mxu0 0.0
  %1571 = vmatpush2.msra.mxu0 0.0
  %1572 = vmatprep.subr.mxu0 0.0
  %1573 = vmatpush2.msra.mxu0 0.0
  %1574 = vmatprep.subr.mxu0 0.0
  %1575 = vmatpush2.msra.mxu0 0.0
  %1576 = vmatprep.subr.mxu0 0.0
  %1577 = vmatpush2.msra.mxu0 0.0
  %1578 = vmatprep.subr.mxu0 0.0
  %1579 = vmatpush2.msra.mxu0 0.0
  %1580 = vmatprep.subr.mxu0 0.0
  %1581 = vmatpush2.msra.mxu0 0.0
  %1582 = vmatprep.subr.mxu0 0.0
  %1583 = vmatpush2.msra.mxu0 0.0
  %1584 = vmatprep.subr.mxu0 0.0
  %1585 = vmatpush2.msra.mxu0 0.0
  %1586 = vmatprep.subr.mxu0 0.0
  %1587 = vmatpush2.msra.mxu0 0.0
  %1588 = vmatprep.subr.mxu0 0.0
  %1589 = vmatpush2.msra.mxu0 0.0
  %1590 = vmatprep.subr.mxu0 0.0
  %1591 = vmatpush2.msra.mxu0 0.0
  %1592 = vmatprep.subr.mxu0 0.0
  %1593 = vmatpush2.msra.mxu0 0.0
  %1594 = vmatprep.mubr.f32.mxu0 0.0
  %1595 = vmatmul.mubr.f32.gmra.mxu0 %v1501
  %v1596 = vpop.f32.mrf.mxu0
  %v1597 = vadd.f32 0.0, %v1596
  %v1598 = vpop.f32.mrf.mxu0
  %1599 = vmatprep.mubr.f32.mxu0 0.0
  %1600 = vmatmul.mubr.f32.gmra.mxu0 %v1503
  %v1601 = vpop.f32.mrf.mxu0
  %v1602 = vadd.f32 0.0, %v1601
  %v1603 = vpop.f32.mrf.mxu0
  %1604 = vmatprep.mubr.f32.mxu0 0.0
  %1605 = vmatmul.mubr.f32.gmra.mxu0 %v1505
  %v1606 = vpop.f32.mrf.mxu0
  %v1607 = vadd.f32 0.0, %v1606
  %v1608 = vpop.f32.mrf.mxu0
  %1609 = vmatprep.mubr.f32.mxu0 0.0
  %1610 = vmatmul.mubr.f32.gmra.mxu0 %v1508
  %v1611 = vpop.f32.mrf.mxu0
  %v1612 = vadd.f32 0.0, %v1611
  %v1613 = vpop.f32.mrf.mxu0
  %1614 = vmatprep.mubr.f32.mxu0 0.0
  %1615 = vmatmul.mubr.f32.gmra.mxu0 %v1510
  %v1616 = vpop.f32.mrf.mxu0
  %v1617 = vadd.f32 0.0, %v1616
  %v1618 = vpop.f32.mrf.mxu0
  %1619 = vmatprep.mubr.f32.mxu0 0.0
  %1620 = vmatmul.mubr.f32.gmra.mxu0 %v1512
  %v1621 = vpop.f32.mrf.mxu0
  %v1622 = vadd.f32 0.0, %v1621
  %v1623 = vpop.f32.mrf.mxu0
  %1624 = vmatprep.mubr.f32.mxu0 0.0
  %1625 = vmatmul.mubr.f32.gmra.mxu0 %v1515
  %v1626 = vpop.f32.mrf.mxu0
  %v1627 = vadd.f32 0.0, %v1626
  %v1628 = vpop.f32.mrf.mxu0
  %1629 = vmatprep.mubr.f32.mxu0 0.0
  %1630 = vmatmul.mubr.f32.gmra.mxu0 %v1517
  %v1631 = vpop.f32.mrf.mxu0
  %v1632 = vadd.f32 0.0, %v1631
  %v1633 = vpop.f32.mrf.mxu0
  %1634 = vmatprep.mubr.f32.mxu0 0.0
  %1635 = vmatmul.mubr.f32.gmra.mxu0 %v1519
  %v1636 = vpop.f32.mrf.mxu0
  %v1637 = vadd.f32 0.0, %v1636
  %v1638 = vpop.f32.mrf.mxu0
  %1639 = vmatprep.mubr.f32.mxu0 0.0
  %1640 = vmatmul.mubr.f32.gmra.mxu0 %v1522
  %v1641 = vpop.f32.mrf.mxu0
  %v1642 = vadd.f32 0.0, %v1641
  %v1643 = vpop.f32.mrf.mxu0
  %1644 = vmatprep.mubr.f32.mxu0 0.0
  %1645 = vmatmul.mubr.f32.gmra.mxu0 %v1524
  %v1646 = vpop.f32.mrf.mxu0
  %v1647 = vadd.f32 0.0, %v1646
  %v1648 = vpop.f32.mrf.mxu0
  %1649 = vmatprep.mubr.f32.mxu0 0.0
  %1650 = vmatmul.mubr.f32.gmra.mxu0 %v1526
  %v1651 = vpop.f32.mrf.mxu0
  %v1652 = vadd.f32 0.0, %v1651
  %v1653 = vpop.f32.mrf.mxu0
  %1654 = vmatprep.mubr.f32.mxu0 0.0
  %1655 = vmatmul.mubr.f32.gmra.mxu0 %v1528
  %v1656 = vpop.f32.mrf.mxu0
  %v1657 = vadd.f32 0.0, %v1656
  %v1658 = vpop.f32.mrf.mxu0
  %1659 = vdwg.mxu0
  %v1660 = vsel %vm1249, %v1403, 0
  %v1662 = vsel %vm1249, %v1404, 0
  %v1664 = vsel %vm1249, %v1405, 0
  %v1667 = vsel %vm1249, %v1458, 0
  %v1669 = vsel %vm1249, %v1429, 0
  %v1671 = vsel %vm1249, %v1431, 0
  %v1674 = vsel %vm1249, %v1459, 0
  %v1676 = vsel %vm1249, %v1440, 0
  %v1678 = vsel %vm1249, %v1442, 0
  %v1681 = vsel %vm1249, %v1460, 0
  %v1683 = vsel %vm1249, %v1452, 0
  %v1685 = vsel %vm1249, %v1454, 0
  %v1687 = vsel %vm1249, %v1456, 0
  %1689 = vmatprep.subr.mxu0 0.0
  %1690 = vmatpush1.msra.mxu0 0.0
  %1691 = vmatprep.subr.mxu0 0.0
  %1692 = vmatpush1.msra.mxu0 0.0
  %1693 = vmatprep.subr.mxu0 0.0
  %1694 = vmatpush1.msra.mxu0 0.0
  %1695 = vmatprep.subr.mxu0 0.0
  %1696 = vmatpush1.msra.mxu0 0.0
  %1697 = vmatprep.subr.mxu0 0.0
  %1698 = vmatpush1.msra.mxu0 0.0
  %1699 = vmatprep.subr.mxu0 0.0
  %1700 = vmatpush1.msra.mxu0 0.0
  %1701 = vmatprep.subr.mxu0 0.0
  %1702 = vmatpush1.msra.mxu0 0.0
  %1703 = vmatprep.subr.mxu0 0.0
  %1704 = vmatpush1.msra.mxu0 0.0
  %1705 = vmatprep.subr.mxu0 0.0
  %1706 = vmatpush1.msra.mxu0 0.0
  %1707 = vmatprep.subr.mxu0 0.0
  %1708 = vmatpush1.msra.mxu0 0.0
  %1709 = vmatprep.subr.mxu0 0.0
  %1710 = vmatpush1.msra.mxu0 0.0
  %1711 = vmatprep.subr.mxu0 0.0
  %1712 = vmatpush1.msra.mxu0 0.0
  %1713 = vmatprep.subr.mxu0 0.0
  %1714 = vmatpush1.msra.mxu0 0.0
  %1715 = vmatprep.subr.mxu0 0.0
  %1716 = vmatpush1.msra.mxu0 0.0
  %1717 = vmatprep.subr.mxu0 0.0
  %1718 = vmatpush1.msra.mxu0 0.0
  %1719 = vmatprep.subr.mxu0 0.0
  %1720 = vmatpush1.msra.mxu0 %v1417
  %1721 = vmatprep.subr.mxu0 0.0
  %1722 = vmatpush2.msra.mxu0 0.0
  %1723 = vmatprep.subr.mxu0 0.0
  %1724 = vmatpush2.msra.mxu0 0.0
  %1725 = vmatprep.subr.mxu0 0.0
  %1726 = vmatpush2.msra.mxu0 0.0
  %1727 = vmatprep.subr.mxu0 0.0
  %1728 = vmatpush2.msra.mxu0 0.0
  %1729 = vmatprep.subr.mxu0 0.0
  %1730 = vmatpush2.msra.mxu0 0.0
  %1731 = vmatprep.subr.mxu0 0.0
  %1732 = vmatpush2.msra.mxu0 0.0
  %1733 = vmatprep.subr.mxu0 0.0
  %1734 = vmatpush2.msra.mxu0 0.0
  %1735 = vmatprep.subr.mxu0 0.0
  %1736 = vmatpush2.msra.mxu0 0.0
  %1737 = vmatprep.subr.mxu0 0.0
  %1738 = vmatpush2.msra.mxu0 0.0
  %1739 = vmatprep.subr.mxu0 0.0
  %1740 = vmatpush2.msra.mxu0 0.0
  %1741 = vmatprep.subr.mxu0 0.0
  %1742 = vmatpush2.msra.mxu0 0.0
  %1743 = vmatprep.subr.mxu0 0.0
  %1744 = vmatpush2.msra.mxu0 0.0
  %1745 = vmatprep.subr.mxu0 0.0
  %1746 = vmatpush2.msra.mxu0 0.0
  %1747 = vmatprep.subr.mxu0 0.0
  %1748 = vmatpush2.msra.mxu0 0.0
  %1749 = vmatprep.subr.mxu0 0.0
  %1750 = vmatpush2.msra.mxu0 0.0
  %1751 = vmatprep.subr.mxu0 0.0
  %1752 = vmatpush2.msra.mxu0 0.0
  %1753 = vmatprep.mubr.f32.mxu0 0.0
  %1754 = vmatmul.mubr.f32.gmra.mxu0 %v1660
  %v1755 = vpop.f32.mrf.mxu0
  %v1756 = vadd.f32 %v1597, %v1755
  %v1757 = vpop.f32.mrf.mxu0
  %1758 = vmatprep.mubr.f32.mxu0 0.0
  %1759 = vmatmul.mubr.f32.gmra.mxu0 %v1662
  %v1760 = vpop.f32.mrf.mxu0
  %v1761 = vadd.f32 %v1602, %v1760
  %v1762 = vpop.f32.mrf.mxu0
  %1763 = vmatprep.mubr.f32.mxu0 0.0
  %1764 = vmatmul.mubr.f32.gmra.mxu0 %v1664
  %v1765 = vpop.f32.mrf.mxu0
  %v1766 = vadd.f32 %v1607, %v1765
  %v1767 = vpop.f32.mrf.mxu0
  %1768 = vmatprep.mubr.f32.mxu0 0.0
  %1769 = vmatmul.mubr.f32.gmra.mxu0 %v1667
  %v1770 = vpop.f32.mrf.mxu0
  %v1771 = vadd.f32 %v1612, %v1770
  %v1772 = vpop.f32.mrf.mxu0
  %1773 = vmatprep.mubr.f32.mxu0 0.0
  %1774 = vmatmul.mubr.f32.gmra.mxu0 %v1669
  %v1775 = vpop.f32.mrf.mxu0
  %v1776 = vadd.f32 %v1617, %v1775
  %v1777 = vpop.f32.mrf.mxu0
  %1778 = vmatprep.mubr.f32.mxu0 0.0
  %1779 = vmatmul.mubr.f32.gmra.mxu0 %v1671
  %v1780 = vpop.f32.mrf.mxu0
  %v1781 = vadd.f32 %v1622, %v1780
  %v1782 = vpop.f32.mrf.mxu0
  %1783 = vmatprep.mubr.f32.mxu0 0.0
  %1784 = vmatmul.mubr.f32.gmra.mxu0 %v1674
  %v1785 = vpop.f32.mrf.mxu0
  %v1786 = vadd.f32 %v1627, %v1785
  %v1787 = vpop.f32.mrf.mxu0
  %1788 = vmatprep.mubr.f32.mxu0 0.0
  %1789 = vmatmul.mubr.f32.gmra.mxu0 %v1676
  %v1790 = vpop.f32.mrf.mxu0
  %v1791 = vadd.f32 %v1632, %v1790
  %v1792 = vpop.f32.mrf.mxu0
  %1793 = vmatprep.mubr.f32.mxu0 0.0
  %1794 = vmatmul.mubr.f32.gmra.mxu0 %v1678
  %v1795 = vpop.f32.mrf.mxu0
  %v1796 = vadd.f32 %v1637, %v1795
  %v1797 = vpop.f32.mrf.mxu0
  %1798 = vmatprep.mubr.f32.mxu0 0.0
  %1799 = vmatmul.mubr.f32.gmra.mxu0 %v1681
  %v1800 = vpop.f32.mrf.mxu0
  %v1801 = vadd.f32 %v1642, %v1800
  %v1802 = vpop.f32.mrf.mxu0
  %1803 = vmatprep.mubr.f32.mxu0 0.0
  %1804 = vmatmul.mubr.f32.gmra.mxu0 %v1683
  %v1805 = vpop.f32.mrf.mxu0
  %v1806 = vadd.f32 %v1647, %v1805
  %v1807 = vpop.f32.mrf.mxu0
  %1808 = vmatprep.mubr.f32.mxu0 0.0
  %1809 = vmatmul.mubr.f32.gmra.mxu0 %v1685
  %v1810 = vpop.f32.mrf.mxu0
  %v1811 = vadd.f32 %v1652, %v1810
  %v1812 = vpop.f32.mrf.mxu0
  %1813 = vmatprep.mubr.f32.mxu0 0.0
  %1814 = vmatmul.mubr.f32.gmra.mxu0 %v1687
  %v1815 = vpop.f32.mrf.mxu0
  %v1816 = vadd.f32 %v1657, %v1815
  %v1817 = vpop.f32.mrf.mxu0
  %1818 = vdwg.mxu0
  %v1819 = vrot.slane %v1403, 2
  %v1820 = vrot.slane %v1404, 2
  %v1821 = vsel %vm591, %v1819, %v1820
  %v1822 = vrot.slane %v1405, 2
  %v1823 = vsel %vm591, %v1820, %v1822
  %v1824 = vsel %vm591, %v1822, %v1425
  %v1826 = vrot.slane %v1406, 4
  %v1827 = vrot.slane %v1407, 4
  %v1828 = vsel %vm187, %v1826, %v1827
  %v1829 = vrot.slane %v1408, 4
  %v1830 = vsel %vm187, %v1827, %v1829
  %v1831 = vrot.slane %v1409, 4
  %v1832 = vsel %vm187, %v1829, %v1831
  %v1835 = vrot.slane %v1410, 6
  %v1836 = vrot.slane %v1411, 6
  %v1837 = vsel %vm600, %v1835, %v1836
  %v1838 = vrot.slane %v1412, 6
  %v1839 = vsel %vm600, %v1836, %v1838
  %v1840 = vsel %vm600, %v1838, %v1450
  %v1843 = vsel %vm600, %v1425, %v1828
  %v1844 = vsel %vm187, %v1831, %v1835
  %v1845 = vsel %vm591, %v1840, %v1413
  %v1846 = vsel %vm1249, %v1821, 0
  %v1848 = vsel %vm1249, %v1823, 0
  %v1850 = vsel %vm1249, %v1824, 0
  %v1853 = vsel %vm1249, %v1843, 0
  %v1855 = vsel %vm1249, %v1830, 0
  %v1857 = vsel %vm1249, %v1832, 0
  %v1860 = vsel %vm1249, %v1844, 0
  %v1862 = vsel %vm1249, %v1837, 0
  %v1864 = vsel %vm1249, %v1839, 0
  %v1867 = vsel %vm1249, %v1845, 0
  %v1869 = vsel %vm1249, %v1414, 0
  %v1871 = vsel %vm1249, %v1415, 0
  %v1873 = vsel %vm1249, %v1416, 0
  %1875 = vmatprep.subr.mxu0 0.0
  %1876 = vmatpush1.msra.mxu0 0.0
  %1877 = vmatprep.subr.mxu0 0.0
  %1878 = vmatpush1.msra.mxu0 0.0
  %1879 = vmatprep.subr.mxu0 0.0
  %1880 = vmatpush1.msra.mxu0 0.0
  %1881 = vmatprep.subr.mxu0 0.0
  %1882 = vmatpush1.msra.mxu0 0.0
  %1883 = vmatprep.subr.mxu0 0.0
  %1884 = vmatpush1.msra.mxu0 0.0
  %1885 = vmatprep.subr.mxu0 0.0
  %1886 = vmatpush1.msra.mxu0 0.0
  %1887 = vmatprep.subr.mxu0 0.0
  %1888 = vmatpush1.msra.mxu0 0.0
  %1889 = vmatprep.subr.mxu0 0.0
  %1890 = vmatpush1.msra.mxu0 0.0
  %1891 = vmatprep.subr.mxu0 0.0
  %1892 = vmatpush1.msra.mxu0 0.0
  %1893 = vmatprep.subr.mxu0 0.0
  %1894 = vmatpush1.msra.mxu0 0.0
  %1895 = vmatprep.subr.mxu0 0.0
  %1896 = vmatpush1.msra.mxu0 0.0
  %1897 = vmatprep.subr.mxu0 0.0
  %1898 = vmatpush1.msra.mxu0 0.0
  %1899 = vmatprep.subr.mxu0 0.0
  %1900 = vmatpush1.msra.mxu0 0.0
  %1901 = vmatprep.subr.mxu0 0.0
  %1902 = vmatpush1.msra.mxu0 0.0
  %1903 = vmatprep.subr.mxu0 0.0
  %1904 = vmatpush1.msra.mxu0 0.0
  %1905 = vmatprep.subr.mxu0 0.0
  %1906 = vmatpush1.msra.mxu0 %v1419
  %1907 = vmatprep.subr.mxu0 0.0
  %1908 = vmatpush2.msra.mxu0 0.0
  %1909 = vmatprep.subr.mxu0 0.0
  %1910 = vmatpush2.msra.mxu0 0.0
  %1911 = vmatprep.subr.mxu0 0.0
  %1912 = vmatpush2.msra.mxu0 0.0
  %1913 = vmatprep.subr.mxu0 0.0
  %1914 = vmatpush2.msra.mxu0 0.0
  %1915 = vmatprep.subr.mxu0 0.0
  %1916 = vmatpush2.msra.mxu0 0.0
  %1917 = vmatprep.subr.mxu0 0.0
  %1918 = vmatpush2.msra.mxu0 0.0
  %1919 = vmatprep.subr.mxu0 0.0
  %1920 = vmatpush2.msra.mxu0 0.0
  %1921 = vmatprep.subr.mxu0 0.0
  %1922 = vmatpush2.msra.mxu0 0.0
  %1923 = vmatprep.subr.mxu0 0.0
  %1924 = vmatpush2.msra.mxu0 0.0
  %1925 = vmatprep.subr.mxu0 0.0
  %1926 = vmatpush2.msra.mxu0 0.0
  %1927 = vmatprep.subr.mxu0 0.0
  %1928 = vmatpush2.msra.mxu0 0.0
  %1929 = vmatprep.subr.mxu0 0.0
  %1930 = vmatpush2.msra.mxu0 0.0
  %1931 = vmatprep.subr.mxu0 0.0
  %1932 = vmatpush2.msra.mxu0 0.0
  %1933 = vmatprep.subr.mxu0 0.0
  %1934 = vmatpush2.msra.mxu0 0.0
  %1935 = vmatprep.subr.mxu0 0.0
  %1936 = vmatpush2.msra.mxu0 0.0
  %1937 = vmatprep.subr.mxu0 0.0
  %1938 = vmatpush2.msra.mxu0 0.0
  %1939 = vmatprep.mubr.f32.mxu0 0.0
  %1940 = vmatmul.mubr.f32.gmra.mxu0 %v1846
  %v1941 = vpop.f32.mrf.mxu0
  %v1942 = vadd.f32 0.0, %v1941
  %v1943 = vpop.f32.mrf.mxu0
  %1944 = vmatprep.mubr.f32.mxu0 0.0
  %1945 = vmatmul.mubr.f32.gmra.mxu0 %v1848
  %v1946 = vpop.f32.mrf.mxu0
  %v1947 = vadd.f32 0.0, %v1946
  %v1948 = vpop.f32.mrf.mxu0
  %1949 = vmatprep.mubr.f32.mxu0 0.0
  %1950 = vmatmul.mubr.f32.gmra.mxu0 %v1850
  %v1951 = vpop.f32.mrf.mxu0
  %v1952 = vadd.f32 0.0, %v1951
  %v1953 = vpop.f32.mrf.mxu0
  %1954 = vmatprep.mubr.f32.mxu0 0.0
  %1955 = vmatmul.mubr.f32.gmra.mxu0 %v1853
  %v1956 = vpop.f32.mrf.mxu0
  %v1957 = vadd.f32 0.0, %v1956
  %v1958 = vpop.f32.mrf.mxu0
  %1959 = vmatprep.mubr.f32.mxu0 0.0
  %1960 = vmatmul.mubr.f32.gmra.mxu0 %v1855
  %v1961 = vpop.f32.mrf.mxu0
  %v1962 = vadd.f32 0.0, %v1961
  %v1963 = vpop.f32.mrf.mxu0
  %1964 = vmatprep.mubr.f32.mxu0 0.0
  %1965 = vmatmul.mubr.f32.gmra.mxu0 %v1857
  %v1966 = vpop.f32.mrf.mxu0
  %v1967 = vadd.f32 0.0, %v1966
  %v1968 = vpop.f32.mrf.mxu0
  %1969 = vmatprep.mubr.f32.mxu0 0.0
  %1970 = vmatmul.mubr.f32.gmra.mxu0 %v1860
  %v1971 = vpop.f32.mrf.mxu0
  %v1972 = vadd.f32 0.0, %v1971
  %v1973 = vpop.f32.mrf.mxu0
  %1974 = vmatprep.mubr.f32.mxu0 0.0
  %1975 = vmatmul.mubr.f32.gmra.mxu0 %v1862
  %v1976 = vpop.f32.mrf.mxu0
  %v1977 = vadd.f32 0.0, %v1976
  %v1978 = vpop.f32.mrf.mxu0
  %1979 = vmatprep.mubr.f32.mxu0 0.0
  %1980 = vmatmul.mubr.f32.gmra.mxu0 %v1864
  %v1981 = vpop.f32.mrf.mxu0
  %v1982 = vadd.f32 0.0, %v1981
  %v1983 = vpop.f32.mrf.mxu0
  %1984 = vmatprep.mubr.f32.mxu0 0.0
  %1985 = vmatmul.mubr.f32.gmra.mxu0 %v1867
  %v1986 = vpop.f32.mrf.mxu0
  %v1987 = vadd.f32 0.0, %v1986
  %v1988 = vpop.f32.mrf.mxu0
  %1989 = vmatprep.mubr.f32.mxu0 0.0
  %1990 = vmatmul.mubr.f32.gmra.mxu0 %v1869
  %v1991 = vpop.f32.mrf.mxu0
  %v1992 = vadd.f32 0.0, %v1991
  %v1993 = vpop.f32.mrf.mxu0
  %1994 = vmatprep.mubr.f32.mxu0 0.0
  %1995 = vmatmul.mubr.f32.gmra.mxu0 %v1871
  %v1996 = vpop.f32.mrf.mxu0
  %v1997 = vadd.f32 0.0, %v1996
  %v1998 = vpop.f32.mrf.mxu0
  %1999 = vmatprep.mubr.f32.mxu0 0.0
  %2000 = vmatmul.mubr.f32.gmra.mxu0 %v1873
  %v2001 = vpop.f32.mrf.mxu0
  %v2002 = vadd.f32 0.0, %v2001
  %v2003 = vpop.f32.mrf.mxu0
  %2004 = vdwg.mxu0
  %v2005 = vadd.f32 %v1756, %v1942
  %v2006 = vadd.f32 %v1761, %v1947
  %v2007 = vadd.f32 %v1766, %v1952
  %v2008 = vadd.f32 %v1771, %v1957
  %v2009 = vadd.f32 %v1776, %v1962
  %v2010 = vadd.f32 %v1781, %v1967
  %v2011 = vadd.f32 %v1786, %v1972
  %v2012 = vadd.f32 %v1791, %v1977
  %v2013 = vadd.f32 %v1796, %v1982
  %v2014 = vadd.f32 %v1801, %v1987
  %v2015 = vadd.f32 %v1806, %v1992
  %v2016 = vadd.f32 %v1811, %v1997
  %v2017 = vadd.f32 %v1816, %v2002
  %v2019 = vlaneseq
  %v2020 = vshrl.u32 %v2019, 7
  %v2021 = vsub.s32 0, %v2020
  %v2022 = vrot.slane %v1420, %v2021
  %v2024 = vadd.f32 %v2005, %v2022
  %v2025 = vadd.f32 %v2006, %v2022
  %v2026 = vadd.f32 %v2007, %v2022
  %v2027 = vadd.f32 %v2008, %v2022
  %v2028 = vadd.f32 %v2009, %v2022
  %v2029 = vadd.f32 %v2010, %v2022
  %v2030 = vadd.f32 %v2011, %v2022
  %v2031 = vadd.f32 %v2012, %v2022
  %v2032 = vadd.f32 %v2013, %v2022
  %v2033 = vadd.f32 %v2014, %v2022
  %v2034 = vadd.f32 %v2015, %v2022
  %v2035 = vadd.f32 %v2016, %v2022
  %v2036 = vadd.f32 %v2017, %v2022
  %v2037 = vld [vmem:[%s7] sm:$0x1]
  %v2038 = vld [vmem:[%s8] sm:$0x1]
  %vm2039 = vcmask 130048
  %v2040 = vsel %vm2039, %v2024, 0.0
  %v2041 = vsel %vm2039, %v2025, 0.0
  %v2042 = vadd.f32 %v2040, %v2041
  %v2043 = vsel %vm2039, %v2026, 0.0
  %v2044 = vadd.f32 %v2042, %v2043
  %v2045 = vsel %vm2039, %v2027, 0.0
  %v2046 = vadd.f32 %v2044, %v2045
  %v2047 = vsel %vm2039, %v2028, 0.0
  %v2048 = vadd.f32 %v2046, %v2047
  %v2049 = vsel %vm2039, %v2029, 0.0
  %v2050 = vadd.f32 %v2048, %v2049
  %v2051 = vsel %vm2039, %v2030, 0.0
  %v2052 = vadd.f32 %v2050, %v2051
  %v2053 = vsel %vm2039, %v2031, 0.0
  %v2054 = vadd.f32 %v2052, %v2053
  %v2055 = vsel %vm2039, %v2032, 0.0
  %v2056 = vadd.f32 %v2054, %v2055
  %v2057 = vsel %vm2039, %v2033, 0.0
  %v2058 = vadd.f32 %v2056, %v2057
  %v2059 = vsel %vm2039, %v2034, 0.0
  %v2060 = vadd.f32 %v2058, %v2059
  %v2061 = vsel %vm2039, %v2035, 0.0
  %v2062 = vadd.f32 %v2060, %v2061
  %v2063 = vsel %vm2039, %v2036, 0.0
  %v2064 = vadd.f32 %v2062, %v2063
  %v2065 = vrot.slane %v2064, 4
  %v2066 = vadd.f32 %v2064, %v2065
  %v2067 = vrot.slane %v2066, 2
  %v2068 = vadd.f32 %v2066, %v2067
  %v2069 = vrot.slane %v2068, 1
  %v2070 = vadd.f32 %v2068, %v2069
  %v2071 = vrcp.pop 104.0
  %v2072 = vmul.f32 %v2070, %v2071
  %v2073 = vsub.f32 %v2024, %v2072
  %v2074 = vsub.f32 %v2025, %v2072
  %v2075 = vsub.f32 %v2026, %v2072
  %v2076 = vsub.f32 %v2027, %v2072
  %v2077 = vsub.f32 %v2028, %v2072
  %v2078 = vsub.f32 %v2029, %v2072
  %v2079 = vsub.f32 %v2030, %v2072
  %v2080 = vsub.f32 %v2031, %v2072
  %v2081 = vsub.f32 %v2032, %v2072
  %v2082 = vsub.f32 %v2033, %v2072
  %v2083 = vsub.f32 %v2034, %v2072
  %v2084 = vsub.f32 %v2035, %v2072
  %v2085 = vsub.f32 %v2036, %v2072
  %v2086 = vmul.f32 %v2073, %v2073
  %v2087 = vmul.f32 %v2074, %v2074
  %v2088 = vmul.f32 %v2075, %v2075
  %v2089 = vmul.f32 %v2076, %v2076
  %v2090 = vmul.f32 %v2077, %v2077
  %v2091 = vmul.f32 %v2078, %v2078
  %v2092 = vmul.f32 %v2079, %v2079
  %v2093 = vmul.f32 %v2080, %v2080
  %v2094 = vmul.f32 %v2081, %v2081
  %v2095 = vmul.f32 %v2082, %v2082
  %v2096 = vmul.f32 %v2083, %v2083
  %v2097 = vmul.f32 %v2084, %v2084
  %v2098 = vmul.f32 %v2085, %v2085
  %v2099 = vsel %vm2039, %v2086, 0.0
  %v2100 = vsel %vm2039, %v2087, 0.0
  %v2101 = vadd.f32 %v2099, %v2100
  %v2102 = vsel %vm2039, %v2088, 0.0
  %v2103 = vadd.f32 %v2101, %v2102
  %v2104 = vsel %vm2039, %v2089, 0.0
  %v2105 = vadd.f32 %v2103, %v2104
  %v2106 = vsel %vm2039, %v2090, 0.0
  %v2107 = vadd.f32 %v2105, %v2106
  %v2108 = vsel %vm2039, %v2091, 0.0
  %v2109 = vadd.f32 %v2107, %v2108
  %v2110 = vsel %vm2039, %v2092, 0.0
  %v2111 = vadd.f32 %v2109, %v2110
  %v2112 = vsel %vm2039, %v2093, 0.0
  %v2113 = vadd.f32 %v2111, %v2112
  %v2114 = vsel %vm2039, %v2094, 0.0
  %v2115 = vadd.f32 %v2113, %v2114
  %v2116 = vsel %vm2039, %v2095, 0.0
  %v2117 = vadd.f32 %v2115, %v2116
  %v2118 = vsel %vm2039, %v2096, 0.0
  %v2119 = vadd.f32 %v2117, %v2118
  %v2120 = vsel %vm2039, %v2097, 0.0
  %v2121 = vadd.f32 %v2119, %v2120
  %v2122 = vsel %vm2039, %v2098, 0.0
  %v2123 = vadd.f32 %v2121, %v2122
  %v2124 = vrot.slane %v2123, 4
  %v2125 = vadd.f32 %v2123, %v2124
  %v2126 = vrot.slane %v2125, 2
  %v2127 = vadd.f32 %v2125, %v2126
  %v2128 = vrot.slane %v2127, 1
  %v2129 = vadd.f32 %v2127, %v2128
  %v2130 = vmul.f32 %v2129, %v2071
  %v2131 = vadd.f32 %v2130, 1e-05
  %v2132 = vrsqrt.pop %v2131
  %v2133 = vmul.f32 %v2073, %v2132
  %v2134 = vmul.f32 %v2074, %v2132
  %v2135 = vmul.f32 %v2075, %v2132
  %v2136 = vmul.f32 %v2076, %v2132
  %v2137 = vmul.f32 %v2077, %v2132
  %v2138 = vmul.f32 %v2078, %v2132
  %v2139 = vmul.f32 %v2079, %v2132
  %v2140 = vmul.f32 %v2080, %v2132
  %v2141 = vmul.f32 %v2081, %v2132
  %v2142 = vmul.f32 %v2082, %v2132
  %v2143 = vmul.f32 %v2083, %v2132
  %v2144 = vmul.f32 %v2084, %v2132
  %v2145 = vmul.f32 %v2085, %v2132
  %v2147 = vlaneseq
  %v2148 = vshrl.u32 %v2147, 7
  %v2149 = vsub.s32 0, %v2148
  %v2150 = vrot.slane %v2037, %v2149
  %v2152 = vmul.f32 %v2133, %v2150
  %v2153 = vmul.f32 %v2134, %v2150
  %v2154 = vmul.f32 %v2135, %v2150
  %v2155 = vmul.f32 %v2136, %v2150
  %v2156 = vmul.f32 %v2137, %v2150
  %v2157 = vmul.f32 %v2138, %v2150
  %v2158 = vmul.f32 %v2139, %v2150
  %v2159 = vmul.f32 %v2140, %v2150
  %v2160 = vmul.f32 %v2141, %v2150
  %v2161 = vmul.f32 %v2142, %v2150
  %v2162 = vmul.f32 %v2143, %v2150
  %v2163 = vmul.f32 %v2144, %v2150
  %v2164 = vmul.f32 %v2145, %v2150
  %v2166 = vlaneseq
  %v2167 = vshrl.u32 %v2166, 7
  %v2168 = vsub.s32 0, %v2167
  %v2169 = vrot.slane %v2038, %v2168
  %v2171 = vadd.f32 %v2152, %v2169
  %v2172 = vadd.f32 %v2153, %v2169
  %v2173 = vadd.f32 %v2154, %v2169
  %v2174 = vadd.f32 %v2155, %v2169
  %v2175 = vadd.f32 %v2156, %v2169
  %v2176 = vadd.f32 %v2157, %v2169
  %v2177 = vadd.f32 %v2158, %v2169
  %v2178 = vadd.f32 %v2159, %v2169
  %v2179 = vadd.f32 %v2160, %v2169
  %v2180 = vadd.f32 %v2161, %v2169
  %v2181 = vadd.f32 %v2162, %v2169
  %v2182 = vadd.f32 %v2163, %v2169
  %v2183 = vadd.f32 %v2164, %v2169
  %v2184 = vmax.f32 %v2171, 0.0
  %v2185 = vmax.f32 %v2172, 0.0
  %v2186 = vmax.f32 %v2173, 0.0
  %v2187 = vmax.f32 %v2174, 0.0
  %v2188 = vmax.f32 %v2175, 0.0
  %v2189 = vmax.f32 %v2176, 0.0
  %v2190 = vmax.f32 %v2177, 0.0
  %v2191 = vmax.f32 %v2178, 0.0
  %v2192 = vmax.f32 %v2179, 0.0
  %v2193 = vmax.f32 %v2180, 0.0
  %v2194 = vmax.f32 %v2181, 0.0
  %v2195 = vmax.f32 %v2182, 0.0
  %v2196 = vmax.f32 %v2183, 0.0
  %v2197 = vld [vmem:[%s9] sm:$0xff]
  %v2198 = vld [vmem:[%s9 + $0x8] sm:$0xff]
  %v2199 = vld [vmem:[%s9 + $0x10] sm:$0xff]
  %v2200 = vld [vmem:[%s9 + $0x18] sm:$0xff]
  %v2201 = vld [vmem:[%s9 + $0x20] sm:$0xff]
  %v2202 = vld [vmem:[%s9 + $0x28] sm:$0xff]
  %v2203 = vld [vmem:[%s10] sm:$0x1]
  %v2208 = vrot.slane %v2187, 2
  %v2209 = vrot.slane %v2188, 2
  %v2210 = vsel %vm591, %v2208, %v2209
  %v2211 = vrot.slane %v2189, 2
  %v2212 = vsel %vm591, %v2209, %v2211
  %v2213 = vrot.slane %v2190, 2
  %v2214 = vsel %vm591, %v2211, %v2213
  %v2218 = vrot.slane %v2190, 4
  %v2219 = vrot.slane %v2191, 4
  %v2220 = vsel %vm187, %v2218, %v2219
  %v2221 = vrot.slane %v2192, 4
  %v2222 = vsel %vm187, %v2219, %v2221
  %v2223 = vrot.slane %v2193, 4
  %v2224 = vsel %vm187, %v2221, %v2223
  %v2228 = vrot.slane %v2193, 6
  %v2229 = vrot.slane %v2194, 6
  %v2230 = vsel %vm600, %v2228, %v2229
  %v2231 = vrot.slane %v2195, 6
  %v2232 = vsel %vm600, %v2229, %v2231
  %v2233 = vrot.slane %v2196, 6
  %v2234 = vsel %vm600, %v2231, %v2233
  %v2238 = vrot.slane %v2184, 1
  %v2239 = vrot.slane %v2185, 1
  %v2240 = vsel %vm214, %v2238, %v2239
  %v2241 = vrot.slane %v2186, 1
  %v2242 = vsel %vm214, %v2239, %v2241
  %v2243 = vrot.slane %v2187, 1
  %v2244 = vsel %vm214, %v2241, %v2243
  %v2245 = vrot.slane %v2187, 3
  %v2246 = vrot.slane %v2188, 3
  %v2247 = vsel %vm809, %v2245, %v2246
  %v2248 = vrot.slane %v2189, 3
  %v2249 = vsel %vm809, %v2246, %v2248
  %v2250 = vrot.slane %v2190, 3
  %v2251 = vsel %vm809, %v2248, %v2250
  %v2252 = vrot.slane %v2190, 5
  %v2253 = vrot.slane %v2191, 5
  %v2254 = vsel %vm223, %v2252, %v2253
  %v2255 = vrot.slane %v2192, 5
  %v2256 = vsel %vm223, %v2253, %v2255
  %v2257 = vrot.slane %v2193, 5
  %v2258 = vsel %vm223, %v2255, %v2257
  %v2259 = vrot.slane %v2193, 7
  %v2260 = vrot.slane %v2194, 7
  %v2261 = vsel %vm818, %v2259, %v2260
  %v2262 = vrot.slane %v2195, 7
  %v2263 = vsel %vm818, %v2260, %v2262
  %v2264 = vrot.slane %v2196, 7
  %v2265 = vsel %vm818, %v2262, %v2264
  %v2266 = vsel %vm2039, %v2240, 0
  %v2268 = vsel %vm2039, %v2242, 0
  %v2270 = vsel %vm2039, %v2244, 0
  %v2272 = vsel %vm2039, %v2247, 0
  %v2274 = vsel %vm2039, %v2249, 0
  %v2276 = vsel %vm2039, %v2251, 0
  %v2278 = vsel %vm2039, %v2254, 0
  %v2280 = vsel %vm2039, %v2256, 0
  %v2282 = vsel %vm2039, %v2258, 0
  %v2284 = vsel %vm2039, %v2261, 0
  %v2286 = vsel %vm2039, %v2263, 0
  %v2288 = vsel %vm2039, %v2265, 0
  %2290 = vmatprep.subr.mxu0 0.0
  %2291 = vmatpush1.msra.mxu0 0.0
  %2292 = vmatprep.subr.mxu0 0.0
  %2293 = vmatpush1.msra.mxu0 0.0
  %2294 = vmatprep.subr.mxu0 0.0
  %2295 = vmatpush1.msra.mxu0 0.0
  %2296 = vmatprep.subr.mxu0 0.0
  %2297 = vmatpush1.msra.mxu0 0.0
  %2298 = vmatprep.subr.mxu0 0.0
  %2299 = vmatpush1.msra.mxu0 0.0
  %2300 = vmatprep.subr.mxu0 0.0
  %2301 = vmatpush1.msra.mxu0 0.0
  %2302 = vmatprep.subr.mxu0 0.0
  %2303 = vmatpush1.msra.mxu0 0.0
  %2304 = vmatprep.subr.mxu0 0.0
  %2305 = vmatpush1.msra.mxu0 0.0
  %2306 = vmatprep.subr.mxu0 0.0
  %2307 = vmatpush1.msra.mxu0 0.0
  %2308 = vmatprep.subr.mxu0 0.0
  %2309 = vmatpush1.msra.mxu0 0.0
  %2310 = vmatprep.subr.mxu0 0.0
  %2311 = vmatpush1.msra.mxu0 0.0
  %2312 = vmatprep.subr.mxu0 0.0
  %2313 = vmatpush1.msra.mxu0 0.0
  %2314 = vmatprep.subr.mxu0 0.0
  %2315 = vmatpush1.msra.mxu0 0.0
  %2316 = vmatprep.subr.mxu0 0.0
  %2317 = vmatpush1.msra.mxu0 0.0
  %2318 = vmatprep.subr.mxu0 0.0
  %2319 = vmatpush1.msra.mxu0 %v2200
  %2320 = vmatprep.subr.mxu0 0.0
  %2321 = vmatpush1.msra.mxu0 %v2199
  %2322 = vmatprep.subr.mxu0 0.0
  %2323 = vmatpush2.msra.mxu0 0.0
  %2324 = vmatprep.subr.mxu0 0.0
  %2325 = vmatpush2.msra.mxu0 0.0
  %2326 = vmatprep.subr.mxu0 0.0
  %2327 = vmatpush2.msra.mxu0 0.0
  %2328 = vmatprep.subr.mxu0 0.0
  %2329 = vmatpush2.msra.mxu0 0.0
  %2330 = vmatprep.subr.mxu0 0.0
  %2331 = vmatpush2.msra.mxu0 0.0
  %2332 = vmatprep.subr.mxu0 0.0
  %2333 = vmatpush2.msra.mxu0 0.0
  %2334 = vmatprep.subr.mxu0 0.0
  %2335 = vmatpush2.msra.mxu0 0.0
  %2336 = vmatprep.subr.mxu0 0.0
  %2337 = vmatpush2.msra.mxu0 0.0
  %2338 = vmatprep.subr.mxu0 0.0
  %2339 = vmatpush2.msra.mxu0 0.0
  %2340 = vmatprep.subr.mxu0 0.0
  %2341 = vmatpush2.msra.mxu0 0.0
  %2342 = vmatprep.subr.mxu0 0.0
  %2343 = vmatpush2.msra.mxu0 0.0
  %2344 = vmatprep.subr.mxu0 0.0
  %2345 = vmatpush2.msra.mxu0 0.0
  %2346 = vmatprep.subr.mxu0 0.0
  %2347 = vmatpush2.msra.mxu0 0.0
  %2348 = vmatprep.subr.mxu0 0.0
  %2349 = vmatpush2.msra.mxu0 0.0
  %2350 = vmatprep.subr.mxu0 0.0
  %2351 = vmatpush2.msra.mxu0 0.0
  %2352 = vmatprep.subr.mxu0 0.0
  %2353 = vmatpush2.msra.mxu0 0.0
  %2354 = vmatprep.mubr.f32.mxu0 0.0
  %2355 = vmatmul.mubr.f32.gmra.mxu0 %v2266
  %v2356 = vpop.f32.mrf.mxu0
  %v2357 = vadd.f32 0.0, %v2356
  %v2358 = vpop.f32.mrf.mxu0
  %2359 = vmatprep.mubr.f32.mxu0 0.0
  %2360 = vmatmul.mubr.f32.gmra.mxu0 %v2268
  %v2361 = vpop.f32.mrf.mxu0
  %v2362 = vadd.f32 0.0, %v2361
  %v2363 = vpop.f32.mrf.mxu0
  %2364 = vmatprep.mubr.f32.mxu0 0.0
  %2365 = vmatmul.mubr.f32.gmra.mxu0 %v2270
  %v2366 = vpop.f32.mrf.mxu0
  %v2367 = vadd.f32 0.0, %v2366
  %v2368 = vpop.f32.mrf.mxu0
  %2369 = vmatprep.mubr.f32.mxu0 0.0
  %2370 = vmatmul.mubr.f32.gmra.mxu0 %v2272
  %v2371 = vpop.f32.mrf.mxu0
  %v2372 = vadd.f32 0.0, %v2371
  %v2373 = vpop.f32.mrf.mxu0
  %2374 = vmatprep.mubr.f32.mxu0 0.0
  %2375 = vmatmul.mubr.f32.gmra.mxu0 %v2274
  %v2376 = vpop.f32.mrf.mxu0
  %v2377 = vadd.f32 0.0, %v2376
  %v2378 = vpop.f32.mrf.mxu0
  %2379 = vmatprep.mubr.f32.mxu0 0.0
  %2380 = vmatmul.mubr.f32.gmra.mxu0 %v2276
  %v2381 = vpop.f32.mrf.mxu0
  %v2382 = vadd.f32 0.0, %v2381
  %v2383 = vpop.f32.mrf.mxu0
  %2384 = vmatprep.mubr.f32.mxu0 0.0
  %2385 = vmatmul.mubr.f32.gmra.mxu0 %v2278
  %v2386 = vpop.f32.mrf.mxu0
  %v2387 = vadd.f32 0.0, %v2386
  %v2388 = vpop.f32.mrf.mxu0
  %2389 = vmatprep.mubr.f32.mxu0 0.0
  %2390 = vmatmul.mubr.f32.gmra.mxu0 %v2280
  %v2391 = vpop.f32.mrf.mxu0
  %v2392 = vadd.f32 0.0, %v2391
  %v2393 = vpop.f32.mrf.mxu0
  %2394 = vmatprep.mubr.f32.mxu0 0.0
  %2395 = vmatmul.mubr.f32.gmra.mxu0 %v2282
  %v2396 = vpop.f32.mrf.mxu0
  %v2397 = vadd.f32 0.0, %v2396
  %v2398 = vpop.f32.mrf.mxu0
  %2399 = vmatprep.mubr.f32.mxu0 0.0
  %2400 = vmatmul.mubr.f32.gmra.mxu0 %v2284
  %v2401 = vpop.f32.mrf.mxu0
  %v2402 = vadd.f32 0.0, %v2401
  %v2403 = vpop.f32.mrf.mxu0
  %2404 = vmatprep.mubr.f32.mxu0 0.0
  %2405 = vmatmul.mubr.f32.gmra.mxu0 %v2286
  %v2406 = vpop.f32.mrf.mxu0
  %v2407 = vadd.f32 0.0, %v2406
  %v2408 = vpop.f32.mrf.mxu0
  %2409 = vmatprep.mubr.f32.mxu0 0.0
  %2410 = vmatmul.mubr.f32.gmra.mxu0 %v2288
  %v2411 = vpop.f32.mrf.mxu0
  %v2412 = vadd.f32 0.0, %v2411
  %v2413 = vpop.f32.mrf.mxu0
  %2414 = vdwg.mxu0
  %v2415 = vsel %vm2039, %v2184, 0
  %v2417 = vsel %vm2039, %v2185, 0
  %v2419 = vsel %vm2039, %v2186, 0
  %v2421 = vsel %vm2039, %v2210, 0
  %v2423 = vsel %vm2039, %v2212, 0
  %v2425 = vsel %vm2039, %v2214, 0
  %v2427 = vsel %vm2039, %v2220, 0
  %v2429 = vsel %vm2039, %v2222, 0
  %v2431 = vsel %vm2039, %v2224, 0
  %v2433 = vsel %vm2039, %v2230, 0
  %v2435 = vsel %vm2039, %v2232, 0
  %v2437 = vsel %vm2039, %v2234, 0
  %2439 = vmatprep.subr.mxu0 0.0
  %2440 = vmatpush1.msra.mxu0 0.0
  %2441 = vmatprep.subr.mxu0 0.0
  %2442 = vmatpush1.msra.mxu0 0.0
  %2443 = vmatprep.subr.mxu0 0.0
  %2444 = vmatpush1.msra.mxu0 0.0
  %2445 = vmatprep.subr.mxu0 0.0
  %2446 = vmatpush1.msra.mxu0 0.0
  %2447 = vmatprep.subr.mxu0 0.0
  %2448 = vmatpush1.msra.mxu0 0.0
  %2449 = vmatprep.subr.mxu0 0.0
  %2450 = vmatpush1.msra.mxu0 0.0
  %2451 = vmatprep.subr.mxu0 0.0
  %2452 = vmatpush1.msra.mxu0 0.0
  %2453 = vmatprep.subr.mxu0 0.0
  %2454 = vmatpush1.msra.mxu0 0.0
  %2455 = vmatprep.subr.mxu0 0.0
  %2456 = vmatpush1.msra.mxu0 0.0
  %2457 = vmatprep.subr.mxu0 0.0
  %2458 = vmatpush1.msra.mxu0 0.0
  %2459 = vmatprep.subr.mxu0 0.0
  %2460 = vmatpush1.msra.mxu0 0.0
  %2461 = vmatprep.subr.mxu0 0.0
  %2462 = vmatpush1.msra.mxu0 0.0
  %2463 = vmatprep.subr.mxu0 0.0
  %2464 = vmatpush1.msra.mxu0 0.0
  %2465 = vmatprep.subr.mxu0 0.0
  %2466 = vmatpush1.msra.mxu0 0.0
  %2467 = vmatprep.subr.mxu0 0.0
  %2468 = vmatpush1.msra.mxu0 %v2198
  %2469 = vmatprep.subr.mxu0 0.0
  %2470 = vmatpush1.msra.mxu0 %v2197
  %2471 = vmatprep.subr.mxu0 0.0
  %2472 = vmatpush2.msra.mxu0 0.0
  %2473 = vmatprep.subr.mxu0 0.0
  %2474 = vmatpush2.msra.mxu0 0.0
  %2475 = vmatprep.subr.mxu0 0.0
  %2476 = vmatpush2.msra.mxu0 0.0
  %2477 = vmatprep.subr.mxu0 0.0
  %2478 = vmatpush2.msra.mxu0 0.0
  %2479 = vmatprep.subr.mxu0 0.0
  %2480 = vmatpush2.msra.mxu0 0.0
  %2481 = vmatprep.subr.mxu0 0.0
  %2482 = vmatpush2.msra.mxu0 0.0
  %2483 = vmatprep.subr.mxu0 0.0
  %2484 = vmatpush2.msra.mxu0 0.0
  %2485 = vmatprep.subr.mxu0 0.0
  %2486 = vmatpush2.msra.mxu0 0.0
  %2487 = vmatprep.subr.mxu0 0.0
  %2488 = vmatpush2.msra.mxu0 0.0
  %2489 = vmatprep.subr.mxu0 0.0
  %2490 = vmatpush2.msra.mxu0 0.0
  %2491 = vmatprep.subr.mxu0 0.0
  %2492 = vmatpush2.msra.mxu0 0.0
  %2493 = vmatprep.subr.mxu0 0.0
  %2494 = vmatpush2.msra.mxu0 0.0
  %2495 = vmatprep.subr.mxu0 0.0
  %2496 = vmatpush2.msra.mxu0 0.0
  %2497 = vmatprep.subr.mxu0 0.0
  %2498 = vmatpush2.msra.mxu0 0.0
  %2499 = vmatprep.subr.mxu0 0.0
  %2500 = vmatpush2.msra.mxu0 0.0
  %2501 = vmatprep.subr.mxu0 0.0
  %2502 = vmatpush2.msra.mxu0 0.0
  %2503 = vmatprep.mubr.f32.mxu0 0.0
  %2504 = vmatmul.mubr.f32.gmra.mxu0 %v2415
  %v2505 = vpop.f32.mrf.mxu0
  %v2506 = vadd.f32 %v2357, %v2505
  %v2507 = vpop.f32.mrf.mxu0
  %2508 = vmatprep.mubr.f32.mxu0 0.0
  %2509 = vmatmul.mubr.f32.gmra.mxu0 %v2417
  %v2510 = vpop.f32.mrf.mxu0
  %v2511 = vadd.f32 %v2362, %v2510
  %v2512 = vpop.f32.mrf.mxu0
  %2513 = vmatprep.mubr.f32.mxu0 0.0
  %2514 = vmatmul.mubr.f32.gmra.mxu0 %v2419
  %v2515 = vpop.f32.mrf.mxu0
  %v2516 = vadd.f32 %v2367, %v2515
  %v2517 = vpop.f32.mrf.mxu0
  %2518 = vmatprep.mubr.f32.mxu0 0.0
  %2519 = vmatmul.mubr.f32.gmra.mxu0 %v2421
  %v2520 = vpop.f32.mrf.mxu0
  %v2521 = vadd.f32 %v2372, %v2520
  %v2522 = vpop.f32.mrf.mxu0
  %2523 = vmatprep.mubr.f32.mxu0 0.0
  %2524 = vmatmul.mubr.f32.gmra.mxu0 %v2423
  %v2525 = vpop.f32.mrf.mxu0
  %v2526 = vadd.f32 %v2377, %v2525
  %v2527 = vpop.f32.mrf.mxu0
  %2528 = vmatprep.mubr.f32.mxu0 0.0
  %2529 = vmatmul.mubr.f32.gmra.mxu0 %v2425
  %v2530 = vpop.f32.mrf.mxu0
  %v2531 = vadd.f32 %v2382, %v2530
  %v2532 = vpop.f32.mrf.mxu0
  %2533 = vmatprep.mubr.f32.mxu0 0.0
  %2534 = vmatmul.mubr.f32.gmra.mxu0 %v2427
  %v2535 = vpop.f32.mrf.mxu0
  %v2536 = vadd.f32 %v2387, %v2535
  %v2537 = vpop.f32.mrf.mxu0
  %2538 = vmatprep.mubr.f32.mxu0 0.0
  %2539 = vmatmul.mubr.f32.gmra.mxu0 %v2429
  %v2540 = vpop.f32.mrf.mxu0
  %v2541 = vadd.f32 %v2392, %v2540
  %v2542 = vpop.f32.mrf.mxu0
  %2543 = vmatprep.mubr.f32.mxu0 0.0
  %2544 = vmatmul.mubr.f32.gmra.mxu0 %v2431
  %v2545 = vpop.f32.mrf.mxu0
  %v2546 = vadd.f32 %v2397, %v2545
  %v2547 = vpop.f32.mrf.mxu0
  %2548 = vmatprep.mubr.f32.mxu0 0.0
  %2549 = vmatmul.mubr.f32.gmra.mxu0 %v2433
  %v2550 = vpop.f32.mrf.mxu0
  %v2551 = vadd.f32 %v2402, %v2550
  %v2552 = vpop.f32.mrf.mxu0
  %2553 = vmatprep.mubr.f32.mxu0 0.0
  %2554 = vmatmul.mubr.f32.gmra.mxu0 %v2435
  %v2555 = vpop.f32.mrf.mxu0
  %v2556 = vadd.f32 %v2407, %v2555
  %v2557 = vpop.f32.mrf.mxu0
  %2558 = vmatprep.mubr.f32.mxu0 0.0
  %2559 = vmatmul.mubr.f32.gmra.mxu0 %v2437
  %v2560 = vpop.f32.mrf.mxu0
  %v2561 = vadd.f32 %v2412, %v2560
  %v2562 = vpop.f32.mrf.mxu0
  %2563 = vdwg.mxu0
  %v2564 = vrot.slane %v2184, 2
  %v2565 = vrot.slane %v2185, 2
  %v2566 = vsel %vm591, %v2564, %v2565
  %v2567 = vrot.slane %v2186, 2
  %v2568 = vsel %vm591, %v2565, %v2567
  %v2569 = vsel %vm591, %v2567, %v2208
  %v2570 = vrot.slane %v2187, 4
  %v2571 = vrot.slane %v2188, 4
  %v2572 = vsel %vm187, %v2570, %v2571
  %v2573 = vrot.slane %v2189, 4
  %v2574 = vsel %vm187, %v2571, %v2573
  %v2575 = vsel %vm187, %v2573, %v2218
  %v2576 = vrot.slane %v2190, 6
  %v2577 = vrot.slane %v2191, 6
  %v2578 = vsel %vm600, %v2576, %v2577
  %v2579 = vrot.slane %v2192, 6
  %v2580 = vsel %vm600, %v2577, %v2579
  %v2581 = vsel %vm600, %v2579, %v2228
  %v2582 = vsel %vm2039, %v2566, 0
  %v2584 = vsel %vm2039, %v2568, 0
  %v2586 = vsel %vm2039, %v2569, 0
  %v2588 = vsel %vm2039, %v2572, 0
  %v2590 = vsel %vm2039, %v2574, 0
  %v2592 = vsel %vm2039, %v2575, 0
  %v2594 = vsel %vm2039, %v2578, 0
  %v2596 = vsel %vm2039, %v2580, 0
  %v2598 = vsel %vm2039, %v2581, 0
  %v2600 = vsel %vm2039, %v2194, 0
  %v2602 = vsel %vm2039, %v2195, 0
  %v2604 = vsel %vm2039, %v2196, 0
  %2606 = vmatprep.subr.mxu0 0.0
  %2607 = vmatpush1.msra.mxu0 0.0
  %2608 = vmatprep.subr.mxu0 0.0
  %2609 = vmatpush1.msra.mxu0 0.0
  %2610 = vmatprep.subr.mxu0 0.0
  %2611 = vmatpush1.msra.mxu0 0.0
  %2612 = vmatprep.subr.mxu0 0.0
  %2613 = vmatpush1.msra.mxu0 0.0
  %2614 = vmatprep.subr.mxu0 0.0
  %2615 = vmatpush1.msra.mxu0 0.0
  %2616 = vmatprep.subr.mxu0 0.0
  %2617 = vmatpush1.msra.mxu0 0.0
  %2618 = vmatprep.subr.mxu0 0.0
  %2619 = vmatpush1.msra.mxu0 0.0
  %2620 = vmatprep.subr.mxu0 0.0
  %2621 = vmatpush1.msra.mxu0 0.0
  %2622 = vmatprep.subr.mxu0 0.0
  %2623 = vmatpush1.msra.mxu0 0.0
  %2624 = vmatprep.subr.mxu0 0.0
  %2625 = vmatpush1.msra.mxu0 0.0
  %2626 = vmatprep.subr.mxu0 0.0
  %2627 = vmatpush1.msra.mxu0 0.0
  %2628 = vmatprep.subr.mxu0 0.0
  %2629 = vmatpush1.msra.mxu0 0.0
  %2630 = vmatprep.subr.mxu0 0.0
  %2631 = vmatpush1.msra.mxu0 0.0
  %2632 = vmatprep.subr.mxu0 0.0
  %2633 = vmatpush1.msra.mxu0 0.0
  %2634 = vmatprep.subr.mxu0 0.0
  %2635 = vmatpush1.msra.mxu0 %v2202
  %2636 = vmatprep.subr.mxu0 0.0
  %2637 = vmatpush1.msra.mxu0 %v2201
  %2638 = vmatprep.subr.mxu0 0.0
  %2639 = vmatpush2.msra.mxu0 0.0
  %2640 = vmatprep.subr.mxu0 0.0
  %2641 = vmatpush2.msra.mxu0 0.0
  %2642 = vmatprep.subr.mxu0 0.0
  %2643 = vmatpush2.msra.mxu0 0.0
  %2644 = vmatprep.subr.mxu0 0.0
  %2645 = vmatpush2.msra.mxu0 0.0
  %2646 = vmatprep.subr.mxu0 0.0
  %2647 = vmatpush2.msra.mxu0 0.0
  %2648 = vmatprep.subr.mxu0 0.0
  %2649 = vmatpush2.msra.mxu0 0.0
  %2650 = vmatprep.subr.mxu0 0.0
  %2651 = vmatpush2.msra.mxu0 0.0
  %2652 = vmatprep.subr.mxu0 0.0
  %2653 = vmatpush2.msra.mxu0 0.0
  %2654 = vmatprep.subr.mxu0 0.0
  %2655 = vmatpush2.msra.mxu0 0.0
  %2656 = vmatprep.subr.mxu0 0.0
  %2657 = vmatpush2.msra.mxu0 0.0
  %2658 = vmatprep.subr.mxu0 0.0
  %2659 = vmatpush2.msra.mxu0 0.0
  %2660 = vmatprep.subr.mxu0 0.0
  %2661 = vmatpush2.msra.mxu0 0.0
  %2662 = vmatprep.subr.mxu0 0.0
  %2663 = vmatpush2.msra.mxu0 0.0
  %2664 = vmatprep.subr.mxu0 0.0
  %2665 = vmatpush2.msra.mxu0 0.0
  %2666 = vmatprep.subr.mxu0 0.0
  %2667 = vmatpush2.msra.mxu0 0.0
  %2668 = vmatprep.subr.mxu0 0.0
  %2669 = vmatpush2.msra.mxu0 0.0
  %2670 = vmatprep.mubr.f32.mxu0 0.0
  %2671 = vmatmul.mubr.f32.gmra.mxu0 %v2582
  %v2672 = vpop.f32.mrf.mxu0
  %v2673 = vadd.f32 0.0, %v2672
  %v2674 = vpop.f32.mrf.mxu0
  %2675 = vmatprep.mubr.f32.mxu0 0.0
  %2676 = vmatmul.mubr.f32.gmra.mxu0 %v2584
  %v2677 = vpop.f32.mrf.mxu0
  %v2678 = vadd.f32 0.0, %v2677
  %v2679 = vpop.f32.mrf.mxu0
  %2680 = vmatprep.mubr.f32.mxu0 0.0
  %2681 = vmatmul.mubr.f32.gmra.mxu0 %v2586
  %v2682 = vpop.f32.mrf.mxu0
  %v2683 = vadd.f32 0.0, %v2682
  %v2684 = vpop.f32.mrf.mxu0
  %2685 = vmatprep.mubr.f32.mxu0 0.0
  %2686 = vmatmul.mubr.f32.gmra.mxu0 %v2588
  %v2687 = vpop.f32.mrf.mxu0
  %v2688 = vadd.f32 0.0, %v2687
  %v2689 = vpop.f32.mrf.mxu0
  %2690 = vmatprep.mubr.f32.mxu0 0.0
  %2691 = vmatmul.mubr.f32.gmra.mxu0 %v2590
  %v2692 = vpop.f32.mrf.mxu0
  %v2693 = vadd.f32 0.0, %v2692
  %v2694 = vpop.f32.mrf.mxu0
  %2695 = vmatprep.mubr.f32.mxu0 0.0
  %2696 = vmatmul.mubr.f32.gmra.mxu0 %v2592
  %v2697 = vpop.f32.mrf.mxu0
  %v2698 = vadd.f32 0.0, %v2697
  %v2699 = vpop.f32.mrf.mxu0
  %2700 = vmatprep.mubr.f32.mxu0 0.0
  %2701 = vmatmul.mubr.f32.gmra.mxu0 %v2594
  %v2702 = vpop.f32.mrf.mxu0
  %v2703 = vadd.f32 0.0, %v2702
  %v2704 = vpop.f32.mrf.mxu0
  %2705 = vmatprep.mubr.f32.mxu0 0.0
  %2706 = vmatmul.mubr.f32.gmra.mxu0 %v2596
  %v2707 = vpop.f32.mrf.mxu0
  %v2708 = vadd.f32 0.0, %v2707
  %v2709 = vpop.f32.mrf.mxu0
  %2710 = vmatprep.mubr.f32.mxu0 0.0
  %2711 = vmatmul.mubr.f32.gmra.mxu0 %v2598
  %v2712 = vpop.f32.mrf.mxu0
  %v2713 = vadd.f32 0.0, %v2712
  %v2714 = vpop.f32.mrf.mxu0
  %2715 = vmatprep.mubr.f32.mxu0 0.0
  %2716 = vmatmul.mubr.f32.gmra.mxu0 %v2600
  %v2717 = vpop.f32.mrf.mxu0
  %v2718 = vadd.f32 0.0, %v2717
  %v2719 = vpop.f32.mrf.mxu0
  %2720 = vmatprep.mubr.f32.mxu0 0.0
  %2721 = vmatmul.mubr.f32.gmra.mxu0 %v2602
  %v2722 = vpop.f32.mrf.mxu0
  %v2723 = vadd.f32 0.0, %v2722
  %v2724 = vpop.f32.mrf.mxu0
  %2725 = vmatprep.mubr.f32.mxu0 0.0
  %2726 = vmatmul.mubr.f32.gmra.mxu0 %v2604
  %v2727 = vpop.f32.mrf.mxu0
  %v2728 = vadd.f32 0.0, %v2727
  %v2729 = vpop.f32.mrf.mxu0
  %2730 = vdwg.mxu0
  %v2731 = vadd.f32 %v2506, %v2673
  %v2732 = vadd.f32 %v2511, %v2678
  %v2733 = vadd.f32 %v2516, %v2683
  %v2734 = vadd.f32 %v2521, %v2688
  %v2735 = vadd.f32 %v2526, %v2693
  %v2736 = vadd.f32 %v2531, %v2698
  %v2737 = vadd.f32 %v2536, %v2703
  %v2738 = vadd.f32 %v2541, %v2708
  %v2739 = vadd.f32 %v2546, %v2713
  %v2740 = vadd.f32 %v2551, %v2718
  %v2741 = vadd.f32 %v2556, %v2723
  %v2742 = vadd.f32 %v2561, %v2728
  %v2744 = vlaneseq
  %v2745 = vshrl.u32 %v2744, 7
  %v2746 = vsub.s32 0, %v2745
  %v2747 = vrot.slane %v2203, %v2746
  %v2749 = vadd.f32 %v2731, %v2747
  %v2750 = vadd.f32 %v2732, %v2747
  %v2751 = vadd.f32 %v2733, %v2747
  %v2752 = vadd.f32 %v2734, %v2747
  %v2753 = vadd.f32 %v2735, %v2747
  %v2754 = vadd.f32 %v2736, %v2747
  %v2755 = vadd.f32 %v2737, %v2747
  %v2756 = vadd.f32 %v2738, %v2747
  %v2757 = vadd.f32 %v2739, %v2747
  %v2758 = vadd.f32 %v2740, %v2747
  %v2759 = vadd.f32 %v2741, %v2747
  %v2760 = vadd.f32 %v2742, %v2747
  %v2761 = vld [vmem:[%s11] sm:$0x1]
  %v2762 = vld [vmem:[%s12] sm:$0x1]
  %vm2763 = vcmask 261120
  %v2764 = vsel %vm2763, %v2749, 0.0
  %v2765 = vsel %vm2763, %v2750, 0.0
  %v2766 = vadd.f32 %v2764, %v2765
  %v2767 = vsel %vm2763, %v2751, 0.0
  %v2768 = vadd.f32 %v2766, %v2767
  %v2769 = vsel %vm2763, %v2752, 0.0
  %v2770 = vadd.f32 %v2768, %v2769
  %v2771 = vsel %vm2763, %v2753, 0.0
  %v2772 = vadd.f32 %v2770, %v2771
  %v2773 = vsel %vm2763, %v2754, 0.0
  %v2774 = vadd.f32 %v2772, %v2773
  %v2775 = vsel %vm2763, %v2755, 0.0
  %v2776 = vadd.f32 %v2774, %v2775
  %v2777 = vsel %vm2763, %v2756, 0.0
  %v2778 = vadd.f32 %v2776, %v2777
  %v2779 = vsel %vm2763, %v2757, 0.0
  %v2780 = vadd.f32 %v2778, %v2779
  %v2781 = vsel %vm2763, %v2758, 0.0
  %v2782 = vadd.f32 %v2780, %v2781
  %v2783 = vsel %vm2763, %v2759, 0.0
  %v2784 = vadd.f32 %v2782, %v2783
  %v2785 = vsel %vm2763, %v2760, 0.0
  %v2786 = vadd.f32 %v2784, %v2785
  %v2787 = vrot.slane %v2786, 4
  %v2788 = vadd.f32 %v2786, %v2787
  %v2789 = vrot.slane %v2788, 2
  %v2790 = vadd.f32 %v2788, %v2789
  %v2791 = vrot.slane %v2790, 1
  %v2792 = vadd.f32 %v2790, %v2791
  %v2793 = vrcp.pop 96.0
  %v2794 = vmul.f32 %v2792, %v2793
  %v2795 = vsub.f32 %v2749, %v2794
  %v2796 = vsub.f32 %v2750, %v2794
  %v2797 = vsub.f32 %v2751, %v2794
  %v2798 = vsub.f32 %v2752, %v2794
  %v2799 = vsub.f32 %v2753, %v2794
  %v2800 = vsub.f32 %v2754, %v2794
  %v2801 = vsub.f32 %v2755, %v2794
  %v2802 = vsub.f32 %v2756, %v2794
  %v2803 = vsub.f32 %v2757, %v2794
  %v2804 = vsub.f32 %v2758, %v2794
  %v2805 = vsub.f32 %v2759, %v2794
  %v2806 = vsub.f32 %v2760, %v2794
  %v2807 = vmul.f32 %v2795, %v2795
  %v2808 = vmul.f32 %v2796, %v2796
  %v2809 = vmul.f32 %v2797, %v2797
  %v2810 = vmul.f32 %v2798, %v2798
  %v2811 = vmul.f32 %v2799, %v2799
  %v2812 = vmul.f32 %v2800, %v2800
  %v2813 = vmul.f32 %v2801, %v2801
  %v2814 = vmul.f32 %v2802, %v2802
  %v2815 = vmul.f32 %v2803, %v2803
  %v2816 = vmul.f32 %v2804, %v2804
  %v2817 = vmul.f32 %v2805, %v2805
  %v2818 = vmul.f32 %v2806, %v2806
  %v2819 = vsel %vm2763, %v2807, 0.0
  %v2820 = vsel %vm2763, %v2808, 0.0
  %v2821 = vadd.f32 %v2819, %v2820
  %v2822 = vsel %vm2763, %v2809, 0.0
  %v2823 = vadd.f32 %v2821, %v2822
  %v2824 = vsel %vm2763, %v2810, 0.0
  %v2825 = vadd.f32 %v2823, %v2824
  %v2826 = vsel %vm2763, %v2811, 0.0
  %v2827 = vadd.f32 %v2825, %v2826
  %v2828 = vsel %vm2763, %v2812, 0.0
  %v2829 = vadd.f32 %v2827, %v2828
  %v2830 = vsel %vm2763, %v2813, 0.0
  %v2831 = vadd.f32 %v2829, %v2830
  %v2832 = vsel %vm2763, %v2814, 0.0
  %v2833 = vadd.f32 %v2831, %v2832
  %v2834 = vsel %vm2763, %v2815, 0.0
  %v2835 = vadd.f32 %v2833, %v2834
  %v2836 = vsel %vm2763, %v2816, 0.0
  %v2837 = vadd.f32 %v2835, %v2836
  %v2838 = vsel %vm2763, %v2817, 0.0
  %v2839 = vadd.f32 %v2837, %v2838
  %v2840 = vsel %vm2763, %v2818, 0.0
  %v2841 = vadd.f32 %v2839, %v2840
  %v2842 = vrot.slane %v2841, 4
  %v2843 = vadd.f32 %v2841, %v2842
  %v2844 = vrot.slane %v2843, 2
  %v2845 = vadd.f32 %v2843, %v2844
  %v2846 = vrot.slane %v2845, 1
  %v2847 = vadd.f32 %v2845, %v2846
  %v2848 = vmul.f32 %v2847, %v2793
  %v2849 = vadd.f32 %v2848, 1e-05
  %v2850 = vrsqrt.pop %v2849
  %v2851 = vmul.f32 %v2795, %v2850
  %v2852 = vmul.f32 %v2796, %v2850
  %v2853 = vmul.f32 %v2797, %v2850
  %v2854 = vmul.f32 %v2798, %v2850
  %v2855 = vmul.f32 %v2799, %v2850
  %v2856 = vmul.f32 %v2800, %v2850
  %v2857 = vmul.f32 %v2801, %v2850
  %v2858 = vmul.f32 %v2802, %v2850
  %v2859 = vmul.f32 %v2803, %v2850
  %v2860 = vmul.f32 %v2804, %v2850
  %v2861 = vmul.f32 %v2805, %v2850
  %v2862 = vmul.f32 %v2806, %v2850
  %v2864 = vlaneseq
  %v2865 = vshrl.u32 %v2864, 7
  %v2866 = vsub.s32 0, %v2865
  %v2867 = vrot.slane %v2761, %v2866
  %v2869 = vmul.f32 %v2851, %v2867
  %v2870 = vmul.f32 %v2852, %v2867
  %v2871 = vmul.f32 %v2853, %v2867
  %v2872 = vmul.f32 %v2854, %v2867
  %v2873 = vmul.f32 %v2855, %v2867
  %v2874 = vmul.f32 %v2856, %v2867
  %v2875 = vmul.f32 %v2857, %v2867
  %v2876 = vmul.f32 %v2858, %v2867
  %v2877 = vmul.f32 %v2859, %v2867
  %v2878 = vmul.f32 %v2860, %v2867
  %v2879 = vmul.f32 %v2861, %v2867
  %v2880 = vmul.f32 %v2862, %v2867
  %v2882 = vlaneseq
  %v2883 = vshrl.u32 %v2882, 7
  %v2884 = vsub.s32 0, %v2883
  %v2885 = vrot.slane %v2762, %v2884
  %v2887 = vadd.f32 %v2869, %v2885
  %v2888 = vadd.f32 %v2870, %v2885
  %v2889 = vadd.f32 %v2871, %v2885
  %v2890 = vadd.f32 %v2872, %v2885
  %v2891 = vadd.f32 %v2873, %v2885
  %v2892 = vadd.f32 %v2874, %v2885
  %v2893 = vadd.f32 %v2875, %v2885
  %v2894 = vadd.f32 %v2876, %v2885
  %v2895 = vadd.f32 %v2877, %v2885
  %v2896 = vadd.f32 %v2878, %v2885
  %v2897 = vadd.f32 %v2879, %v2885
  %v2898 = vadd.f32 %v2880, %v2885
  %v2899 = vmax.f32 %v2887, 0.0
  %v2900 = vmax.f32 %v2888, 0.0
  %v2901 = vmax.f32 %v2889, 0.0
  %v2902 = vmax.f32 %v2890, 0.0
  %v2903 = vmax.f32 %v2891, 0.0
  %v2904 = vmax.f32 %v2892, 0.0
  %v2905 = vmax.f32 %v2893, 0.0
  %v2906 = vmax.f32 %v2894, 0.0
  %v2907 = vmax.f32 %v2895, 0.0
  %v2908 = vmax.f32 %v2896, 0.0
  %v2909 = vmax.f32 %v2897, 0.0
  %v2910 = vmax.f32 %v2898, 0.0
  %2911 = vxpose.xlu0.b32.start [1/16] %v2899, 128
  %2912 = vxpose.xlu0.b32.cont [2/16] %v2900, 128
  %2913 = vxpose.xlu0.b32.cont [3/16] %v2901, 128
  %2914 = vxpose.xlu0.b32.cont [4/16] 0.0, 128
  %2915 = vxpose.xlu0.b32.cont [5/16] 0.0, 128
  %2916 = vxpose.xlu0.b32.cont [6/16] 0.0, 128
  %2917 = vxpose.xlu0.b32.cont [7/16] 0.0, 128
  %2918 = vxpose.xlu0.b32.cont [8/16] 0.0, 128
  %2919 = vxpose.xlu0.b32.cont [9/16] 0.0, 128
  %2920 = vxpose.xlu0.b32.cont [10/16] 0.0, 128
  %2921 = vxpose.xlu0.b32.cont [11/16] 0.0, 128
  %2922 = vxpose.xlu0.b32.cont [12/16] 0.0, 128
  %2923 = vxpose.xlu0.b32.cont [13/16] 0.0, 128
  %2924 = vxpose.xlu0.b32.cont [14/16] 0.0, 128
  %2925 = vxpose.xlu0.b32.cont [15/16] 0.0, 128
  %2926 = vxpose.xlu0.b32.end [16/16] 0.0, 128
  %v2927 = vpop.trf.xlu0
  %v2928 = vpop.trf.xlu0
  %v2929 = vpop.trf.xlu0
  %v2930 = vpop.trf.xlu0
  %v2931 = vpop.trf.xlu0
  %v2932 = vpop.trf.xlu0
  %v2933 = vpop.trf.xlu0
  %v2934 = vpop.trf.xlu0
  %v2935 = vpop.trf.xlu0
  %v2936 = vpop.trf.xlu0
  %v2937 = vpop.trf.xlu0
  %v2938 = vpop.trf.xlu0
  %v2939 = vpop.trf.xlu0
  %v2940 = vpop.trf.xlu0
  %v2941 = vpop.trf.xlu0
  %v2942 = vpop.trf.xlu0
  %vm2943 = vcmask 195584
  %2944 = vst.msk [vmem:[%s13] sm:$0xff] %vm2943, %v2927
  %2945 = vst.msk [vmem:[%s13 + $0x8] sm:$0xff] %vm2943, %v2928
  %2946 = vst.msk [vmem:[%s13 + $0x10] sm:$0xff] %vm2943, %v2929
  %2947 = vst.msk [vmem:[%s13 + $0x18] sm:$0xff] %vm2943, %v2930
  %2948 = vxpose.xlu0.b32.start [1/16] %v2902, 128
  %2949 = vxpose.xlu0.b32.cont [2/16] %v2903, 128
  %2950 = vxpose.xlu0.b32.cont [3/16] %v2904, 128
  %2951 = vxpose.xlu0.b32.cont [4/16] 0.0, 128
  %2952 = vxpose.xlu0.b32.cont [5/16] 0.0, 128
  %2953 = vxpose.xlu0.b32.cont [6/16] 0.0, 128
  %2954 = vxpose.xlu0.b32.cont [7/16] 0.0, 128
  %2955 = vxpose.xlu0.b32.cont [8/16] 0.0, 128
  %2956 = vxpose.xlu0.b32.cont [9/16] 0.0, 128
  %2957 = vxpose.xlu0.b32.cont [10/16] 0.0, 128
  %2958 = vxpose.xlu0.b32.cont [11/16] 0.0, 128
  %2959 = vxpose.xlu0.b32.cont [12/16] 0.0, 128
  %2960 = vxpose.xlu0.b32.cont [13/16] 0.0, 128
  %2961 = vxpose.xlu0.b32.cont [14/16] 0.0, 128
  %2962 = vxpose.xlu0.b32.cont [15/16] 0.0, 128
  %2963 = vxpose.xlu0.b32.end [16/16] 0.0, 128
  %v2964 = vpop.trf.xlu0
  %v2965 = vpop.trf.xlu0
  %v2966 = vpop.trf.xlu0
  %v2967 = vpop.trf.xlu0
  %v2968 = vpop.trf.xlu0
  %v2969 = vpop.trf.xlu0
  %v2970 = vpop.trf.xlu0
  %v2971 = vpop.trf.xlu0
  %v2972 = vpop.trf.xlu0
  %v2973 = vpop.trf.xlu0
  %v2974 = vpop.trf.xlu0
  %v2975 = vpop.trf.xlu0
  %v2976 = vpop.trf.xlu0
  %v2977 = vpop.trf.xlu0
  %v2978 = vpop.trf.xlu0
  %v2979 = vpop.trf.xlu0
  %s2980 = scalar_lea.vmem %s13, 32
  %2981 = vst.msk [vmem:[%s2980] sm:$0xff] %vm2943, %v2964
  %2982 = vst.msk [vmem:[%s2980 + $0x8] sm:$0xff] %vm2943, %v2965
  %2983 = vst.msk [vmem:[%s2980 + $0x10] sm:$0xff] %vm2943, %v2966
  %2984 = vst.msk [vmem:[%s2980 + $0x18] sm:$0xff] %vm2943, %v2967
  %2985 = vxpose.xlu0.b32.start [1/16] %v2905, 128
  %2986 = vxpose.xlu0.b32.cont [2/16] %v2906, 128
  %2987 = vxpose.xlu0.b32.cont [3/16] %v2907, 128
  %2988 = vxpose.xlu0.b32.cont [4/16] 0.0, 128
  %2989 = vxpose.xlu0.b32.cont [5/16] 0.0, 128
  %2990 = vxpose.xlu0.b32.cont [6/16] 0.0, 128
  %2991 = vxpose.xlu0.b32.cont [7/16] 0.0, 128
  %2992 = vxpose.xlu0.b32.cont [8/16] 0.0, 128
  %2993 = vxpose.xlu0.b32.cont [9/16] 0.0, 128
  %2994 = vxpose.xlu0.b32.cont [10/16] 0.0, 128
  %2995 = vxpose.xlu0.b32.cont [11/16] 0.0, 128
  %2996 = vxpose.xlu0.b32.cont [12/16] 0.0, 128
  %2997 = vxpose.xlu0.b32.cont [13/16] 0.0, 128
  %2998 = vxpose.xlu0.b32.cont [14/16] 0.0, 128
  %2999 = vxpose.xlu0.b32.cont [15/16] 0.0, 128
  %3000 = vxpose.xlu0.b32.end [16/16] 0.0, 128
  %v3001 = vpop.trf.xlu0
  %v3002 = vpop.trf.xlu0
  %v3003 = vpop.trf.xlu0
  %v3004 = vpop.trf.xlu0
  %v3005 = vpop.trf.xlu0
  %v3006 = vpop.trf.xlu0
  %v3007 = vpop.trf.xlu0
  %v3008 = vpop.trf.xlu0
  %v3009 = vpop.trf.xlu0
  %v3010 = vpop.trf.xlu0
  %v3011 = vpop.trf.xlu0
  %v3012 = vpop.trf.xlu0
  %v3013 = vpop.trf.xlu0
  %v3014 = vpop.trf.xlu0
  %v3015 = vpop.trf.xlu0
  %v3016 = vpop.trf.xlu0
  %s3017 = scalar_lea.vmem %s13, 64
  %3018 = vst.msk [vmem:[%s3017] sm:$0xff] %vm2943, %v3001
  %3019 = vst.msk [vmem:[%s3017 + $0x8] sm:$0xff] %vm2943, %v3002
  %3020 = vst.msk [vmem:[%s3017 + $0x10] sm:$0xff] %vm2943, %v3003
  %3021 = vst.msk [vmem:[%s3017 + $0x18] sm:$0xff] %vm2943, %v3004
  %3022 = vxpose.xlu0.b32.start [1/16] %v2908, 128
  %3023 = vxpose.xlu0.b32.cont [2/16] %v2909, 128
  %3024 = vxpose.xlu0.b32.cont [3/16] %v2910, 128
  %3025 = vxpose.xlu0.b32.cont [4/16] 0.0, 128
  %3026 = vxpose.xlu0.b32.cont [5/16] 0.0, 128
  %3027 = vxpose.xlu0.b32.cont [6/16] 0.0, 128
  %3028 = vxpose.xlu0.b32.cont [7/16] 0.0, 128
  %3029 = vxpose.xlu0.b32.cont [8/16] 0.0, 128
  %3030 = vxpose.xlu0.b32.cont [9/16] 0.0, 128
  %3031 = vxpose.xlu0.b32.cont [10/16] 0.0, 128
  %3032 = vxpose.xlu0.b32.cont [11/16] 0.0, 128
  %3033 = vxpose.xlu0.b32.cont [12/16] 0.0, 128
  %3034 = vxpose.xlu0.b32.cont [13/16] 0.0, 128
  %3035 = vxpose.xlu0.b32.cont [14/16] 0.0, 128
  %3036 = vxpose.xlu0.b32.cont [15/16] 0.0, 128
  %3037 = vxpose.xlu0.b32.end [16/16] 0.0, 128
  %v3038 = vpop.trf.xlu0
  %v3039 = vpop.trf.xlu0
  %v3040 = vpop.trf.xlu0
  %v3041 = vpop.trf.xlu0
  %v3042 = vpop.trf.xlu0
  %v3043 = vpop.trf.xlu0
  %v3044 = vpop.trf.xlu0
  %v3045 = vpop.trf.xlu0
  %v3046 = vpop.trf.xlu0
  %v3047 = vpop.trf.xlu0
  %v3048 = vpop.trf.xlu0
  %v3049 = vpop.trf.xlu0
  %v3050 = vpop.trf.xlu0
  %v3051 = vpop.trf.xlu0
  %v3052 = vpop.trf.xlu0
  %v3053 = vpop.trf.xlu0
  %s3054 = scalar_lea.vmem %s13, 96
  %3055 = vst.msk [vmem:[%s3054] sm:$0xff] %vm2943, %v3038
  %3056 = vst.msk [vmem:[%s3054 + $0x8] sm:$0xff] %vm2943, %v3039
  %3057 = vst.msk [vmem:[%s3054 + $0x10] sm:$0xff] %vm2943, %v3040
  %3058 = vst.msk [vmem:[%s3054 + $0x18] sm:$0xff] %vm2943, %v3041
  // Predicated region
  $region54: #{tpu_custom_call.1} parent=0 // pred_check
    _
  $region55: #{tpu_custom_call.1} parent=0 // pred_check_branch
    %3060 = sbr.rel (0) target = $region57
  $region56: #{tpu_custom_call.1} parent=0 // pred_region
    _
  $region57: #{tpu_custom_call.1} parent=0 // pred_fallthru
    _
  // Predicated region
  $region58: #{tpu_custom_call.1} parent=0 // pred_check
    _
  $region59: #{tpu_custom_call.1} parent=0 // pred_check_branch
    %3062 = sbr.rel (0) target = $region61
  $region60: #{tpu_custom_call.1} parent=0 // pred_region
    _
  $region61: #{tpu_custom_call.1} parent=0 // pred_fallthru
    _

</llo_original>
